<compile_context>
chip_gen: v7x
topology: tpu7x:2x2x1
jax: 0.10.0
libtpu: 0.0.40
codegen_flags: <defaults>
</compile_context>

<pallas_src>
import functools

import jax
import jax.numpy as jnp
from jax import lax
from jax.experimental import pallas as pl
from jax.experimental.pallas import tpu as pltpu


def _round_up(x, m):
    return (x + m - 1) // m * m


# ---------------------------------------------------------------------------
# Hardware / feature probes (resolved OUTSIDE jit)
# ---------------------------------------------------------------------------
@functools.lru_cache(maxsize=None)
def _vmem_capacity_bytes():
    try:
        cap = int(pltpu.get_tpu_info().vmem_capacity_bytes)
        if cap > 0:
            return cap
    except Exception:
        pass
    return 64 * 1024 * 1024          # conservative (v7x-sized) fallback


@functools.lru_cache(maxsize=None)
def _single_buffer_weights_supported():
    """Probe whether pipeline_mode=pl.Buffered(1) is accepted end-to-end."""
    try:
        spec = pl.BlockSpec((8, 128), lambda i: (0, 0),
                            pipeline_mode=pl.Buffered(1))

        def _probe(x_ref, o_ref):
            o_ref[...] = x_ref[...] + 1.0

        y = pl.pallas_call(
            _probe,
            out_shape=jax.ShapeDtypeStruct((8, 128), jnp.float32),
            grid=(2,),
            in_specs=[spec],
            out_specs=pl.BlockSpec((8, 128), lambda i: (0, 0)),
        )(jnp.zeros((8, 128), jnp.float32))
        jax.block_until_ready(y)
        return True
    except Exception:
        return False


# ---------------------------------------------------------------------------
# Static tiling helpers
# ---------------------------------------------------------------------------
def _choose_b_tile(B, T, D, Hp, Ap, mxu_bytes, gx_bytes, hs_bytes,
                   vmem_budget, weight_bufs):
    """Largest batch tile (multiple of 8, <=128) that fits the VMEM budget."""
    weights = weight_bufs * (
        (D * 4 * Hp + Hp * 4 * Hp + Hp * Hp + Hp * Ap) * mxu_bytes
        + (4 * Hp + Hp + Ap) * 4)

    def tile_bytes(bt):
        io = 2 * T * bt * (D * mxu_bytes + Ap * 4) + 8 * bt * Hp * 4
        scratch = T * bt * (4 * Hp * gx_bytes + Hp * hs_bytes)
        live = 3 * bt * 4 * Hp * 4 + min(T * bt, max(512, bt)) * (Hp + Ap) * 4
        return io + scratch + live

    bp8 = _round_up(max(B, 1), 8)
    bt = min(128, bp8)
    while bt > 8 and weights + tile_bytes(bt) > vmem_budget:
        bt -= 8
    # keep at least two grid steps (both v7x TensorCores busy) when B allows
    if bp8 > 8 and _round_up(bp8, bt) // bt < 2:
        bt = max(8, _round_up((bp8 + 1) // 2, 8))
    return bt


def _row_chunk(T, bt, target_rows=512):
    """Rows per epilogue/projection chunk: tc*bt with tc | T and <= target."""
    tc = max(1, min(T, max(1, target_rows // bt)))
    while T % tc:
        tc -= 1
    return tc * bt


# ---------------------------------------------------------------------------
# Pallas kernel (one batch tile per grid step)
# ---------------------------------------------------------------------------
def _r2d2_kernel(x_ref, w_ih_ref, w_hh_ref, b_ref, w_fc_ref, b_fc_ref,
                 w_q_ref, b_q_ref, h0_ref, c0_ref,
                 q_ref, h_out_ref, c_out_ref,
                 gx_ref, hs_ref,
                 *, seq_len, row_chunk, unroll):
    # x_ref  : [T*Bt, D]   (batch-tile-major, time outer, no in-kernel reshape)
    # w_ih   : [D, 4Hp]  w_hh : [Hp, 4Hp]  b : [1, 4Hp]   (gates i,f,g,o each
    #          in a lane-aligned Hp-wide slot)
    # w_fc   : [Hp, Hp]  b_fc : [1, Hp]
    # w_q    : [Hp, Ap]  b_q  : [1, Ap]    (dueling mean already folded in)
    # h0/c0  : [Bt, Hp] f32
    # q_ref  : [T*Bt, Ap] f32 (lane-dense)
    # gx_ref : scratch [T*Bt, 4Hp]  hoisted input projection (+ bias)
    # hs_ref : scratch [T*Bt, Hp]   all LSTM hidden outputs
    Bt, Hp = h0_ref.shape
    rows = seq_len * Bt
    mxu_dtype = w_hh_ref.dtype

    # ---- (1) hoisted input projection (bias folded), chunked over rows ----
    w_ih = w_ih_ref[...]
    b_lstm = b_ref[...]
    for r0 in range(0, rows, row_chunk):
        xc = x_ref[pl.ds(r0, row_chunk), :]
        gx_ref[pl.ds(r0, row_chunk), :] = (
            jnp.dot(xc, w_ih, preferred_element_type=jnp.float32) + b_lstm
        ).astype(gx_ref.dtype)

    # ---- (2) serial recurrence: only h @ w_hh on the critical path ---------
    w_hh = w_hh_ref[...]

    def step(t, carry):
        h, c = carry                                        # f32 [Bt, Hp]
        row = pl.multiple_of(t * Bt, Bt)                    # Bt multiple of 8
        gates = (gx_ref[pl.ds(row, Bt), :].astype(jnp.float32)
                 + jnp.dot(h.astype(mxu_dtype), w_hh,
                           preferred_element_type=jnp.float32))  # [Bt, 4Hp]
        i = jax.nn.sigmoid(gates[:, 0 * Hp:1 * Hp])         # lane-aligned slices
        f = jax.nn.sigmoid(gates[:, 1 * Hp:2 * Hp])
        g = jnp.tanh(gates[:, 2 * Hp:3 * Hp])
        o = jax.nn.sigmoid(gates[:, 3 * Hp:4 * Hp])
        c_new = f * c + i * g                               # cell stays f32
        h_new = o * jnp.tanh(c_new)
        hs_ref[pl.ds(row, Bt), :] = h_new.astype(hs_ref.dtype)
        return h_new, c_new

    h_fin, c_fin = lax.fori_loop(0, seq_len, step,
                                 (h0_ref[...], c0_ref[...]), unroll=unroll)
    h_out_ref[...] = h_fin
    c_out_ref[...] = c_fin

    # ---- (3) head epilogue: fc -> relu -> fused dueling head, chunked ------
    w_fc = w_fc_ref[...]
    b_fc = b_fc_ref[...]
    w_q = w_q_ref[...]
    b_q = b_q_ref[...]
    for r0 in range(0, rows, row_chunk):
        hs_c = hs_ref[pl.ds(r0, row_chunk), :]
        z = jnp.maximum(
            jnp.dot(hs_c, w_fc, preferred_element_type=jnp.float32) + b_fc, 0.0)
        q_ref[pl.ds(r0, row_chunk), :] = (
            jnp.dot(z.astype(mxu_dtype), w_q, preferred_element_type=jnp.float32)
            + b_q)


# ---------------------------------------------------------------------------
# Wrapper
# ---------------------------------------------------------------------------
def _pad_to(a, shape):
    return jnp.pad(a, [(0, s - d) for d, s in zip(a.shape, shape)])


def _scatter_gates(w_t, H, Hp):
    """[rows, 4H] -> [rows, 4Hp]; gate k's H columns placed at offset k*Hp."""
    rows = w_t.shape[0]
    out = jnp.zeros((rows, 4 * Hp), w_t.dtype)
    for k in range(4):
        out = out.at[:, k * Hp:k * Hp + H].set(w_t[:, k * H:(k + 1) * H])
    return out


@functools.partial(jax.jit, static_argnames=(
    "mxu_dtype", "gx_dtype", "b_tile", "vmem_limit", "single_buf"))
def _r2d2_impl(params, x, h0, c0, *, mxu_dtype, gx_dtype, b_tile,
               vmem_limit, single_buf):
    mxu_dtype = jnp.dtype(mxu_dtype)
    gx_dtype = jnp.dtype(gx_dtype)
    B, T, D = x.shape
    H = params['w_hh'].shape[1]
    A = params['w_adv'].shape[0]
    Hp = _round_up(H, 128)
    Ap = _round_up(A, 128)
    Bp = _round_up(B, b_tile)
    n_b = Bp // b_tile

    # ---- padded / transposed / dtype-cast kernel operands -----------------
    w_ih_p = _scatter_gates(params['w_ih'].T, H, Hp).astype(mxu_dtype)       # [D, 4Hp]
    w_hh_p = _pad_to(_scatter_gates(params['w_hh'].T, H, Hp),
                     (Hp, 4 * Hp)).astype(mxu_dtype)                         # [Hp, 4Hp]
    b_lstm_p = _scatter_gates((params['b_ih'] + params['b_hh'])[None, :],
                              H, Hp)                                         # [1, 4Hp] f32
    w_fc_p = _pad_to(params['w_fc'].T, (Hp, Hp)).astype(mxu_dtype)           # [Hp, Hp]
    b_fc_p = _pad_to(params['b_fc'][None, :], (1, Hp))                       # [1, Hp] f32
    # dueling head with the mean-subtraction folded into the weights:
    #   q = z @ (W_adv^T - mean_col(W_adv^T) + w_val^T) + (b_adv - mean + b_val)
    w_adv_t = params['w_adv'].T                                              # [H, A]
    w_q = w_adv_t - jnp.mean(w_adv_t, axis=1, keepdims=True) + params['w_val'].T
    b_q = params['b_adv'] - jnp.mean(params['b_adv']) + params['b_val'][0]
    w_q_p = _pad_to(w_q, (Hp, Ap)).astype(mxu_dtype)                         # [Hp, Ap]
    b_q_p = _pad_to(b_q[None, :], (1, Ap))                                   # [1, Ap] f32

    h0_p = _pad_to(h0, (Bp, Hp))
    c0_p = _pad_to(c0, (Bp, Hp))

    # batch-tile-major input layout -> the kernel needs NO reshapes:
    #   x_r[nb, t*b_tile + j, :] = x[nb*b_tile + j, t, :]
    x_tm = _pad_to(jnp.transpose(x, (1, 0, 2)), (T, Bp, D)).astype(mxu_dtype)
    x_r = (x_tm.reshape(T, n_b, b_tile, D)
               .transpose(1, 0, 2, 3)
               .reshape(n_b, T * b_tile, D))

    row_chunk = _row_chunk(T, b_tile)
    lstm_unroll = True if T <= 16 else 8

    weight_kw = {"pipeline_mode": pl.Buffered(1)} if single_buf else {}

    def replicated(shape):
        return pl.BlockSpec(shape, lambda b: (0,) * len(shape), **weight_kw)

    kernel = functools.partial(_r2d2_kernel, seq_len=T, row_chunk=row_chunk,
                               unroll=lstm_unroll)

    q_p, h_p, c_p = pl.pallas_call(
        kernel,
        out_shape=(jax.ShapeDtypeStruct((n_b, T * b_tile, Ap), jnp.float32),
                   jax.ShapeDtypeStruct((Bp, Hp), jnp.float32),
                   jax.ShapeDtypeStruct((Bp, Hp), jnp.float32)),
        grid=(n_b,),
        in_specs=[
            pl.BlockSpec((None, T * b_tile, D), lambda b: (b, 0, 0)),   # x tile
            replicated((D, 4 * Hp)),                                    # w_ih
            replicated((Hp, 4 * Hp)),                                   # w_hh
            replicated((1, 4 * Hp)),                                    # b_lstm
            replicated((Hp, Hp)),                                       # w_fc
            replicated((1, Hp)),                                        # b_fc
            replicated((Hp, Ap)),                                       # w_q
            replicated((1, Ap)),                                        # b_q
            pl.BlockSpec((b_tile, Hp), lambda b: (b, 0)),               # h0
            pl.BlockSpec((b_tile, Hp), lambda b: (b, 0)),               # c0
        ],
        out_specs=(
            pl.BlockSpec((None, T * b_tile, Ap), lambda b: (b, 0, 0)),  # q
            pl.BlockSpec((b_tile, Hp), lambda b: (b, 0)),               # h_n
            pl.BlockSpec((b_tile, Hp), lambda b: (b, 0)),               # c_n
        ),
        scratch_shapes=[
            pltpu.VMEM((T * b_tile, 4 * Hp), gx_dtype),                 # gx
            pltpu.VMEM((T * b_tile, Hp), mxu_dtype),                    # hs
        ],
        compiler_params=pltpu.CompilerParams(
            dimension_semantics=("parallel",),
            vmem_limit_bytes=vmem_limit),
    )(x_r, w_ih_p, w_hh_p, b_lstm_p, w_fc_p, b_fc_p, w_q_p, b_q_p, h0_p, c0_p)

    qvalue = (q_p.reshape(n_b, T, b_tile, Ap)
                  .transpose(0, 2, 1, 3)
                  .reshape(Bp, T, Ap)[:B, :, :A])                        # [B, T, A]
    h_n = h_p[:B, :H][None]
    c_n = c_p[:B, :H][None]
    return qvalue, (h_n, c_n)


def r2d2_forward(params, x, hidden=None, *, mxu_dtype=jnp.bfloat16, b_tile=None):
    """x: [B, T, num_inputs]. Returns (qvalue [B, T, A], (h [1,B,H], c [1,B,H]))."""
    x = jnp.asarray(x, jnp.float32)
    if x.ndim == 2:                       # parity with the n_envs > 1 branch
        x = x[:, None, :]
    B, T, D = x.shape
    H = params['w_hh'].shape[1]
    A = params['w_adv'].shape[0]
    Hp = _round_up(H, 128)
    Ap = _round_up(A, 128)

    # ---- static config (hardware-aware, resolved outside jit) -------------
    vmem_cap = _vmem_capacity_bytes()
    vmem_limit = int(vmem_cap * 0.85)
    vmem_budget = int(vmem_cap * 0.70)
    single_buf = _single_buffer_weights_supported()
    weight_bufs = 1 if single_buf else 2

    mxu_dtype = jnp.dtype(mxu_dtype)
    mxu_bytes = mxu_dtype.itemsize
    # keep gx in f32 (no per-step upcast) unless VMEM is tight (v7x-sized)
    gx_dtype = (jnp.dtype(jnp.float32)
                if (mxu_dtype == jnp.float32 or vmem_budget > 80 * 2 ** 20)
                else mxu_dtype)

    if b_tile is None:
        b_tile = _choose_b_tile(B, T, D, Hp, Ap, mxu_bytes,
                                gx_dtype.itemsize, mxu_bytes,
                                vmem_budget, weight_bufs)
    b_tile = max(8, _round_up(int(b_tile), 8))

    if hidden is None:
        h0 = jnp.zeros((B, H), jnp.float32)
        c0 = jnp.zeros((B, H), jnp.float32)
    else:
        h0 = jnp.asarray(hidden[0], jnp.float32).reshape(B, H)
        c0 = jnp.asarray(hidden[1], jnp.float32).reshape(B, H)

    return _r2d2_impl(params, x, h0, c0,
                      mxu_dtype=mxu_dtype.name, gx_dtype=gx_dtype.name,
                      b_tile=b_tile, vmem_limit=vmem_limit,
                      single_buf=bool(single_buf))


# ---------------------------------------------------------------------------
# Deterministic parameter init (shapes from the PyTorch module __init__)
# ---------------------------------------------------------------------------
def init_params(key, num_inputs, num_outputs, hidden_size):
    H = hidden_size
    ks = jax.random.split(key, 10)
    k = 1.0 / jnp.sqrt(jnp.float32(H))

    def unif(k_, shape, bound):
        return jax.random.uniform(k_, shape, jnp.float32, -bound, bound)

    def xavier(k_, out_f, in_f):
        a = jnp.sqrt(6.0 / (in_f + out_f))
        return jax.random.uniform(k_, (out_f, in_f), jnp.float32, -a, a)

    return dict(
        w_ih=unif(ks[0], (4 * H, num_inputs), k),     # LSTM weight_ih_l0
        w_hh=unif(ks[1], (4 * H, H), k),              # LSTM weight_hh_l0
        b_ih=unif(ks[2], (4 * H,), k),
        b_hh=unif(ks[3], (4 * H,), k),
        w_fc=xavier(ks[4], H, H),   b_fc=unif(ks[5], (H,), k),
        w_adv=xavier(ks[6], num_outputs, H), b_adv=unif(ks[7], (num_outputs,), k),
        w_val=xavier(ks[8], 1, H),  b_val=unif(ks[9], (1,), k),
    )


# ---------------------------------------------------------------------------
# Pure-JAX f32 reference (mirrors the PyTorch forward exactly)
# ---------------------------------------------------------------------------
def r2d2_reference(params, x, hidden=None):
    B, T, D = x.shape
    H = params['w_hh'].shape[1]
    w_ih_t = params['w_ih'].T
    w_hh_t = params['w_hh'].T
    b = (params['b_ih'] + params['b_hh'])[None, :]
    if hidden is None:
        h = jnp.zeros((B, H), jnp.float32)
        c = jnp.zeros((B, H), jnp.float32)
    else:
        h = hidden[0].reshape(B, H)
        c = hidden[1].reshape(B, H)
    outs = []
    for t in range(T):
        gates = x[:, t, :] @ w_ih_t + h @ w_hh_t + b
        i = jax.nn.sigmoid(gates[:, 0 * H:1 * H])
        f = jax.nn.sigmoid(gates[:, 1 * H:2 * H])
        g = jnp.tanh(gates[:, 2 * H:3 * H])
        o = jax.nn.sigmoid(gates[:, 3 * H:4 * H])
        c = f * c + i * g
        h = o * jnp.tanh(c)
        outs.append(h)
    out = jnp.stack(outs, axis=1)                            # [B, T, H]
    z = jax.nn.relu(out @ params['w_fc'].T + params['b_fc'])
    adv = z @ params['w_adv'].T + params['b_adv']
    val = z @ params['w_val'].T + params['b_val']
    q = val + (adv - jnp.mean(adv, axis=2, keepdims=True))
    return q, (h[None], c[None])


# ---------------------------------------------------------------------------
if __name__ == "__main__":
    # TODO(synk): get_td_error / train_model / get_action are host-side RL
    # training utilities (replay handling, gather/argmax, optimizer) and are
    # intentionally not part of the forward-pass kernel.
    num_inputs, num_outputs, hidden_size = 4, 4, 16
    B, T = 2, 8

    key = jax.random.PRNGKey(0)
    k_params, k_x, k_h, k_c = jax.random.split(key, 4)
    params = init_params(k_params, num_inputs, num_outputs, hidden_size)
    x = jax.random.normal(k_x, (B, T, num_inputs), jnp.float32)

    # 1) exact-precision path (f32 MXU operands) vs pure-JAX reference
    q, (h_n, c_n) = r2d2_forward(params, x, mxu_dtype=jnp.float32)
    jax.block_until_ready((q, h_n, c_n))
    q_ref, (h_ref, c_ref) = r2d2_reference(params, x)
    assert q.shape == (B, T, num_outputs)
    assert h_n.shape == (1, B, hidden_size) and c_n.shape == (1, B, hidden_size)
    assert jnp.allclose(q, q_ref, atol=1e-4, rtol=1e-4)
    assert jnp.allclose(h_n, h_ref, atol=1e-4, rtol=1e-4)
    assert jnp.allclose(c_n, c_ref, atol=1e-4, rtol=1e-4)

    # 2) with a provided hidden state
    h0 = 0.1 * jax.random.normal(k_h, (1, B, hidden_size), jnp.float32)
    c0 = 0.1 * jax.random.normal(k_c, (1, B, hidden_size), jnp.float32)
    q2, (h2, c2) = r2d2_forward(params, x, (h0, c0), mxu_dtype=jnp.float32)
    q2_ref, (h2_ref, c2_ref) = r2d2_reference(params, x, (h0, c0))
    assert jnp.allclose(q2, q2_ref, atol=1e-4, rtol=1e-4)
    assert jnp.allclose(h2, h2_ref, atol=1e-4, rtol=1e-4)
    assert jnp.allclose(c2, c2_ref, atol=1e-4, rtol=1e-4)

    # 3) default bf16-MXU path (f32 accumulation): loose sanity vs f32 reference
    qb, (hb, cb) = r2d2_forward(params, x)
    jax.block_until_ready((qb, hb, cb))
    assert bool(jnp.all(jnp.isfinite(qb)))
    assert jnp.allclose(qb, q_ref, atol=1e-1, rtol=1e-1)
    assert jnp.allclose(hb, h_ref, atol=1e-1, rtol=1e-1)

    print("KERNEL_OK")
</pallas_src>

<mosaic_0001>
module attributes {stable_mosaic.version = 11 : i64} {
  func.func @_probe(%arg0: i32, %arg1: memref<8x128xf32, #tpu.memory_space<vmem>>, %arg2: memref<8x128xf32, #tpu.memory_space<vmem>>) attributes {dimension_semantics = [#tpu.dimension_semantics<arbitrary>], iteration_bounds = array<i64: 2>, scalar_prefetch = 0 : i64, scratch_operands = 0 : i64, tpu.core_type = #tpu.core_type<tc>, window_params = [{pipeline_mode = #tpu.pipeline_mode<synchronous>, transform_indices = @transform_0, window_bounds = array<i64: 8, 128>}, {pipeline_mode = #tpu.pipeline_mode<synchronous>, transform_indices = @transform_1, window_bounds = array<i64: 8, 128>}]} {
    %c0 = arith.constant 0 : index
    %c0_0 = arith.constant 0 : index
    %0 = vector.load %arg1[%c0, %c0_0] : memref<8x128xf32, #tpu.memory_space<vmem>>, vector<8x128xf32>
    %cst = arith.constant 1.000000e+00 : f32
    %1 = vector.broadcast %cst : f32 to vector<8x128xf32>
    %2 = arith.addf %0, %1 : vector<8x128xf32>
    %c0_1 = arith.constant 0 : index
    %c0_2 = arith.constant 0 : index
    %3 = vector.load %arg2[%c0_1, %c0_2] : memref<8x128xf32, #tpu.memory_space<vmem>>, vector<8x128xf32>
    tpu.vector_store %arg2[%c0_1, %c0_2], %2 {strides = array<i32>} : memref<8x128xf32, #tpu.memory_space<vmem>>, vector<8x128xf32>,
    return
  }
  func.func @transform_0(%arg0: i32) -> (i32, i32) {
    %c0_i32 = arith.constant 0 : i32
    %c0_i32_0 = arith.constant 0 : i32
    %c0_i32_1 = arith.constant 0 : i32
    return %c0_i32, %c0_i32_0 : i32, i32
  }
  func.func @transform_1(%arg0: i32) -> (i32, i32) {
    %c0_i32 = arith.constant 0 : i32
    %c0_i32_0 = arith.constant 0 : i32
    %c0_i32_1 = arith.constant 0 : i32
    return %c0_i32, %c0_i32_0 : i32, i32
  }
}

module attributes {stable_mosaic.version = 11 : i64} {
  func.func @_r2d2_kernel(%arg0: i32, %arg1: memref<1x64x4xf32, #tpu.memory_space<vmem>>, %arg2: memref<4x512xf32, #tpu.memory_space<vmem>>, %arg3: memref<128x512xf32, #tpu.memory_space<vmem>>, %arg4: memref<1x512xf32, #tpu.memory_space<vmem>>, %arg5: memref<128x128xf32, #tpu.memory_space<vmem>>, %arg6: memref<1x128xf32, #tpu.memory_space<vmem>>, %arg7: memref<128x128xf32, #tpu.memory_space<vmem>>, %arg8: memref<1x128xf32, #tpu.memory_space<vmem>>, %arg9: memref<8x128xf32, #tpu.memory_space<vmem>>, %arg10: memref<8x128xf32, #tpu.memory_space<vmem>>, %arg11: memref<1x64x128xf32, #tpu.memory_space<vmem>>, %arg12: memref<8x128xf32, #tpu.memory_space<vmem>>, %arg13: memref<8x128xf32, #tpu.memory_space<vmem>>, %arg14: memref<64x512xf32, #tpu.memory_space<vmem>>, %arg15: memref<64x128xf32, #tpu.memory_space<vmem>>) attributes {dimension_semantics = [#tpu.dimension_semantics<parallel>], iteration_bounds = array<i64: 1>, scalar_prefetch = 0 : i64, scratch_operands = 2 : i64, tpu.core_type = #tpu.core_type<tc>, window_params = [{transform_indices = @transform_0, window_bounds = array<i64: 1, 64, 4>}, {pipeline_mode = #tpu.pipeline_mode<synchronous>, transform_indices = @transform_1, window_bounds = array<i64: 4, 512>}, {pipeline_mode = #tpu.pipeline_mode<synchronous>, transform_indices = @transform_2, window_bounds = array<i64: 128, 512>}, {pipeline_mode = #tpu.pipeline_mode<synchronous>, transform_indices = @transform_3, window_bounds = array<i64: 1, 512>}, {pipeline_mode = #tpu.pipeline_mode<synchronous>, transform_indices = @transform_4, window_bounds = array<i64: 128, 128>}, {pipeline_mode = #tpu.pipeline_mode<synchronous>, transform_indices = @transform_5, window_bounds = array<i64: 1, 128>}, {pipeline_mode = #tpu.pipeline_mode<synchronous>, transform_indices = @transform_6, window_bounds = array<i64: 128, 128>}, {pipeline_mode = #tpu.pipeline_mode<synchronous>, transform_indices = @transform_7, window_bounds = array<i64: 1, 128>}, {transform_indices = @transform_8, window_bounds = array<i64: 8, 128>}, {transform_indices = @transform_9, window_bounds = array<i64: 8, 128>}, {transform_indices = @transform_10, window_bounds = array<i64: 1, 64, 128>}, {transform_indices = @transform_11, window_bounds = array<i64: 8, 128>}, {transform_indices = @transform_12, window_bounds = array<i64: 8, 128>}]} {
    %c0 = arith.constant 0 : index
    %c0_0 = arith.constant 0 : index
    %0 = vector.load %arg2[%c0, %c0_0] : memref<4x512xf32, #tpu.memory_space<vmem>>, vector<4x512xf32>
    %c0_1 = arith.constant 0 : index
    %c0_2 = arith.constant 0 : index
    %1 = vector.load %arg4[%c0_1, %c0_2] : memref<1x512xf32, #tpu.memory_space<vmem>>, vector<1x512xf32>
    %c0_3 = arith.constant 0 : index
    %c0_4 = arith.constant 0 : index
    %c0_5 = arith.constant 0 : index
    %2 = vector.load %arg1[%c0_3, %c0_4, %c0_5] : memref<1x64x4xf32, #tpu.memory_space<vmem>>, vector<1x64x4xf32>
    %3 = vector.shape_cast %2 : vector<1x64x4xf32> to vector<64x4xf32>
    %cst = arith.constant dense<0.000000e+00> : vector<64x512xf32>
    %4 = tpu.matmul %3, %0, %cst {dimension_numbers = #tpu.dot_dimension_numbers<[1], [0], [0], [1], [0, 0, 1, 1], [], []>} : vector<64x4xf32>, vector<4x512xf32>, vector<64x512xf32> -> vector<64x512xf32>
    %5 = vector.broadcast %1 : vector<1x512xf32> to vector<64x512xf32>
    %6 = arith.addf %4, %5 : vector<64x512xf32>
    %c0_6 = arith.constant 0 : index
    %c0_7 = arith.constant 0 : index
    %7 = vector.load %arg14[%c0_6, %c0_7] : memref<64x512xf32, #tpu.memory_space<vmem>>, vector<64x512xf32>
    tpu.vector_store %arg14[%c0_6, %c0_7], %6 {strides = array<i32>} : memref<64x512xf32, #tpu.memory_space<vmem>>, vector<64x512xf32>,
    %c0_8 = arith.constant 0 : index
    %c0_9 = arith.constant 0 : index
    %8 = vector.load %arg3[%c0_8, %c0_9] : memref<128x512xf32, #tpu.memory_space<vmem>>, vector<128x512xf32>
    %c0_10 = arith.constant 0 : index
    %c0_11 = arith.constant 0 : index
    %9 = vector.load %arg9[%c0_10, %c0_11] : memref<8x128xf32, #tpu.memory_space<vmem>>, vector<8x128xf32>
    %c0_12 = arith.constant 0 : index
    %c0_13 = arith.constant 0 : index
    %10 = vector.load %arg10[%c0_12, %c0_13] : memref<8x128xf32, #tpu.memory_space<vmem>>, vector<8x128xf32>
    %c0_i32 = arith.constant 0 : i32
    %c8_i32 = arith.constant 8 : i32
    %11 = arith.muli %c0_i32, %c8_i32 : i32
    %12 = tpu.assume_multiple %11, 8 : i32
    %13 = arith.index_cast %12 : i32 to index
    %c0_14 = arith.constant 0 : index
    %14 = vector.load %arg14[%13, %c0_14] : memref<64x512xf32, #tpu.memory_space<vmem>>, vector<8x512xf32>
    %cst_15 = arith.constant dense<0.000000e+00> : vector<8x512xf32>
    %15 = tpu.matmul %9, %8, %cst_15 {dimension_numbers = #tpu.dot_dimension_numbers<[1], [0], [0], [1], [0, 0, 1, 1], [], []>} : vector<8x128xf32>, vector<128x512xf32>, vector<8x512xf32> -> vector<8x512xf32>
    %16 = arith.addf %14, %15 : vector<8x512xf32>
    %17 = vector.extract_strided_slice %16 {offsets = [0, 0], sizes = [8, 128], strides = [1, 1]} : vector<8x512xf32> to vector<8x128xf32>
    %18 = arith.negf %17 : vector<8x128xf32>
    %19 = math.exp %18 : vector<8x128xf32>
    %cst_16 = arith.constant 1.000000e+00 : f32
    %20 = vector.broadcast %cst_16 : f32 to vector<8x128xf32>
    %21 = arith.addf %20, %19 : vector<8x128xf32>
    %22 = arith.divf %20, %21 : vector<8x128xf32>
    %23 = vector.extract_strided_slice %16 {offsets = [0, 128], sizes = [8, 128], strides = [1, 1]} : vector<8x512xf32> to vector<8x128xf32>
    %24 = arith.negf %23 : vector<8x128xf32>
    %25 = math.exp %24 : vector<8x128xf32>
    %cst_17 = arith.constant 1.000000e+00 : f32
    %26 = vector.broadcast %cst_17 : f32 to vector<8x128xf32>
    %27 = arith.addf %26, %25 : vector<8x128xf32>
    %28 = arith.divf %26, %27 : vector<8x128xf32>
    %29 = vector.extract_strided_slice %16 {offsets = [0, 256], sizes = [8, 128], strides = [1, 1]} : vector<8x512xf32> to vector<8x128xf32>
    %30 = math.tanh %29 : vector<8x128xf32>
    %31 = vector.extract_strided_slice %16 {offsets = [0, 384], sizes = [8, 128], strides = [1, 1]} : vector<8x512xf32> to vector<8x128xf32>
    %32 = arith.negf %31 : vector<8x128xf32>
    %33 = math.exp %32 : vector<8x128xf32>
    %cst_18 = arith.constant 1.000000e+00 : f32
    %34 = vector.broadcast %cst_18 : f32 to vector<8x128xf32>
    %35 = arith.addf %34, %33 : vector<8x128xf32>
    %36 = arith.divf %34, %35 : vector<8x128xf32>
    %37 = arith.mulf %28, %10 : vector<8x128xf32>
    %38 = arith.mulf %22, %30 : vector<8x128xf32>
    %39 = arith.addf %37, %38 : vector<8x128xf32>
    %40 = math.tanh %39 : vector<8x128xf32>
    %41 = arith.mulf %36, %40 : vector<8x128xf32>
    %42 = arith.index_cast %12 : i32 to index
    %c0_19 = arith.constant 0 : index
    %43 = vector.load %arg15[%42, %c0_19] : memref<64x128xf32, #tpu.memory_space<vmem>>, vector<8x128xf32>
    tpu.vector_store %arg15[%42, %c0_19], %41 {strides = array<i32>} : memref<64x128xf32, #tpu.memory_space<vmem>>, vector<8x128xf32>,
    %c1_i32 = arith.constant 1 : i32
    %c8_i32_20 = arith.constant 8 : i32
    %44 = arith.muli %c1_i32, %c8_i32_20 : i32
    %45 = tpu.assume_multiple %44, 8 : i32
    %46 = arith.index_cast %45 : i32 to index
    %c0_21 = arith.constant 0 : index
    %47 = vector.load %arg14[%46, %c0_21] : memref<64x512xf32, #tpu.memory_space<vmem>>, vector<8x512xf32>
    %cst_22 = arith.constant dense<0.000000e+00> : vector<8x512xf32>
    %48 = tpu.matmul %41, %8, %cst_22 {dimension_numbers = #tpu.dot_dimension_numbers<[1], [0], [0], [1], [0, 0, 1, 1], [], []>} : vector<8x128xf32>, vector<128x512xf32>, vector<8x512xf32> -> vector<8x512xf32>
    %49 = arith.addf %47, %48 : vector<8x512xf32>
    %50 = vector.extract_strided_slice %49 {offsets = [0, 0], sizes = [8, 128], strides = [1, 1]} : vector<8x512xf32> to vector<8x128xf32>
    %51 = arith.negf %50 : vector<8x128xf32>
    %52 = math.exp %51 : vector<8x128xf32>
    %cst_23 = arith.constant 1.000000e+00 : f32
    %53 = vector.broadcast %cst_23 : f32 to vector<8x128xf32>
    %54 = arith.addf %53, %52 : vector<8x128xf32>
    %55 = arith.divf %53, %54 : vector<8x128xf32>
    %56 = vector.extract_strided_slice %49 {offsets = [0, 128], sizes = [8, 128], strides = [1, 1]} : vector<8x512xf32> to vector<8x128xf32>
    %57 = arith.negf %56 : vector<8x128xf32>
    %58 = math.exp %57 : vector<8x128xf32>
    %cst_24 = arith.constant 1.000000e+00 : f32
    %59 = vector.broadcast %cst_24 : f32 to vector<8x128xf32>
    %60 = arith.addf %59, %58 : vector<8x128xf32>
    %61 = arith.divf %59, %60 : vector<8x128xf32>
    %62 = vector.extract_strided_slice %49 {offsets = [0, 256], sizes = [8, 128], strides = [1, 1]} : vector<8x512xf32> to vector<8x128xf32>
    %63 = math.tanh %62 : vector<8x128xf32>
    %64 = vector.extract_strided_slice %49 {offsets = [0, 384], sizes = [8, 128], strides = [1, 1]} : vector<8x512xf32> to vector<8x128xf32>
    %65 = arith.negf %64 : vector<8x128xf32>
    %66 = math.exp %65 : vector<8x128xf32>
    %cst_25 = arith.constant 1.000000e+00 : f32
    %67 = vector.broadcast %cst_25 : f32 to vector<8x128xf32>
    %68 = arith.addf %67, %66 : vector<8x128xf32>
    %69 = arith.divf %67, %68 : vector<8x128xf32>
    %70 = arith.mulf %61, %39 : vector<8x128xf32>
    %71 = arith.mulf %55, %63 : vector<8x128xf32>
    %72 = arith.addf %70, %71 : vector<8x128xf32>
    %73 = math.tanh %72 : vector<8x128xf32>
    %74 = arith.mulf %69, %73 : vector<8x128xf32>
    %75 = arith.index_cast %45 : i32 to index
    %c0_26 = arith.constant 0 : index
    %76 = vector.load %arg15[%75, %c0_26] : memref<64x128xf32, #tpu.memory_space<vmem>>, vector<8x128xf32>
    tpu.vector_store %arg15[%75, %c0_26], %74 {strides = array<i32>} : memref<64x128xf32, #tpu.memory_space<vmem>>, vector<8x128xf32>,
    %c2_i32 = arith.constant 2 : i32
    %c8_i32_27 = arith.constant 8 : i32
    %77 = arith.muli %c2_i32, %c8_i32_27 : i32
    %78 = tpu.assume_multiple %77, 8 : i32
    %79 = arith.index_cast %78 : i32 to index
    %c0_28 = arith.constant 0 : index
    %80 = vector.load %arg14[%79, %c0_28] : memref<64x512xf32, #tpu.memory_space<vmem>>, vector<8x512xf32>
    %cst_29 = arith.constant dense<0.000000e+00> : vector<8x512xf32>
    %81 = tpu.matmul %74, %8, %cst_29 {dimension_numbers = #tpu.dot_dimension_numbers<[1], [0], [0], [1], [0, 0, 1, 1], [], []>} : vector<8x128xf32>, vector<128x512xf32>, vector<8x512xf32> -> vector<8x512xf32>
    %82 = arith.addf %80, %81 : vector<8x512xf32>
    %83 = vector.extract_strided_slice %82 {offsets = [0, 0], sizes = [8, 128], strides = [1, 1]} : vector<8x512xf32> to vector<8x128xf32>
    %84 = arith.negf %83 : vector<8x128xf32>
    %85 = math.exp %84 : vector<8x128xf32>
    %cst_30 = arith.constant 1.000000e+00 : f32
    %86 = vector.broadcast %cst_30 : f32 to vector<8x128xf32>
    %87 = arith.addf %86, %85 : vector<8x128xf32>
    %88 = arith.divf %86, %87 : vector<8x128xf32>
    %89 = vector.extract_strided_slice %82 {offsets = [0, 128], sizes = [8, 128], strides = [1, 1]} : vector<8x512xf32> to vector<8x128xf32>
    %90 = arith.negf %89 : vector<8x128xf32>
    %91 = math.exp %90 : vector<8x128xf32>
    %cst_31 = arith.constant 1.000000e+00 : f32
    %92 = vector.broadcast %cst_31 : f32 to vector<8x128xf32>
    %93 = arith.addf %92, %91 : vector<8x128xf32>
    %94 = arith.divf %92, %93 : vector<8x128xf32>
    %95 = vector.extract_strided_slice %82 {offsets = [0, 256], sizes = [8, 128], strides = [1, 1]} : vector<8x512xf32> to vector<8x128xf32>
    %96 = math.tanh %95 : vector<8x128xf32>
    %97 = vector.extract_strided_slice %82 {offsets = [0, 384], sizes = [8, 128], strides = [1, 1]} : vector<8x512xf32> to vector<8x128xf32>
    %98 = arith.negf %97 : vector<8x128xf32>
    %99 = math.exp %98 : vector<8x128xf32>
    %cst_32 = arith.constant 1.000000e+00 : f32
    %100 = vector.broadcast %cst_32 : f32 to vector<8x128xf32>
    %101 = arith.addf %100, %99 : vector<8x128xf32>
    %102 = arith.divf %100, %101 : vector<8x128xf32>
    %103 = arith.mulf %94, %72 : vector<8x128xf32>
    %104 = arith.mulf %88, %96 : vector<8x128xf32>
    %105 = arith.addf %103, %104 : vector<8x128xf32>
    %106 = math.tanh %105 : vector<8x128xf32>
    %107 = arith.mulf %102, %106 : vector<8x128xf32>
    %108 = arith.index_cast %78 : i32 to index
    %c0_33 = arith.constant 0 : index
    %109 = vector.load %arg15[%108, %c0_33] : memref<64x128xf32, #tpu.memory_space<vmem>>, vector<8x128xf32>
    tpu.vector_store %arg15[%108, %c0_33], %107 {strides = array<i32>} : memref<64x128xf32, #tpu.memory_space<vmem>>, vector<8x128xf32>,
    %c3_i32 = arith.constant 3 : i32
    %c8_i32_34 = arith.constant 8 : i32
    %110 = arith.muli %c3_i32, %c8_i32_34 : i32
    %111 = tpu.assume_multiple %110, 8 : i32
    %112 = arith.index_cast %111 : i32 to index
    %c0_35 = arith.constant 0 : index
    %113 = vector.load %arg14[%112, %c0_35] : memref<64x512xf32, #tpu.memory_space<vmem>>, vector<8x512xf32>
    %cst_36 = arith.constant dense<0.000000e+00> : vector<8x512xf32>
    %114 = tpu.matmul %107, %8, %cst_36 {dimension_numbers = #tpu.dot_dimension_numbers<[1], [0], [0], [1], [0, 0, 1, 1], [], []>} : vector<8x128xf32>, vector<128x512xf32>, vector<8x512xf32> -> vector<8x512xf32>
    %115 = arith.addf %113, %114 : vector<8x512xf32>
    %116 = vector.extract_strided_slice %115 {offsets = [0, 0], sizes = [8, 128], strides = [1, 1]} : vector<8x512xf32> to vector<8x128xf32>
    %117 = arith.negf %116 : vector<8x128xf32>
    %118 = math.exp %117 : vector<8x128xf32>
    %cst_37 = arith.constant 1.000000e+00 : f32
    %119 = vector.broadcast %cst_37 : f32 to vector<8x128xf32>
    %120 = arith.addf %119, %118 : vector<8x128xf32>
    %121 = arith.divf %119, %120 : vector<8x128xf32>
    %122 = vector.extract_strided_slice %115 {offsets = [0, 128], sizes = [8, 128], strides = [1, 1]} : vector<8x512xf32> to vector<8x128xf32>
    %123 = arith.negf %122 : vector<8x128xf32>
    %124 = math.exp %123 : vector<8x128xf32>
    %cst_38 = arith.constant 1.000000e+00 : f32
    %125 = vector.broadcast %cst_38 : f32 to vector<8x128xf32>
    %126 = arith.addf %125, %124 : vector<8x128xf32>
    %127 = arith.divf %125, %126 : vector<8x128xf32>
    %128 = vector.extract_strided_slice %115 {offsets = [0, 256], sizes = [8, 128], strides = [1, 1]} : vector<8x512xf32> to vector<8x128xf32>
    %129 = math.tanh %128 : vector<8x128xf32>
    %130 = vector.extract_strided_slice %115 {offsets = [0, 384], sizes = [8, 128], strides = [1, 1]} : vector<8x512xf32> to vector<8x128xf32>
    %131 = arith.negf %130 : vector<8x128xf32>
    %132 = math.exp %131 : vector<8x128xf32>
    %cst_39 = arith.constant 1.000000e+00 : f32
    %133 = vector.broadcast %cst_39 : f32 to vector<8x128xf32>
    %134 = arith.addf %133, %132 : vector<8x128xf32>
    %135 = arith.divf %133, %134 : vector<8x128xf32>
    %136 = arith.mulf %127, %105 : vector<8x128xf32>
    %137 = arith.mulf %121, %129 : vector<8x128xf32>
    %138 = arith.addf %136, %137 : vector<8x128xf32>
    %139 = math.tanh %138 : vector<8x128xf32>
    %140 = arith.mulf %135, %139 : vector<8x128xf32>
    %141 = arith.index_cast %111 : i32 to index
    %c0_40 = arith.constant 0 : index
    %142 = vector.load %arg15[%141, %c0_40] : memref<64x128xf32, #tpu.memory_space<vmem>>, vector<8x128xf32>
    tpu.vector_store %arg15[%141, %c0_40], %140 {strides = array<i32>} : memref<64x128xf32, #tpu.memory_space<vmem>>, vector<8x128xf32>,
    %c4_i32 = arith.constant 4 : i32
    %c8_i32_41 = arith.constant 8 : i32
    %143 = arith.muli %c4_i32, %c8_i32_41 : i32
    %144 = tpu.assume_multiple %143, 8 : i32
    %145 = arith.index_cast %144 : i32 to index
    %c0_42 = arith.constant 0 : index
    %146 = vector.load %arg14[%145, %c0_42] : memref<64x512xf32, #tpu.memory_space<vmem>>, vector<8x512xf32>
    %cst_43 = arith.constant dense<0.000000e+00> : vector<8x512xf32>
    %147 = tpu.matmul %140, %8, %cst_43 {dimension_numbers = #tpu.dot_dimension_numbers<[1], [0], [0], [1], [0, 0, 1, 1], [], []>} : vector<8x128xf32>, vector<128x512xf32>, vector<8x512xf32> -> vector<8x512xf32>
    %148 = arith.addf %146, %147 : vector<8x512xf32>
    %149 = vector.extract_strided_slice %148 {offsets = [0, 0], sizes = [8, 128], strides = [1, 1]} : vector<8x512xf32> to vector<8x128xf32>
    %150 = arith.negf %149 : vector<8x128xf32>
    %151 = math.exp %150 : vector<8x128xf32>
    %cst_44 = arith.constant 1.000000e+00 : f32
    %152 = vector.broadcast %cst_44 : f32 to vector<8x128xf32>
    %153 = arith.addf %152, %151 : vector<8x128xf32>
    %154 = arith.divf %152, %153 : vector<8x128xf32>
    %155 = vector.extract_strided_slice %148 {offsets = [0, 128], sizes = [8, 128], strides = [1, 1]} : vector<8x512xf32> to vector<8x128xf32>
    %156 = arith.negf %155 : vector<8x128xf32>
    %157 = math.exp %156 : vector<8x128xf32>
    %cst_45 = arith.constant 1.000000e+00 : f32
    %158 = vector.broadcast %cst_45 : f32 to vector<8x128xf32>
    %159 = arith.addf %158, %157 : vector<8x128xf32>
    %160 = arith.divf %158, %159 : vector<8x128xf32>
    %161 = vector.extract_strided_slice %148 {offsets = [0, 256], sizes = [8, 128], strides = [1, 1]} : vector<8x512xf32> to vector<8x128xf32>
    %162 = math.tanh %161 : vector<8x128xf32>
    %163 = vector.extract_strided_slice %148 {offsets = [0, 384], sizes = [8, 128], strides = [1, 1]} : vector<8x512xf32> to vector<8x128xf32>
    %164 = arith.negf %163 : vector<8x128xf32>
    %165 = math.exp %164 : vector<8x128xf32>
    %cst_46 = arith.constant 1.000000e+00 : f32
    %166 = vector.broadcast %cst_46 : f32 to vector<8x128xf32>
    %167 = arith.addf %166, %165 : vector<8x128xf32>
    %168 = arith.divf %166, %167 : vector<8x128xf32>
    %169 = arith.mulf %160, %138 : vector<8x128xf32>
    %170 = arith.mulf %154, %162 : vector<8x128xf32>
    %171 = arith.addf %169, %170 : vector<8x128xf32>
    %172 = math.tanh %171 : vector<8x128xf32>
    %173 = arith.mulf %168, %172 : vector<8x128xf32>
    %174 = arith.index_cast %144 : i32 to index
    %c0_47 = arith.constant 0 : index
    %175 = vector.load %arg15[%174, %c0_47] : memref<64x128xf32, #tpu.memory_space<vmem>>, vector<8x128xf32>
    tpu.vector_store %arg15[%174, %c0_47], %173 {strides = array<i32>} : memref<64x128xf32, #tpu.memory_space<vmem>>, vector<8x128xf32>,
    %c5_i32 = arith.constant 5 : i32
    %c8_i32_48 = arith.constant 8 : i32
    %176 = arith.muli %c5_i32, %c8_i32_48 : i32
    %177 = tpu.assume_multiple %176, 8 : i32
    %178 = arith.index_cast %177 : i32 to index
    %c0_49 = arith.constant 0 : index
    %179 = vector.load %arg14[%178, %c0_49] : memref<64x512xf32, #tpu.memory_space<vmem>>, vector<8x512xf32>
    %cst_50 = arith.constant dense<0.000000e+00> : vector<8x512xf32>
    %180 = tpu.matmul %173, %8, %cst_50 {dimension_numbers = #tpu.dot_dimension_numbers<[1], [0], [0], [1], [0, 0, 1, 1], [], []>} : vector<8x128xf32>, vector<128x512xf32>, vector<8x512xf32> -> vector<8x512xf32>
    %181 = arith.addf %179, %180 : vector<8x512xf32>
    %182 = vector.extract_strided_slice %181 {offsets = [0, 0], sizes = [8, 128], strides = [1, 1]} : vector<8x512xf32> to vector<8x128xf32>
    %183 = arith.negf %182 : vector<8x128xf32>
    %184 = math.exp %183 : vector<8x128xf32>
    %cst_51 = arith.constant 1.000000e+00 : f32
    %185 = vector.broadcast %cst_51 : f32 to vector<8x128xf32>
    %186 = arith.addf %185, %184 : vector<8x128xf32>
    %187 = arith.divf %185, %186 : vector<8x128xf32>
    %188 = vector.extract_strided_slice %181 {offsets = [0, 128], sizes = [8, 128], strides = [1, 1]} : vector<8x512xf32> to vector<8x128xf32>
    %189 = arith.negf %188 : vector<8x128xf32>
    %190 = math.exp %189 : vector<8x128xf32>
    %cst_52 = arith.constant 1.000000e+00 : f32
    %191 = vector.broadcast %cst_52 : f32 to vector<8x128xf32>
    %192 = arith.addf %191, %190 : vector<8x128xf32>
    %193 = arith.divf %191, %192 : vector<8x128xf32>
    %194 = vector.extract_strided_slice %181 {offsets = [0, 256], sizes = [8, 128], strides = [1, 1]} : vector<8x512xf32> to vector<8x128xf32>
    %195 = math.tanh %194 : vector<8x128xf32>
    %196 = vector.extract_strided_slice %181 {offsets = [0, 384], sizes = [8, 128], strides = [1, 1]} : vector<8x512xf32> to vector<8x128xf32>
    %197 = arith.negf %196 : vector<8x128xf32>
    %198 = math.exp %197 : vector<8x128xf32>
    %cst_53 = arith.constant 1.000000e+00 : f32
    %199 = vector.broadcast %cst_53 : f32 to vector<8x128xf32>
    %200 = arith.addf %199, %198 : vector<8x128xf32>
    %201 = arith.divf %199, %200 : vector<8x128xf32>
    %202 = arith.mulf %193, %171 : vector<8x128xf32>
    %203 = arith.mulf %187, %195 : vector<8x128xf32>
    %204 = arith.addf %202, %203 : vector<8x128xf32>
    %205 = math.tanh %204 : vector<8x128xf32>
    %206 = arith.mulf %201, %205 : vector<8x128xf32>
    %207 = arith.index_cast %177 : i32 to index
    %c0_54 = arith.constant 0 : index
    %208 = vector.load %arg15[%207, %c0_54] : memref<64x128xf32, #tpu.memory_space<vmem>>, vector<8x128xf32>
    tpu.vector_store %arg15[%207, %c0_54], %206 {strides = array<i32>} : memref<64x128xf32, #tpu.memory_space<vmem>>, vector<8x128xf32>,
    %c6_i32 = arith.constant 6 : i32
    %c8_i32_55 = arith.constant 8 : i32
    %209 = arith.muli %c6_i32, %c8_i32_55 : i32
    %210 = tpu.assume_multiple %209, 8 : i32
    %211 = arith.index_cast %210 : i32 to index
    %c0_56 = arith.constant 0 : index
    %212 = vector.load %arg14[%211, %c0_56] : memref<64x512xf32, #tpu.memory_space<vmem>>, vector<8x512xf32>
    %cst_57 = arith.constant dense<0.000000e+00> : vector<8x512xf32>
    %213 = tpu.matmul %206, %8, %cst_57 {dimension_numbers = #tpu.dot_dimension_numbers<[1], [0], [0], [1], [0, 0, 1, 1], [], []>} : vector<8x128xf32>, vector<128x512xf32>, vector<8x512xf32> -> vector<8x512xf32>
    %214 = arith.addf %212, %213 : vector<8x512xf32>
    %215 = vector.extract_strided_slice %214 {offsets = [0, 0], sizes = [8, 128], strides = [1, 1]} : vector<8x512xf32> to vector<8x128xf32>
    %216 = arith.negf %215 : vector<8x128xf32>
    %217 = math.exp %216 : vector<8x128xf32>
    %cst_58 = arith.constant 1.000000e+00 : f32
    %218 = vector.broadcast %cst_58 : f32 to vector<8x128xf32>
    %219 = arith.addf %218, %217 : vector<8x128xf32>
    %220 = arith.divf %218, %219 : vector<8x128xf32>
    %221 = vector.extract_strided_slice %214 {offsets = [0, 128], sizes = [8, 128], strides = [1, 1]} : vector<8x512xf32> to vector<8x128xf32>
    %222 = arith.negf %221 : vector<8x128xf32>
    %223 = math.exp %222 : vector<8x128xf32>
    %cst_59 = arith.constant 1.000000e+00 : f32
    %224 = vector.broadcast %cst_59 : f32 to vector<8x128xf32>
    %225 = arith.addf %224, %223 : vector<8x128xf32>
    %226 = arith.divf %224, %225 : vector<8x128xf32>
    %227 = vector.extract_strided_slice %214 {offsets = [0, 256], sizes = [8, 128], strides = [1, 1]} : vector<8x512xf32> to vector<8x128xf32>
    %228 = math.tanh %227 : vector<8x128xf32>
    %229 = vector.extract_strided_slice %214 {offsets = [0, 384], sizes = [8, 128], strides = [1, 1]} : vector<8x512xf32> to vector<8x128xf32>
    %230 = arith.negf %229 : vector<8x128xf32>
    %231 = math.exp %230 : vector<8x128xf32>
    %cst_60 = arith.constant 1.000000e+00 : f32
    %232 = vector.broadcast %cst_60 : f32 to vector<8x128xf32>
    %233 = arith.addf %232, %231 : vector<8x128xf32>
    %234 = arith.divf %232, %233 : vector<8x128xf32>
    %235 = arith.mulf %226, %204 : vector<8x128xf32>
    %236 = arith.mulf %220, %228 : vector<8x128xf32>
    %237 = arith.addf %235, %236 : vector<8x128xf32>
    %238 = math.tanh %237 : vector<8x128xf32>
    %239 = arith.mulf %234, %238 : vector<8x128xf32>
    %240 = arith.index_cast %210 : i32 to index
    %c0_61 = arith.constant 0 : index
    %241 = vector.load %arg15[%240, %c0_61] : memref<64x128xf32, #tpu.memory_space<vmem>>, vector<8x128xf32>
    tpu.vector_store %arg15[%240, %c0_61], %239 {strides = array<i32>} : memref<64x128xf32, #tpu.memory_space<vmem>>, vector<8x128xf32>,
    %c7_i32 = arith.constant 7 : i32
    %c8_i32_62 = arith.constant 8 : i32
    %242 = arith.muli %c7_i32, %c8_i32_62 : i32
    %243 = tpu.assume_multiple %242, 8 : i32
    %244 = arith.index_cast %243 : i32 to index
    %c0_63 = arith.constant 0 : index
    %245 = vector.load %arg14[%244, %c0_63] : memref<64x512xf32, #tpu.memory_space<vmem>>, vector<8x512xf32>
    %cst_64 = arith.constant dense<0.000000e+00> : vector<8x512xf32>
    %246 = tpu.matmul %239, %8, %cst_64 {dimension_numbers = #tpu.dot_dimension_numbers<[1], [0], [0], [1], [0, 0, 1, 1], [], []>} : vector<8x128xf32>, vector<128x512xf32>, vector<8x512xf32> -> vector<8x512xf32>
    %247 = arith.addf %245, %246 : vector<8x512xf32>
    %248 = vector.extract_strided_slice %247 {offsets = [0, 0], sizes = [8, 128], strides = [1, 1]} : vector<8x512xf32> to vector<8x128xf32>
    %249 = arith.negf %248 : vector<8x128xf32>
    %250 = math.exp %249 : vector<8x128xf32>
    %cst_65 = arith.constant 1.000000e+00 : f32
    %251 = vector.broadcast %cst_65 : f32 to vector<8x128xf32>
    %252 = arith.addf %251, %250 : vector<8x128xf32>
    %253 = arith.divf %251, %252 : vector<8x128xf32>
    %254 = vector.extract_strided_slice %247 {offsets = [0, 128], sizes = [8, 128], strides = [1, 1]} : vector<8x512xf32> to vector<8x128xf32>
    %255 = arith.negf %254 : vector<8x128xf32>
    %256 = math.exp %255 : vector<8x128xf32>
    %cst_66 = arith.constant 1.000000e+00 : f32
    %257 = vector.broadcast %cst_66 : f32 to vector<8x128xf32>
    %258 = arith.addf %257, %256 : vector<8x128xf32>
    %259 = arith.divf %257, %258 : vector<8x128xf32>
    %260 = vector.extract_strided_slice %247 {offsets = [0, 256], sizes = [8, 128], strides = [1, 1]} : vector<8x512xf32> to vector<8x128xf32>
    %261 = math.tanh %260 : vector<8x128xf32>
    %262 = vector.extract_strided_slice %247 {offsets = [0, 384], sizes = [8, 128], strides = [1, 1]} : vector<8x512xf32> to vector<8x128xf32>
    %263 = arith.negf %262 : vector<8x128xf32>
    %264 = math.exp %263 : vector<8x128xf32>
    %cst_67 = arith.constant 1.000000e+00 : f32
    %265 = vector.broadcast %cst_67 : f32 to vector<8x128xf32>
    %266 = arith.addf %265, %264 : vector<8x128xf32>
    %267 = arith.divf %265, %266 : vector<8x128xf32>
    %268 = arith.mulf %259, %237 : vector<8x128xf32>
    %269 = arith.mulf %253, %261 : vector<8x128xf32>
    %270 = arith.addf %268, %269 : vector<8x128xf32>
    %271 = math.tanh %270 : vector<8x128xf32>
    %272 = arith.mulf %267, %271 : vector<8x128xf32>
    %273 = arith.index_cast %243 : i32 to index
    %c0_68 = arith.constant 0 : index
    %274 = vector.load %arg15[%273, %c0_68] : memref<64x128xf32, #tpu.memory_space<vmem>>, vector<8x128xf32>
    tpu.vector_store %arg15[%273, %c0_68], %272 {strides = array<i32>} : memref<64x128xf32, #tpu.memory_space<vmem>>, vector<8x128xf32>,
    %c8_i32_69 = arith.constant 8 : i32
    %c0_70 = arith.constant 0 : index
    %c0_71 = arith.constant 0 : index
    %275 = vector.load %arg12[%c0_70, %c0_71] : memref<8x128xf32, #tpu.memory_space<vmem>>, vector<8x128xf32>
    tpu.vector_store %arg12[%c0_70, %c0_71], %272 {strides = array<i32>} : memref<8x128xf32, #tpu.memory_space<vmem>>, vector<8x128xf32>,
    %c0_72 = arith.constant 0 : index
    %c0_73 = arith.constant 0 : index
    %276 = vector.load %arg13[%c0_72, %c0_73] : memref<8x128xf32, #tpu.memory_space<vmem>>, vector<8x128xf32>
    tpu.vector_store %arg13[%c0_72, %c0_73], %270 {strides = array<i32>} : memref<8x128xf32, #tpu.memory_space<vmem>>, vector<8x128xf32>,
    %c0_74 = arith.constant 0 : index
    %c0_75 = arith.constant 0 : index
    %277 = vector.load %arg5[%c0_74, %c0_75] : memref<128x128xf32, #tpu.memory_space<vmem>>, vector<128x128xf32>
    %c0_76 = arith.constant 0 : index
    %c0_77 = arith.constant 0 : index
    %278 = vector.load %arg6[%c0_76, %c0_77] : memref<1x128xf32, #tpu.memory_space<vmem>>, vector<1x128xf32>
    %c0_78 = arith.constant 0 : index
    %c0_79 = arith.constant 0 : index
    %279 = vector.load %arg7[%c0_78, %c0_79] : memref<128x128xf32, #tpu.memory_space<vmem>>, vector<128x128xf32>
    %c0_80 = arith.constant 0 : index
    %c0_81 = arith.constant 0 : index
    %280 = vector.load %arg8[%c0_80, %c0_81] : memref<1x128xf32, #tpu.memory_space<vmem>>, vector<1x128xf32>
    %c0_82 = arith.constant 0 : index
    %c0_83 = arith.constant 0 : index
    %281 = vector.load %arg15[%c0_82, %c0_83] : memref<64x128xf32, #tpu.memory_space<vmem>>, vector<64x128xf32>
    %cst_84 = arith.constant dense<0.000000e+00> : vector<64x128xf32>
    %282 = tpu.matmul %281, %277, %cst_84 {dimension_numbers = #tpu.dot_dimension_numbers<[1], [0], [0], [1], [0, 0, 1, 1], [], []>} : vector<64x128xf32>, vector<128x128xf32>, vector<64x128xf32> -> vector<64x128xf32>
    %283 = vector.broadcast %278 : vector<1x128xf32> to vector<64x128xf32>
    %284 = arith.addf %282, %283 : vector<64x128xf32>
    %cst_85 = arith.constant 0.000000e+00 : f32
    %285 = vector.broadcast %cst_85 : f32 to vector<64x128xf32>
    %286 = arith.maximumf %284, %285 : vector<64x128xf32>
    %cst_86 = arith.constant dense<0.000000e+00> : vector<64x128xf32>
    %287 = tpu.matmul %286, %279, %cst_86 {dimension_numbers = #tpu.dot_dimension_numbers<[1], [0], [0], [1], [0, 0, 1, 1], [], []>} : vector<64x128xf32>, vector<128x128xf32>, vector<64x128xf32> -> vector<64x128xf32>
    %288 = vector.broadcast %280 : vector<1x128xf32> to vector<64x128xf32>
    %289 = arith.addf %287, %288 : vector<64x128xf32>
    %c0_87 = arith.constant 0 : index
    %c0_88 = arith.constant 0 : index
    %c0_89 = arith.constant 0 : index
    %290 = vector.load %arg11[%c0_87, %c0_88, %c0_89] : memref<1x64x128xf32, #tpu.memory_space<vmem>>, vector<1x64x128xf32>
    %291 = vector.shape_cast %290 : vector<1x64x128xf32> to vector<64x128xf32>
    %292 = vector.shape_cast %289 : vector<64x128xf32> to vector<1x64x128xf32>
    tpu.vector_store %arg11[%c0_87, %c0_88, %c0_89], %292 {strides = array<i32>} : memref<1x64x128xf32, #tpu.memory_space<vmem>>, vector<1x64x128xf32>,
    return
  }
  func.func @transform_0(%arg0: i32) -> (i32, i32, i32) {
    %c0_i32 = arith.constant 0 : i32
    %c0_i32_0 = arith.constant 0 : i32
    %c0_i32_1 = arith.constant 0 : i32
    return %arg0, %c0_i32, %c0_i32_0 : i32, i32, i32
  }
  func.func @transform_1(%arg0: i32) -> (i32, i32) {
    %c0_i32 = arith.constant 0 : i32
    %c0_i32_0 = arith.constant 0 : i32
    %c0_i32_1 = arith.constant 0 : i32
    return %c0_i32, %c0_i32_0 : i32, i32
  }
  func.func @transform_2(%arg0: i32) -> (i32, i32) {
    %c0_i32 = arith.constant 0 : i32
    %c0_i32_0 = arith.constant 0 : i32
    %c0_i32_1 = arith.constant 0 : i32
    return %c0_i32, %c0_i32_0 : i32, i32
  }
  func.func @transform_3(%arg0: i32) -> (i32, i32) {
    %c0_i32 = arith.constant 0 : i32
    %c0_i32_0 = arith.constant 0 : i32
    %c0_i32_1 = arith.constant 0 : i32
    return %c0_i32, %c0_i32_0 : i32, i32
  }
  func.func @transform_4(%arg0: i32) -> (i32, i32) {
    %c0_i32 = arith.constant 0 : i32
    %c0_i32_0 = arith.constant 0 : i32
    %c0_i32_1 = arith.constant 0 : i32
    return %c0_i32, %c0_i32_0 : i32, i32
  }
  func.func @transform_5(%arg0: i32) -> (i32, i32) {
    %c0_i32 = arith.constant 0 : i32
    %c0_i32_0 = arith.constant 0 : i32
    %c0_i32_1 = arith.constant 0 : i32
    return %c0_i32, %c0_i32_0 : i32, i32
  }
  func.func @transform_6(%arg0: i32) -> (i32, i32) {
    %c0_i32 = arith.constant 0 : i32
    %c0_i32_0 = arith.constant 0 : i32
    %c0_i32_1 = arith.constant 0 : i32
    return %c0_i32, %c0_i32_0 : i32, i32
  }
  func.func @transform_7(%arg0: i32) -> (i32, i32) {
    %c0_i32 = arith.constant 0 : i32
    %c0_i32_0 = arith.constant 0 : i32
    %c0_i32_1 = arith.constant 0 : i32
    return %c0_i32, %c0_i32_0 : i32, i32
  }
  func.func @transform_8(%arg0: i32) -> (i32, i32) {
    %c0_i32 = arith.constant 0 : i32
    %c0_i32_0 = arith.constant 0 : i32
    return %arg0, %c0_i32 : i32, i32
  }
  func.func @transform_9(%arg0: i32) -> (i32, i32) {
    %c0_i32 = arith.constant 0 : i32
    %c0_i32_0 = arith.constant 0 : i32
    return %arg0, %c0_i32 : i32, i32
  }
  func.func @transform_10(%arg0: i32) -> (i32, i32, i32) {
    %c0_i32 = arith.constant 0 : i32
    %c0_i32_0 = arith.constant 0 : i32
    %c0_i32_1 = arith.constant 0 : i32
    return %arg0, %c0_i32, %c0_i32_0 : i32, i32, i32
  }
  func.func @transform_11(%arg0: i32) -> (i32, i32) {
    %c0_i32 = arith.constant 0 : i32
    %c0_i32_0 = arith.constant 0 : i32
    return %arg0, %c0_i32 : i32, i32
  }
  func.func @transform_12(%arg0: i32) -> (i32, i32) {
    %c0_i32 = arith.constant 0 : i32
    %c0_i32_0 = arith.constant 0 : i32
    return %arg0, %c0_i32 : i32, i32
  }
}

</mosaic_0001>

<llo_original>
// kernel: tpu_custom_call.1
$region0: #{tpu_custom_call.1}
  #allocation0 [shape = 'u32[]', space=smem, size = 0x4, offset = 0x4, fixed_abs, tag = 'smem constant byte address 0x4 - core index']
  #allocation1 [shape = 'u32[144,128]{1,0:T(1,128)}', space=vmem, size = 0x12000, scoped, tag = 'internal scratch']
  %s0 = inlined_call_operand.hbm [shape: f32[8,128], index: 0, kind: input, shape index: {}]
  %s1 = inlined_call_operand.hbm [shape: f32[8,128], index: 1, kind: output, shape index: {}]
  %s2 = sld [smem:[#allocation0]]
  $region41: #{tpu_custom_call.1} parent=0
    _
  %s4 = ssub.s32 1, %s2
  %s5 = scalar_select 0, %s4, %s2
  $region1: #{tpu_custom_call.1} parent=0
    #allocation2 [shape = 'u8[4096]{0}', space=vmem, size = 0x1000, scoped, tag = 'input window, operand 0, single buffered']
    #allocation3 [shape = 's32[2]{0}', space=sflag, size = 0x8, scoped, tag = 'scoped memory for tpu_custom_call.1']
    #allocation4 [shape = 's32[2]{0}', space=sflag, size = 0x8, scoped, tag = 'scoped memory for tpu_custom_call.1']
    #allocation5 [shape = 'u8[4096]{0}', space=vmem, size = 0x1000, scoped, tag = 'output window, operand 0, single buffered']
    %6 = vsyncpa [#allocation3], 0
    %7 = vsyncpa [#allocation4], 0
    loop: start=0, step=1, limit=4
    $region2: #{tpu_custom_call.1} parent=1 // loop_pre_header
      _
    $region3: #{tpu_custom_call.1} parent=1 // loop_header
      %s9 = sphi 0, %s13
      %p10 = scmp.ge.s32.totalorder %s9, 4
      %s17 = sphi 0, %s17
      %s19 = sphi 0, %s17
      %s20 = sphi 0, %s19
      %s34 = sphi 0, %s20
      %s38 = sphi 0, %s38
      %s40 = sphi 0, %s38
      %s41 = sphi 0, %s40
      %s55 = sphi 0, %s41
    $region4: #{tpu_custom_call.1} parent=1 // loop_header_branch
      %12 = sbr.rel (%p10) target = $region8
    $region5: #{tpu_custom_call.1} parent=1 // loop_body
      %s14 = ssub.s32 %s9, 1
      %s15 = ssub.s32 %s9, 2
      %s16 = sadd.s32 %s9, 1
      %s18 = sadd.s32 %s17, 1
      %p21 = scmp.eq.s32.totalorder %s9, 1
      %p22 = scmp.ne.s32.totalorder %s17, %s19
      %p23 = scmp.eq.s32.totalorder %s9, 0
      %p24 = por %p22, %p23
      %p25 = scmp.ne.s32.totalorder %s17, %s19
      %p26 = scmp.eq.s32.totalorder %s14, 1
      %p27 = por %p25, %p26
      %p28 = scmp.ne.s32.totalorder %s19, %s20
      %p29 = scmp.eq.s32.totalorder %s14, 0
      %p30 = por %p28, %p29
      %p31 = scmp.ne.s32.totalorder %s19, %s20
      %p32 = scmp.eq.s32.totalorder %s15, 1
      %p33 = por %p31, %p32
      %p35 = scmp.ne.s32.totalorder %s20, %s34
      %p36 = scmp.eq.s32.totalorder %s15, 0
      %p37 = por %p35, %p36
      %s39 = sadd.s32 %s38, 1
      %p42 = scmp.eq.s32.totalorder %s9, 1
      %p43 = scmp.ne.s32.totalorder %s38, %s40
      %p44 = scmp.eq.s32.totalorder %s9, 0
      %p45 = por %p43, %p44
      %p46 = scmp.ne.s32.totalorder %s38, %s40
      %p47 = scmp.eq.s32.totalorder %s14, 1
      %p48 = por %p46, %p47
      %p49 = scmp.ne.s32.totalorder %s40, %s41
      %p50 = scmp.eq.s32.totalorder %s14, 0
      %p51 = por %p49, %p50
      %p52 = scmp.ne.s32.totalorder %s40, %s41
      %p53 = scmp.eq.s32.totalorder %s15, 1
      %p54 = por %p52, %p53
      %p56 = scmp.ne.s32.totalorder %s41, %s55
      %p57 = scmp.eq.s32.totalorder %s15, 0
      %p58 = por %p56, %p57
      %p59 = scmp.le.s32.totalorder 1, %s9
      %p60 = scmp.lt.s32.totalorder %s9, 3
      %p61 = pnand %p59, %p60
      %p62 = pneg %p61
      // Predicated region
      $region9: #{tpu_custom_call.1} parent=5 // pred_check
        _
      $region10: #{tpu_custom_call.1} parent=5 // pred_check_branch
        %64 = sbr.rel (%p61) target = $region12
      $region11: #{tpu_custom_call.1} parent=5 // pred_region
        %s65 = ssub.s32 %s9, 1
        // Predicated region
        $region13: #{tpu_custom_call.1} parent=11 // pred_check
          %p66 = pneg %p30
        $region14: #{tpu_custom_call.1} parent=11 // pred_check_branch
          %68 = sbr.rel (%p66) target = $region16
        $region15: #{tpu_custom_call.1} parent=11 // pred_region
          %s70 = ssub.s32 128, 128
          %71 = vsyncadd [#allocation3], %s70
          %s73 = sshll.u32 [#allocation2], 4
          %s74 = int_to_ptr.vmem [resolvable:$true] %s73
          %76 = dma.hbm_to_vmem [thread:$0]  %s0, 128, %s74, [#allocation3]
        $region16: #{tpu_custom_call.1} parent=11 // pred_fallthru
          _
      $region12: #{tpu_custom_call.1} parent=5 // pred_fallthru
        _
      %p77 = scmp.lt.s32.totalorder %s9, 2
      // Predicated region
      $region17: #{tpu_custom_call.1} parent=5 // pred_check
        %p78 = pneg %p77
      $region18: #{tpu_custom_call.1} parent=5 // pred_check_branch
        %80 = sbr.rel (%p78) target = $region20
      $region19: #{tpu_custom_call.1} parent=5 // pred_region
        _
      $region20: #{tpu_custom_call.1} parent=5 // pred_fallthru
        _
      %p81 = scmp.le.s32.totalorder 1, %s9
      %p82 = scmp.lt.s32.totalorder %s9, 3
      %p83 = pnand %p81, %p82
      %p84 = pneg %p83
      // Predicated region
      $region21: #{tpu_custom_call.1} parent=5 // pred_check
        _
      $region22: #{tpu_custom_call.1} parent=5 // pred_check_branch
        %86 = sbr.rel (%p83) target = $region24
      $region23: #{tpu_custom_call.1} parent=5 // pred_region
        %s87 = ssub.s32 %s9, 1
        // Predicated region
        $region25: #{tpu_custom_call.1} parent=23 // pred_check
          %p88 = pneg %p30
        $region26: #{tpu_custom_call.1} parent=23 // pred_check_branch
          %90 = sbr.rel (%p88) target = $region28
        $region27: #{tpu_custom_call.1} parent=23 // pred_region
          %91 = dma.done [#allocation3], 128
        $region28: #{tpu_custom_call.1} parent=23 // pred_fallthru
          _
        %p92 = pneg %p30
        %p93 = pneg %p27
        %p94 = pneg %p51
        %p95 = pneg %p48
        %v96 = vld [vmem:[#allocation2] sm:$0xff]
        %v97 = vadd.f32 %v96, 1.0
        %98 = vst [vmem:[#allocation5] sm:$0xff] %v97
        // Predicated region
        $region29: #{tpu_custom_call.1} parent=23 // pred_check
          %p99 = pneg %p48
        $region30: #{tpu_custom_call.1} parent=23 // pred_check_branch
          %101 = sbr.rel (%p99) target = $region32
        $region31: #{tpu_custom_call.1} parent=23 // pred_region
          %s103 = ssub.s32 128, 128
          %104 = vsyncadd [#allocation4], %s103
          %s106 = sshll.u32 [#allocation5], 4
          %s107 = int_to_ptr.vmem [resolvable:$true] %s106
          %109 = dma.vmem_to_hbm [thread:$0]  %s107, 128, %s1, [#allocation4]
        $region32: #{tpu_custom_call.1} parent=23 // pred_fallthru
          _
        // Predicated region
        $region33: #{tpu_custom_call.1} parent=23 // pred_check
          %p110 = pneg %p48
        $region34: #{tpu_custom_call.1} parent=23 // pred_check_branch
          %112 = sbr.rel (%p110) target = $region36
        $region35: #{tpu_custom_call.1} parent=23 // pred_region
          %113 = dma.done [#allocation4], 128
        $region36: #{tpu_custom_call.1} parent=23 // pred_fallthru
          _
      $region24: #{tpu_custom_call.1} parent=5 // pred_fallthru
        _
      %p114 = scmp.le.s32.totalorder 2, %s9
      // Predicated region
      $region37: #{tpu_custom_call.1} parent=5 // pred_check
        %p115 = pneg %p114
      $region38: #{tpu_custom_call.1} parent=5 // pred_check_branch
        %117 = sbr.rel (%p115) target = $region40
      $region39: #{tpu_custom_call.1} parent=5 // pred_region
        %s118 = ssub.s32 %s9, 2
      $region40: #{tpu_custom_call.1} parent=5 // pred_fallthru
        _
    $region6: #{tpu_custom_call.1} parent=1 // loop_footer
      %s13 = sadd.s32 1, %s9
    $region7: #{tpu_custom_call.1} parent=1 // loop_footer_branch
      %8 = sbr.rel target = $region3
    $region8: #{tpu_custom_call.1} parent=1 // loop_exit
      _
    %119 = vsyncpa [#allocation3], 1
    %s120 = scalar_lea.sflag [#allocation3], 1
    %121 = vsyncpa %s120, 1
    %122 = vsyncpa [#allocation4], 1
    %s123 = scalar_lea.sflag [#allocation4], 1
    %124 = vsyncpa %s123, 1

// kernel: _r2d2_impl.1
$region0: #{_r2d2_impl.1}
  #allocation0 [shape = 'u32[]', space=smem, size = 0x4, offset = 0x4, fixed_abs, tag = 'smem constant byte address 0x4 - core index']
  #allocation1 [shape = 'u32[144,128]{1,0:T(1,128)}', space=vmem, size = 0x12000, scoped, tag = 'internal scratch']
  #allocation2 [shape = 'f32[64,512]{1,0:T(8,128)}', space=vmem, size = 0x20000, scoped, tag = 'scratch operand']
  #allocation3 [shape = 'f32[64,128]{1,0:T(8,128)}', space=vmem, size = 0x8000, scoped, tag = 'scratch operand']
  %s0 = inlined_call_operand.vmem [shape: f32[1,64,4], index: 0, kind: input, shape index: {}]
  %s1 = inlined_call_operand.vmem [shape: f32[4,512], index: 1, kind: input, shape index: {}]
  %s2 = inlined_call_operand.vmem [shape: f32[128,512], index: 2, kind: input, shape index: {}]
  %s3 = inlined_call_operand.vmem [shape: f32[1,512], index: 3, kind: input, shape index: {}]
  %s4 = inlined_call_operand.vmem [shape: f32[128,128], index: 4, kind: input, shape index: {}]
  %s5 = inlined_call_operand.vmem [shape: f32[1,128], index: 5, kind: input, shape index: {}]
  %s6 = inlined_call_operand.vmem [shape: f32[128,128], index: 6, kind: input, shape index: {}]
  %s7 = inlined_call_operand.vmem [shape: f32[1,128], index: 7, kind: input, shape index: {}]
  %s8 = inlined_call_operand.vmem [shape: f32[8,128], index: 8, kind: input, shape index: {}]
  %s9 = inlined_call_operand.vmem [shape: f32[8,128], index: 9, kind: input, shape index: {}]
  %s10 = inlined_call_operand.vmem [shape: f32[1,64,128], index: 10, kind: output, shape index: {0}]
  %s11 = inlined_call_operand.vmem [shape: f32[8,128], index: 11, kind: output, shape index: {1}]
  %s12 = inlined_call_operand.vmem [shape: f32[8,128], index: 12, kind: output, shape index: {2}]
  %13 = xla_tuple %s10, %s11, %s12
  %s14 = sld [smem:[#allocation0]]
  $region66: #{_r2d2_impl.1} parent=0
    _
  %s16 = ssub.s32 1, %s14
  %s17 = scalar_select 0, %s16, %s14
  // Predicated region
  $region2: #{_r2d2_impl.1} parent=0 // pred_check
    _
  $region3: #{_r2d2_impl.1} parent=0 // pred_check_branch
    %19 = sbr.rel (0) target = $region5
  $region4: #{_r2d2_impl.1} parent=0 // pred_region
    _
  $region5: #{_r2d2_impl.1} parent=0 // pred_fallthru
    _
  // Predicated region
  $region6: #{_r2d2_impl.1} parent=0 // pred_check
    _
  $region7: #{_r2d2_impl.1} parent=0 // pred_check_branch
    %21 = sbr.rel (0) target = $region9
  $region8: #{_r2d2_impl.1} parent=0 // pred_region
    _
  $region9: #{_r2d2_impl.1} parent=0 // pred_fallthru
    _
  // Predicated region
  $region10: #{_r2d2_impl.1} parent=0 // pred_check
    _
  $region11: #{_r2d2_impl.1} parent=0 // pred_check_branch
    %23 = sbr.rel (0) target = $region13
  $region12: #{_r2d2_impl.1} parent=0 // pred_region
    _
  $region13: #{_r2d2_impl.1} parent=0 // pred_fallthru
    _
  // Predicated region
  $region14: #{_r2d2_impl.1} parent=0 // pred_check
    _
  $region15: #{_r2d2_impl.1} parent=0 // pred_check_branch
    %25 = sbr.rel (0) target = $region17
  $region16: #{_r2d2_impl.1} parent=0 // pred_region
    _
  $region17: #{_r2d2_impl.1} parent=0 // pred_fallthru
    _
  // Predicated region
  $region18: #{_r2d2_impl.1} parent=0 // pred_check
    _
  $region19: #{_r2d2_impl.1} parent=0 // pred_check_branch
    %27 = sbr.rel (0) target = $region21
  $region20: #{_r2d2_impl.1} parent=0 // pred_region
    _
  $region21: #{_r2d2_impl.1} parent=0 // pred_fallthru
    _
  // Predicated region
  $region22: #{_r2d2_impl.1} parent=0 // pred_check
    _
  $region23: #{_r2d2_impl.1} parent=0 // pred_check_branch
    %29 = sbr.rel (0) target = $region25
  $region24: #{_r2d2_impl.1} parent=0 // pred_region
    _
  $region25: #{_r2d2_impl.1} parent=0 // pred_fallthru
    _
  // Predicated region
  $region26: #{_r2d2_impl.1} parent=0 // pred_check
    _
  $region27: #{_r2d2_impl.1} parent=0 // pred_check_branch
    %31 = sbr.rel (0) target = $region29
  $region28: #{_r2d2_impl.1} parent=0 // pred_region
    _
  $region29: #{_r2d2_impl.1} parent=0 // pred_fallthru
    _
  // Predicated region
  $region30: #{_r2d2_impl.1} parent=0 // pred_check
    _
  $region31: #{_r2d2_impl.1} parent=0 // pred_check_branch
    %33 = sbr.rel (0) target = $region33
  $region32: #{_r2d2_impl.1} parent=0 // pred_region
    _
  $region33: #{_r2d2_impl.1} parent=0 // pred_fallthru
    _
  // Predicated region
  $region34: #{_r2d2_impl.1} parent=0 // pred_check
    _
  $region35: #{_r2d2_impl.1} parent=0 // pred_check_branch
    %35 = sbr.rel (0) target = $region37
  $region36: #{_r2d2_impl.1} parent=0 // pred_region
    _
  $region37: #{_r2d2_impl.1} parent=0 // pred_fallthru
    _
  // Predicated region
  $region38: #{_r2d2_impl.1} parent=0 // pred_check
    _
  $region39: #{_r2d2_impl.1} parent=0 // pred_check_branch
    %37 = sbr.rel (0) target = $region41
  $region40: #{_r2d2_impl.1} parent=0 // pred_region
    _
  $region41: #{_r2d2_impl.1} parent=0 // pred_fallthru
    _
  %v38 = vld [vmem:[%s1] sm:$0xff]
  %v39 = vld [vmem:[%s1 + $0x8] sm:$0xff]
  %v40 = vld [vmem:[%s3] sm:$0xf]
  %v41 = vld [vmem:[%s0] sm:$0xff]
  %v42 = vld [vmem:[%s0 + $0x8] sm:$0xff]
  %v43 = vld [vmem:[%s0 + $0x10] sm:$0xff]
  %v44 = vld [vmem:[%s0 + $0x18] sm:$0xff]
  %v45 = vld [vmem:[%s0 + $0x20] sm:$0xff]
  %v46 = vld [vmem:[%s0 + $0x28] sm:$0xff]
  %v47 = vld [vmem:[%s0 + $0x30] sm:$0xff]
  %v48 = vld [vmem:[%s0 + $0x38] sm:$0xff]
  %v50 = vlaneseq
  %v51 = vshrl.u32 %v50, 7
  %v52 = vsub.s32 0, %v51
  %v53 = vrot.slane %v40, %v52
  %v54 = vlaneseq
  %v55 = vshrl.u32 %v54, 7
  %v56 = vsub.s32 1, %v55
  %v57 = vrot.slane %v40, %v56
  %v58 = vlaneseq
  %v59 = vshrl.u32 %v58, 7
  %v60 = vsub.s32 2, %v59
  %v61 = vrot.slane %v40, %v60
  %v62 = vlaneseq
  %v63 = vshrl.u32 %v62, 7
  %v64 = vsub.s32 3, %v63
  %v65 = vrot.slane %v40, %v64
  %v72 = vcombine.high %v38, %v38
  %v73 = vcombine.high %v39, %v39
  %vm74 = vcmask 31744
  %v76 = vsel %vm74, %v41, 0
  %v79 = vsel %vm74, %v42, 0
  %v82 = vsel %vm74, %v43, 0
  %v85 = vsel %vm74, %v44, 0
  %v88 = vsel %vm74, %v45, 0
  %v91 = vsel %vm74, %v46, 0
  %v94 = vsel %vm74, %v47, 0
  %v97 = vsel %vm74, %v48, 0
  %vm99 = vcmask 1043456
  %v100 = vsel %vm99, %v38, 0
  %v102 = vsel %vm99, %v72, 0
  %v104 = vsel %vm99, %v39, 0
  %v106 = vsel %vm99, %v73, 0
  %108 = vmatprep.subr.mxu0 %v102
  %109 = vmatpush1.msra.mxu0 %v100
  %110 = vmatprep.subr.mxu0 0.0
  %111 = vmatpush1.msra.mxu0 0.0
  %112 = vmatprep.subr.mxu0 0.0
  %113 = vmatpush1.msra.mxu0 0.0
  %114 = vmatprep.subr.mxu0 0.0
  %115 = vmatpush1.msra.mxu0 0.0
  %116 = vmatprep.subr.mxu0 0.0
  %117 = vmatpush1.msra.mxu0 0.0
  %118 = vmatprep.subr.mxu0 0.0
  %119 = vmatpush1.msra.mxu0 0.0
  %120 = vmatprep.subr.mxu0 0.0
  %121 = vmatpush1.msra.mxu0 0.0
  %122 = vmatprep.subr.mxu0 0.0
  %123 = vmatpush1.msra.mxu0 0.0
  %124 = vmatprep.subr.mxu0 0.0
  %125 = vmatpush1.msra.mxu0 0.0
  %126 = vmatprep.subr.mxu0 0.0
  %127 = vmatpush1.msra.mxu0 0.0
  %128 = vmatprep.subr.mxu0 0.0
  %129 = vmatpush1.msra.mxu0 0.0
  %130 = vmatprep.subr.mxu0 0.0
  %131 = vmatpush1.msra.mxu0 0.0
  %132 = vmatprep.subr.mxu0 0.0
  %133 = vmatpush1.msra.mxu0 0.0
  %134 = vmatprep.subr.mxu0 0.0
  %135 = vmatpush1.msra.mxu0 0.0
  %136 = vmatprep.subr.mxu0 0.0
  %137 = vmatpush1.msra.mxu0 0.0
  %138 = vmatprep.subr.mxu0 0.0
  %139 = vmatpush1.msra.mxu0 0.0
  %140 = vmatprep.subr.mxu0 0.0
  %141 = vmatpush1.msra.mxu0 0.0
  %142 = vmatprep.subr.mxu0 0.0
  %143 = vmatpush1.msra.mxu0 0.0
  %144 = vmatprep.subr.mxu0 0.0
  %145 = vmatpush1.msra.mxu0 0.0
  %146 = vmatprep.subr.mxu0 0.0
  %147 = vmatpush1.msra.mxu0 0.0
  %148 = vmatprep.subr.mxu0 0.0
  %149 = vmatpush1.msra.mxu0 0.0
  %150 = vmatprep.subr.mxu0 0.0
  %151 = vmatpush1.msra.mxu0 0.0
  %152 = vmatprep.subr.mxu0 0.0
  %153 = vmatpush1.msra.mxu0 0.0
  %154 = vmatprep.subr.mxu0 0.0
  %155 = vmatpush1.msra.mxu0 0.0
  %156 = vmatprep.subr.mxu0 0.0
  %157 = vmatpush1.msra.mxu0 0.0
  %158 = vmatprep.subr.mxu0 0.0
  %159 = vmatpush1.msra.mxu0 0.0
  %160 = vmatprep.subr.mxu0 0.0
  %161 = vmatpush1.msra.mxu0 0.0
  %162 = vmatprep.subr.mxu0 0.0
  %163 = vmatpush1.msra.mxu0 0.0
  %164 = vmatprep.subr.mxu0 0.0
  %165 = vmatpush1.msra.mxu0 0.0
  %166 = vmatprep.subr.mxu0 0.0
  %167 = vmatpush1.msra.mxu0 0.0
  %168 = vmatprep.subr.mxu0 0.0
  %169 = vmatpush1.msra.mxu0 0.0
  %170 = vmatprep.subr.mxu0 0.0
  %171 = vmatpush1.msra.mxu0 0.0
  %172 = vmatprep.mubr.f32.mxu0 0.0
  %173 = vmatmul.mubr.f32.gmra.mrb[0].mxu0 %v76
  %v174 = vpop.f32.mrb[0].mxu0
  %v175 = vadd.f32 %v53, %v174
  %v176 = vpop.f32.mrb[0].mxu0
  %v177 = vadd.f32 %v57, %v176
  %178 = vmatprep.mubr.f32.mxu0 0.0
  %179 = vmatmul.mubr.f32.gmra.mrb[0].mxu0 %v79
  %v180 = vpop.f32.mrb[0].mxu0
  %v181 = vadd.f32 %v53, %v180
  %v182 = vpop.f32.mrb[0].mxu0
  %v183 = vadd.f32 %v57, %v182
  %184 = vmatprep.mubr.f32.mxu0 0.0
  %185 = vmatmul.mubr.f32.gmra.mrb[0].mxu0 %v82
  %v186 = vpop.f32.mrb[0].mxu0
  %v187 = vadd.f32 %v53, %v186
  %v188 = vpop.f32.mrb[0].mxu0
  %v189 = vadd.f32 %v57, %v188
  %190 = vmatprep.mubr.f32.mxu0 0.0
  %191 = vmatmul.mubr.f32.gmra.mrb[0].mxu0 %v85
  %v192 = vpop.f32.mrb[0].mxu0
  %v193 = vadd.f32 %v53, %v192
  %v194 = vpop.f32.mrb[0].mxu0
  %v195 = vadd.f32 %v57, %v194
  %196 = vmatprep.mubr.f32.mxu0 0.0
  %197 = vmatmul.mubr.f32.gmra.mrb[0].mxu0 %v88
  %v198 = vpop.f32.mrb[0].mxu0
  %v199 = vadd.f32 %v53, %v198
  %v200 = vpop.f32.mrb[0].mxu0
  %v201 = vadd.f32 %v57, %v200
  %202 = vmatprep.mubr.f32.mxu0 0.0
  %203 = vmatmul.mubr.f32.gmra.mrb[0].mxu0 %v91
  %v204 = vpop.f32.mrb[0].mxu0
  %v205 = vadd.f32 %v53, %v204
  %v206 = vpop.f32.mrb[0].mxu0
  %v207 = vadd.f32 %v57, %v206
  %208 = vmatprep.mubr.f32.mxu0 0.0
  %209 = vmatmul.mubr.f32.gmra.mrb[0].mxu0 %v94
  %v210 = vpop.f32.mrb[0].mxu0
  %v211 = vadd.f32 %v53, %v210
  %v212 = vpop.f32.mrb[0].mxu0
  %v213 = vadd.f32 %v57, %v212
  %214 = vmatprep.mubr.f32.mxu0 0.0
  %215 = vmatmul.mubr.f32.gmra.mrb[0].mxu0 %v97
  %v216 = vpop.f32.mrb[0].mxu0
  %v217 = vadd.f32 %v53, %v216
  %v218 = vpop.f32.mrb[0].mxu0
  %v219 = vadd.f32 %v57, %v218
  %220 = vdwg.mxu0
  %221 = vmatprep.subr.mxu0 %v106
  %222 = vmatpush1.msra.mxu0 %v104
  %223 = vmatprep.subr.mxu0 0.0
  %224 = vmatpush1.msra.mxu0 0.0
  %225 = vmatprep.subr.mxu0 0.0
  %226 = vmatpush1.msra.mxu0 0.0
  %227 = vmatprep.subr.mxu0 0.0
  %228 = vmatpush1.msra.mxu0 0.0
  %229 = vmatprep.subr.mxu0 0.0
  %230 = vmatpush1.msra.mxu0 0.0
  %231 = vmatprep.subr.mxu0 0.0
  %232 = vmatpush1.msra.mxu0 0.0
  %233 = vmatprep.subr.mxu0 0.0
  %234 = vmatpush1.msra.mxu0 0.0
  %235 = vmatprep.subr.mxu0 0.0
  %236 = vmatpush1.msra.mxu0 0.0
  %237 = vmatprep.subr.mxu0 0.0
  %238 = vmatpush1.msra.mxu0 0.0
  %239 = vmatprep.subr.mxu0 0.0
  %240 = vmatpush1.msra.mxu0 0.0
  %241 = vmatprep.subr.mxu0 0.0
  %242 = vmatpush1.msra.mxu0 0.0
  %243 = vmatprep.subr.mxu0 0.0
  %244 = vmatpush1.msra.mxu0 0.0
  %245 = vmatprep.subr.mxu0 0.0
  %246 = vmatpush1.msra.mxu0 0.0
  %247 = vmatprep.subr.mxu0 0.0
  %248 = vmatpush1.msra.mxu0 0.0
  %249 = vmatprep.subr.mxu0 0.0
  %250 = vmatpush1.msra.mxu0 0.0
  %251 = vmatprep.subr.mxu0 0.0
  %252 = vmatpush1.msra.mxu0 0.0
  %253 = vmatprep.subr.mxu0 0.0
  %254 = vmatpush1.msra.mxu0 0.0
  %255 = vmatprep.subr.mxu0 0.0
  %256 = vmatpush1.msra.mxu0 0.0
  %257 = vmatprep.subr.mxu0 0.0
  %258 = vmatpush1.msra.mxu0 0.0
  %259 = vmatprep.subr.mxu0 0.0
  %260 = vmatpush1.msra.mxu0 0.0
  %261 = vmatprep.subr.mxu0 0.0
  %262 = vmatpush1.msra.mxu0 0.0
  %263 = vmatprep.subr.mxu0 0.0
  %264 = vmatpush1.msra.mxu0 0.0
  %265 = vmatprep.subr.mxu0 0.0
  %266 = vmatpush1.msra.mxu0 0.0
  %267 = vmatprep.subr.mxu0 0.0
  %268 = vmatpush1.msra.mxu0 0.0
  %269 = vmatprep.subr.mxu0 0.0
  %270 = vmatpush1.msra.mxu0 0.0
  %271 = vmatprep.subr.mxu0 0.0
  %272 = vmatpush1.msra.mxu0 0.0
  %273 = vmatprep.subr.mxu0 0.0
  %274 = vmatpush1.msra.mxu0 0.0
  %275 = vmatprep.subr.mxu0 0.0
  %276 = vmatpush1.msra.mxu0 0.0
  %277 = vmatprep.subr.mxu0 0.0
  %278 = vmatpush1.msra.mxu0 0.0
  %279 = vmatprep.subr.mxu0 0.0
  %280 = vmatpush1.msra.mxu0 0.0
  %281 = vmatprep.subr.mxu0 0.0
  %282 = vmatpush1.msra.mxu0 0.0
  %283 = vmatprep.subr.mxu0 0.0
  %284 = vmatpush1.msra.mxu0 0.0
  %285 = vmatprep.mubr.f32.mxu0 0.0
  %286 = vmatmul.mubr.f32.gmra.mrb[0].mxu0 %v76
  %v287 = vpop.f32.mrb[0].mxu0
  %v288 = vadd.f32 %v61, %v287
  %v289 = vpop.f32.mrb[0].mxu0
  %v290 = vadd.f32 %v65, %v289
  %291 = vmatprep.mubr.f32.mxu0 0.0
  %292 = vmatmul.mubr.f32.gmra.mrb[0].mxu0 %v79
  %v293 = vpop.f32.mrb[0].mxu0
  %v294 = vadd.f32 %v61, %v293
  %v295 = vpop.f32.mrb[0].mxu0
  %v296 = vadd.f32 %v65, %v295
  %297 = vmatprep.mubr.f32.mxu0 0.0
  %298 = vmatmul.mubr.f32.gmra.mrb[0].mxu0 %v82
  %v299 = vpop.f32.mrb[0].mxu0
  %v300 = vadd.f32 %v61, %v299
  %v301 = vpop.f32.mrb[0].mxu0
  %v302 = vadd.f32 %v65, %v301
  %303 = vmatprep.mubr.f32.mxu0 0.0
  %304 = vmatmul.mubr.f32.gmra.mrb[0].mxu0 %v85
  %v305 = vpop.f32.mrb[0].mxu0
  %v306 = vadd.f32 %v61, %v305
  %v307 = vpop.f32.mrb[0].mxu0
  %v308 = vadd.f32 %v65, %v307
  %309 = vmatprep.mubr.f32.mxu0 0.0
  %310 = vmatmul.mubr.f32.gmra.mrb[0].mxu0 %v88
  %v311 = vpop.f32.mrb[0].mxu0
  %v312 = vadd.f32 %v61, %v311
  %v313 = vpop.f32.mrb[0].mxu0
  %v314 = vadd.f32 %v65, %v313
  %315 = vmatprep.mubr.f32.mxu0 0.0
  %316 = vmatmul.mubr.f32.gmra.mrb[0].mxu0 %v91
  %v317 = vpop.f32.mrb[0].mxu0
  %v318 = vadd.f32 %v61, %v317
  %v319 = vpop.f32.mrb[0].mxu0
  %v320 = vadd.f32 %v65, %v319
  %321 = vmatprep.mubr.f32.mxu0 0.0
  %322 = vmatmul.mubr.f32.gmra.mrb[0].mxu0 %v94
  %v323 = vpop.f32.mrb[0].mxu0
  %v324 = vadd.f32 %v61, %v323
  %v325 = vpop.f32.mrb[0].mxu0
  %v326 = vadd.f32 %v65, %v325
  %327 = vmatprep.mubr.f32.mxu0 0.0
  %328 = vmatmul.mubr.f32.gmra.mrb[0].mxu0 %v97
  %v329 = vpop.f32.mrb[0].mxu0
  %v330 = vadd.f32 %v61, %v329
  %v331 = vpop.f32.mrb[0].mxu0
  %v332 = vadd.f32 %v65, %v331
  %333 = vdwg.mxu0
  %334 = vst [vmem:[#allocation2] sm:$0xff] %v175
  %335 = vst [vmem:[#allocation2 + $0x8] sm:$0xff] %v177
  %336 = vst [vmem:[#allocation2 + $0x10] sm:$0xff] %v288
  %337 = vst [vmem:[#allocation2 + $0x18] sm:$0xff] %v290
  %338 = vst [vmem:[#allocation2 + $0x20] sm:$0xff] %v181
  %339 = vst [vmem:[#allocation2 + $0x28] sm:$0xff] %v183
  %340 = vst [vmem:[#allocation2 + $0x30] sm:$0xff] %v294
  %341 = vst [vmem:[#allocation2 + $0x38] sm:$0xff] %v296
  %342 = vst [vmem:[#allocation2 + $0x40] sm:$0xff] %v187
  %343 = vst [vmem:[#allocation2 + $0x48] sm:$0xff] %v189
  %344 = vst [vmem:[#allocation2 + $0x50] sm:$0xff] %v300
  %345 = vst [vmem:[#allocation2 + $0x58] sm:$0xff] %v302
  %346 = vst [vmem:[#allocation2 + $0x60] sm:$0xff] %v193
  %347 = vst [vmem:[#allocation2 + $0x68] sm:$0xff] %v195
  %348 = vst [vmem:[#allocation2 + $0x70] sm:$0xff] %v306
  %349 = vst [vmem:[#allocation2 + $0x78] sm:$0xff] %v308
  %350 = vst [vmem:[#allocation2 + $0x80] sm:$0xff] %v199
  %351 = vst [vmem:[#allocation2 + $0x88] sm:$0xff] %v201
  %352 = vst [vmem:[#allocation2 + $0x90] sm:$0xff] %v312
  %353 = vst [vmem:[#allocation2 + $0x98] sm:$0xff] %v314
  %354 = vst [vmem:[#allocation2 + $0xa0] sm:$0xff] %v205
  %355 = vst [vmem:[#allocation2 + $0xa8] sm:$0xff] %v207
  %356 = vst [vmem:[#allocation2 + $0xb0] sm:$0xff] %v318
  %357 = vst [vmem:[#allocation2 + $0xb8] sm:$0xff] %v320
  %358 = vst [vmem:[#allocation2 + $0xc0] sm:$0xff] %v211
  %359 = vst [vmem:[#allocation2 + $0xc8] sm:$0xff] %v213
  %360 = vst [vmem:[#allocation2 + $0xd0] sm:$0xff] %v324
  %361 = vst [vmem:[#allocation2 + $0xd8] sm:$0xff] %v326
  %362 = vst [vmem:[#allocation2 + $0xe0] sm:$0xff] %v217
  %363 = vst [vmem:[#allocation2 + $0xe8] sm:$0xff] %v219
  %364 = vst [vmem:[#allocation2 + $0xf0] sm:$0xff] %v330
  %365 = vst [vmem:[#allocation2 + $0xf8] sm:$0xff] %v332
  %v366 = vld [vmem:[%s2] sm:$0xff]
  %v367 = vld [vmem:[%s2 + $0x8] sm:$0xff]
  %v368 = vld [vmem:[%s2 + $0x10] sm:$0xff]
  %v369 = vld [vmem:[%s2 + $0x18] sm:$0xff]
  %v370 = vld [vmem:[%s2 + $0x20] sm:$0xff]
  %v371 = vld [vmem:[%s2 + $0x28] sm:$0xff]
  %v372 = vld [vmem:[%s2 + $0x30] sm:$0xff]
  %v373 = vld [vmem:[%s2 + $0x38] sm:$0xff]
  %v374 = vld [vmem:[%s2 + $0x40] sm:$0xff]
  %v375 = vld [vmem:[%s2 + $0x48] sm:$0xff]
  %v376 = vld [vmem:[%s2 + $0x50] sm:$0xff]
  %v377 = vld [vmem:[%s2 + $0x58] sm:$0xff]
  %v378 = vld [vmem:[%s2 + $0x60] sm:$0xff]
  %v379 = vld [vmem:[%s2 + $0x68] sm:$0xff]
  %v380 = vld [vmem:[%s2 + $0x70] sm:$0xff]
  %v381 = vld [vmem:[%s2 + $0x78] sm:$0xff]
  %v382 = vld [vmem:[%s2 + $0x80] sm:$0xff]
  %v383 = vld [vmem:[%s2 + $0x88] sm:$0xff]
  %v384 = vld [vmem:[%s2 + $0x90] sm:$0xff]
  %v385 = vld [vmem:[%s2 + $0x98] sm:$0xff]
  %v386 = vld [vmem:[%s2 + $0xa0] sm:$0xff]
  %v387 = vld [vmem:[%s2 + $0xa8] sm:$0xff]
  %v388 = vld [vmem:[%s2 + $0xb0] sm:$0xff]
  %v389 = vld [vmem:[%s2 + $0xb8] sm:$0xff]
  %v390 = vld [vmem:[%s2 + $0xc0] sm:$0xff]
  %v391 = vld [vmem:[%s2 + $0xc8] sm:$0xff]
  %v392 = vld [vmem:[%s2 + $0xd0] sm:$0xff]
  %v393 = vld [vmem:[%s2 + $0xd8] sm:$0xff]
  %v394 = vld [vmem:[%s2 + $0xe0] sm:$0xff]
  %v395 = vld [vmem:[%s2 + $0xe8] sm:$0xff]
  %v396 = vld [vmem:[%s2 + $0xf0] sm:$0xff]
  %v397 = vld [vmem:[%s2 + $0xf8] sm:$0xff]
  %v398 = vld [vmem:[%s2 + $0x100] sm:$0xff]
  %v399 = vld [vmem:[%s2 + $0x108] sm:$0xff]
  %v400 = vld [vmem:[%s2 + $0x110] sm:$0xff]
  %v401 = vld [vmem:[%s2 + $0x118] sm:$0xff]
  %v402 = vld [vmem:[%s2 + $0x120] sm:$0xff]
  %v403 = vld [vmem:[%s2 + $0x128] sm:$0xff]
  %v404 = vld [vmem:[%s2 + $0x130] sm:$0xff]
  %v405 = vld [vmem:[%s2 + $0x138] sm:$0xff]
  %v406 = vld [vmem:[%s2 + $0x140] sm:$0xff]
  %v407 = vld [vmem:[%s2 + $0x148] sm:$0xff]
  %v408 = vld [vmem:[%s2 + $0x150] sm:$0xff]
  %v409 = vld [vmem:[%s2 + $0x158] sm:$0xff]
  %v410 = vld [vmem:[%s2 + $0x160] sm:$0xff]
  %v411 = vld [vmem:[%s2 + $0x168] sm:$0xff]
  %v412 = vld [vmem:[%s2 + $0x170] sm:$0xff]
  %v413 = vld [vmem:[%s2 + $0x178] sm:$0xff]
  %v414 = vld [vmem:[%s2 + $0x180] sm:$0xff]
  %v415 = vld [vmem:[%s2 + $0x188] sm:$0xff]
  %v416 = vld [vmem:[%s2 + $0x190] sm:$0xff]
  %v417 = vld [vmem:[%s2 + $0x198] sm:$0xff]
  %v418 = vld [vmem:[%s2 + $0x1a0] sm:$0xff]
  %v419 = vld [vmem:[%s2 + $0x1a8] sm:$0xff]
  %v420 = vld [vmem:[%s2 + $0x1b0] sm:$0xff]
  %v421 = vld [vmem:[%s2 + $0x1b8] sm:$0xff]
  %v422 = vld [vmem:[%s2 + $0x1c0] sm:$0xff]
  %v423 = vld [vmem:[%s2 + $0x1c8] sm:$0xff]
  %v424 = vld [vmem:[%s2 + $0x1d0] sm:$0xff]
  %v425 = vld [vmem:[%s2 + $0x1d8] sm:$0xff]
  %v426 = vld [vmem:[%s2 + $0x1e0] sm:$0xff]
  %v427 = vld [vmem:[%s2 + $0x1e8] sm:$0xff]
  %v428 = vld [vmem:[%s2 + $0x1f0] sm:$0xff]
  %v429 = vld [vmem:[%s2 + $0x1f8] sm:$0xff]
  %v430 = vld [vmem:[%s8] sm:$0xff]
  %v431 = vld [vmem:[%s9] sm:$0xff]
  %s432 = smul.u32 0, 4
  %s433 = smul.addr %s432, 8
  %s434 = scalar_lea.vmem [#allocation2], %s433
  %v435 = vld [vmem:[%s434] sm:$0xff]
  %v436 = vld [vmem:[%s434 + $0x8] sm:$0xff]
  %v437 = vld [vmem:[%s434 + $0x10] sm:$0xff]
  %v438 = vld [vmem:[%s434 + $0x18] sm:$0xff]
  %439 = vmatprep.subr.mxu0 %v367
  %440 = vmatpush1.msra.mxu0 %v366
  %441 = vmatprep.subr.mxu0 %v371
  %442 = vmatpush1.msra.mxu0 %v370
  %443 = vmatprep.subr.mxu0 %v375
  %444 = vmatpush1.msra.mxu0 %v374
  %445 = vmatprep.subr.mxu0 %v379
  %446 = vmatpush1.msra.mxu0 %v378
  %447 = vmatprep.subr.mxu0 %v383
  %448 = vmatpush1.msra.mxu0 %v382
  %449 = vmatprep.subr.mxu0 %v387
  %450 = vmatpush1.msra.mxu0 %v386
  %451 = vmatprep.subr.mxu0 %v391
  %452 = vmatpush1.msra.mxu0 %v390
  %453 = vmatprep.subr.mxu0 %v395
  %454 = vmatpush1.msra.mxu0 %v394
  %455 = vmatprep.subr.mxu0 %v399
  %456 = vmatpush1.msra.mxu0 %v398
  %457 = vmatprep.subr.mxu0 %v403
  %458 = vmatpush1.msra.mxu0 %v402
  %459 = vmatprep.subr.mxu0 %v407
  %460 = vmatpush1.msra.mxu0 %v406
  %461 = vmatprep.subr.mxu0 %v411
  %462 = vmatpush1.msra.mxu0 %v410
  %463 = vmatprep.subr.mxu0 %v415
  %464 = vmatpush1.msra.mxu0 %v414
  %465 = vmatprep.subr.mxu0 %v419
  %466 = vmatpush1.msra.mxu0 %v418
  %467 = vmatprep.subr.mxu0 %v423
  %468 = vmatpush1.msra.mxu0 %v422
  %469 = vmatprep.subr.mxu0 %v427
  %470 = vmatpush1.msra.mxu0 %v426
  %471 = vmatprep.subr.mxu0 0.0
  %472 = vmatpush1.msra.mxu0 0.0
  %473 = vmatprep.subr.mxu0 0.0
  %474 = vmatpush1.msra.mxu0 0.0
  %475 = vmatprep.subr.mxu0 0.0
  %476 = vmatpush1.msra.mxu0 0.0
  %477 = vmatprep.subr.mxu0 0.0
  %478 = vmatpush1.msra.mxu0 0.0
  %479 = vmatprep.subr.mxu0 0.0
  %480 = vmatpush1.msra.mxu0 0.0
  %481 = vmatprep.subr.mxu0 0.0
  %482 = vmatpush1.msra.mxu0 0.0
  %483 = vmatprep.subr.mxu0 0.0
  %484 = vmatpush1.msra.mxu0 0.0
  %485 = vmatprep.subr.mxu0 0.0
  %486 = vmatpush1.msra.mxu0 0.0
  %487 = vmatprep.subr.mxu0 0.0
  %488 = vmatpush1.msra.mxu0 0.0
  %489 = vmatprep.subr.mxu0 0.0
  %490 = vmatpush1.msra.mxu0 0.0
  %491 = vmatprep.subr.mxu0 0.0
  %492 = vmatpush1.msra.mxu0 0.0
  %493 = vmatprep.subr.mxu0 0.0
  %494 = vmatpush1.msra.mxu0 0.0
  %495 = vmatprep.subr.mxu0 0.0
  %496 = vmatpush1.msra.mxu0 0.0
  %497 = vmatprep.subr.mxu0 0.0
  %498 = vmatpush1.msra.mxu0 0.0
  %499 = vmatprep.subr.mxu0 0.0
  %500 = vmatpush1.msra.mxu0 0.0
  %501 = vmatprep.subr.mxu0 0.0
  %502 = vmatpush1.msra.mxu0 0.0
  %503 = vmatprep.mubr.f32.mxu0 0.0
  %504 = vmatmul.mubr.f32.gmra.mrb[0].mxu0 %v430
  %v505 = vpop.f32.mrb[0].mxu0
  %v506 = vadd.f32 0.0, %v505
  %v507 = vpop.f32.mrb[0].mxu0
  %v508 = vadd.f32 0.0, %v507
  %509 = vdwg.mxu0
  %510 = vmatprep.subr.mxu0 %v369
  %511 = vmatpush1.msra.mxu0 %v368
  %512 = vmatprep.subr.mxu0 %v373
  %513 = vmatpush1.msra.mxu0 %v372
  %514 = vmatprep.subr.mxu0 %v377
  %515 = vmatpush1.msra.mxu0 %v376
  %516 = vmatprep.subr.mxu0 %v381
  %517 = vmatpush1.msra.mxu0 %v380
  %518 = vmatprep.subr.mxu0 %v385
  %519 = vmatpush1.msra.mxu0 %v384
  %520 = vmatprep.subr.mxu0 %v389
  %521 = vmatpush1.msra.mxu0 %v388
  %522 = vmatprep.subr.mxu0 %v393
  %523 = vmatpush1.msra.mxu0 %v392
  %524 = vmatprep.subr.mxu0 %v397
  %525 = vmatpush1.msra.mxu0 %v396
  %526 = vmatprep.subr.mxu0 %v401
  %527 = vmatpush1.msra.mxu0 %v400
  %528 = vmatprep.subr.mxu0 %v405
  %529 = vmatpush1.msra.mxu0 %v404
  %530 = vmatprep.subr.mxu0 %v409
  %531 = vmatpush1.msra.mxu0 %v408
  %532 = vmatprep.subr.mxu0 %v413
  %533 = vmatpush1.msra.mxu0 %v412
  %534 = vmatprep.subr.mxu0 %v417
  %535 = vmatpush1.msra.mxu0 %v416
  %536 = vmatprep.subr.mxu0 %v421
  %537 = vmatpush1.msra.mxu0 %v420
  %538 = vmatprep.subr.mxu0 %v425
  %539 = vmatpush1.msra.mxu0 %v424
  %540 = vmatprep.subr.mxu0 %v429
  %541 = vmatpush1.msra.mxu0 %v428
  %542 = vmatprep.subr.mxu0 0.0
  %543 = vmatpush1.msra.mxu0 0.0
  %544 = vmatprep.subr.mxu0 0.0
  %545 = vmatpush1.msra.mxu0 0.0
  %546 = vmatprep.subr.mxu0 0.0
  %547 = vmatpush1.msra.mxu0 0.0
  %548 = vmatprep.subr.mxu0 0.0
  %549 = vmatpush1.msra.mxu0 0.0
  %550 = vmatprep.subr.mxu0 0.0
  %551 = vmatpush1.msra.mxu0 0.0
  %552 = vmatprep.subr.mxu0 0.0
  %553 = vmatpush1.msra.mxu0 0.0
  %554 = vmatprep.subr.mxu0 0.0
  %555 = vmatpush1.msra.mxu0 0.0
  %556 = vmatprep.subr.mxu0 0.0
  %557 = vmatpush1.msra.mxu0 0.0
  %558 = vmatprep.subr.mxu0 0.0
  %559 = vmatpush1.msra.mxu0 0.0
  %560 = vmatprep.subr.mxu0 0.0
  %561 = vmatpush1.msra.mxu0 0.0
  %562 = vmatprep.subr.mxu0 0.0
  %563 = vmatpush1.msra.mxu0 0.0
  %564 = vmatprep.subr.mxu0 0.0
  %565 = vmatpush1.msra.mxu0 0.0
  %566 = vmatprep.subr.mxu0 0.0
  %567 = vmatpush1.msra.mxu0 0.0
  %568 = vmatprep.subr.mxu0 0.0
  %569 = vmatpush1.msra.mxu0 0.0
  %570 = vmatprep.subr.mxu0 0.0
  %571 = vmatpush1.msra.mxu0 0.0
  %572 = vmatprep.subr.mxu0 0.0
  %573 = vmatpush1.msra.mxu0 0.0
  %574 = vmatprep.mubr.f32.mxu0 0.0
  %575 = vmatmul.mubr.f32.gmra.mrb[0].mxu0 %v430
  %v576 = vpop.f32.mrb[0].mxu0
  %v577 = vadd.f32 0.0, %v576
  %v578 = vpop.f32.mrb[0].mxu0
  %v579 = vadd.f32 0.0, %v578
  %580 = vdwg.mxu0
  %v581 = vadd.f32 %v435, %v506
  %v582 = vadd.f32 %v436, %v508
  %v583 = vadd.f32 %v437, %v577
  %v584 = vadd.f32 %v438, %v579
  %v585 = vxor.u32 %v581, 2147483648
  %v586 = vmul.f32 %v585, 1.442695
  %v587 = vpow.pop %v586
  %v588 = vadd.f32 %v587, 1.0
  %v589 = vrcp.pop %v588
  %v590 = vmul.f32 1.0, %v589
  %v591 = vxor.u32 %v582, 2147483648
  %v592 = vmul.f32 %v591, 1.442695
  %v593 = vpow.pop %v592
  %v594 = vadd.f32 %v593, 1.0
  %v595 = vrcp.pop %v594
  %v596 = vmul.f32 1.0, %v595
  %v597 = vtanh.pop %v583
  %v598 = vxor.u32 %v584, 2147483648
  %v599 = vmul.f32 %v598, 1.442695
  %v600 = vpow.pop %v599
  %v601 = vadd.f32 %v600, 1.0
  %v602 = vrcp.pop %v601
  %v603 = vmul.f32 1.0, %v602
  %v604 = vmul.f32 %v596, %v431
  %v605 = vmul.f32 %v590, %v597
  %v606 = vadd.f32 %v604, %v605
  %v607 = vtanh.pop %v606
  %v608 = vmul.f32 %v603, %v607
  %609 = vst [vmem:[#allocation3] sm:$0xff] %v608
  %s610 = smul.u32 1, 4
  %s611 = smul.addr %s610, 8
  %s612 = scalar_lea.vmem [#allocation2], %s611
  %v613 = vld [vmem:[%s612] sm:$0xff]
  %v614 = vld [vmem:[%s612 + $0x8] sm:$0xff]
  %v615 = vld [vmem:[%s612 + $0x10] sm:$0xff]
  %v616 = vld [vmem:[%s612 + $0x18] sm:$0xff]
  %617 = vmatprep.subr.mxu0 %v367
  %618 = vmatpush1.msra.mxu0 %v366
  %619 = vmatprep.subr.mxu0 %v371
  %620 = vmatpush1.msra.mxu0 %v370
  %621 = vmatprep.subr.mxu0 %v375
  %622 = vmatpush1.msra.mxu0 %v374
  %623 = vmatprep.subr.mxu0 %v379
  %624 = vmatpush1.msra.mxu0 %v378
  %625 = vmatprep.subr.mxu0 %v383
  %626 = vmatpush1.msra.mxu0 %v382
  %627 = vmatprep.subr.mxu0 %v387
  %628 = vmatpush1.msra.mxu0 %v386
  %629 = vmatprep.subr.mxu0 %v391
  %630 = vmatpush1.msra.mxu0 %v390
  %631 = vmatprep.subr.mxu0 %v395
  %632 = vmatpush1.msra.mxu0 %v394
  %633 = vmatprep.subr.mxu0 %v399
  %634 = vmatpush1.msra.mxu0 %v398
  %635 = vmatprep.subr.mxu0 %v403
  %636 = vmatpush1.msra.mxu0 %v402
  %637 = vmatprep.subr.mxu0 %v407
  %638 = vmatpush1.msra.mxu0 %v406
  %639 = vmatprep.subr.mxu0 %v411
  %640 = vmatpush1.msra.mxu0 %v410
  %641 = vmatprep.subr.mxu0 %v415
  %642 = vmatpush1.msra.mxu0 %v414
  %643 = vmatprep.subr.mxu0 %v419
  %644 = vmatpush1.msra.mxu0 %v418
  %645 = vmatprep.subr.mxu0 %v423
  %646 = vmatpush1.msra.mxu0 %v422
  %647 = vmatprep.subr.mxu0 %v427
  %648 = vmatpush1.msra.mxu0 %v426
  %649 = vmatprep.subr.mxu0 0.0
  %650 = vmatpush1.msra.mxu0 0.0
  %651 = vmatprep.subr.mxu0 0.0
  %652 = vmatpush1.msra.mxu0 0.0
  %653 = vmatprep.subr.mxu0 0.0
  %654 = vmatpush1.msra.mxu0 0.0
  %655 = vmatprep.subr.mxu0 0.0
  %656 = vmatpush1.msra.mxu0 0.0
  %657 = vmatprep.subr.mxu0 0.0
  %658 = vmatpush1.msra.mxu0 0.0
  %659 = vmatprep.subr.mxu0 0.0
  %660 = vmatpush1.msra.mxu0 0.0
  %661 = vmatprep.subr.mxu0 0.0
  %662 = vmatpush1.msra.mxu0 0.0
  %663 = vmatprep.subr.mxu0 0.0
  %664 = vmatpush1.msra.mxu0 0.0
  %665 = vmatprep.subr.mxu0 0.0
  %666 = vmatpush1.msra.mxu0 0.0
  %667 = vmatprep.subr.mxu0 0.0
  %668 = vmatpush1.msra.mxu0 0.0
  %669 = vmatprep.subr.mxu0 0.0
  %670 = vmatpush1.msra.mxu0 0.0
  %671 = vmatprep.subr.mxu0 0.0
  %672 = vmatpush1.msra.mxu0 0.0
  %673 = vmatprep.subr.mxu0 0.0
  %674 = vmatpush1.msra.mxu0 0.0
  %675 = vmatprep.subr.mxu0 0.0
  %676 = vmatpush1.msra.mxu0 0.0
  %677 = vmatprep.subr.mxu0 0.0
  %678 = vmatpush1.msra.mxu0 0.0
  %679 = vmatprep.subr.mxu0 0.0
  %680 = vmatpush1.msra.mxu0 0.0
  %681 = vmatprep.mubr.f32.mxu0 0.0
  %682 = vmatmul.mubr.f32.gmra.mrb[0].mxu0 %v608
  %v683 = vpop.f32.mrb[0].mxu0
  %v684 = vadd.f32 0.0, %v683
  %v685 = vpop.f32.mrb[0].mxu0
  %v686 = vadd.f32 0.0, %v685
  %687 = vdwg.mxu0
  %688 = vmatprep.subr.mxu0 %v369
  %689 = vmatpush1.msra.mxu0 %v368
  %690 = vmatprep.subr.mxu0 %v373
  %691 = vmatpush1.msra.mxu0 %v372
  %692 = vmatprep.subr.mxu0 %v377
  %693 = vmatpush1.msra.mxu0 %v376
  %694 = vmatprep.subr.mxu0 %v381
  %695 = vmatpush1.msra.mxu0 %v380
  %696 = vmatprep.subr.mxu0 %v385
  %697 = vmatpush1.msra.mxu0 %v384
  %698 = vmatprep.subr.mxu0 %v389
  %699 = vmatpush1.msra.mxu0 %v388
  %700 = vmatprep.subr.mxu0 %v393
  %701 = vmatpush1.msra.mxu0 %v392
  %702 = vmatprep.subr.mxu0 %v397
  %703 = vmatpush1.msra.mxu0 %v396
  %704 = vmatprep.subr.mxu0 %v401
  %705 = vmatpush1.msra.mxu0 %v400
  %706 = vmatprep.subr.mxu0 %v405
  %707 = vmatpush1.msra.mxu0 %v404
  %708 = vmatprep.subr.mxu0 %v409
  %709 = vmatpush1.msra.mxu0 %v408
  %710 = vmatprep.subr.mxu0 %v413
  %711 = vmatpush1.msra.mxu0 %v412
  %712 = vmatprep.subr.mxu0 %v417
  %713 = vmatpush1.msra.mxu0 %v416
  %714 = vmatprep.subr.mxu0 %v421
  %715 = vmatpush1.msra.mxu0 %v420
  %716 = vmatprep.subr.mxu0 %v425
  %717 = vmatpush1.msra.mxu0 %v424
  %718 = vmatprep.subr.mxu0 %v429
  %719 = vmatpush1.msra.mxu0 %v428
  %720 = vmatprep.subr.mxu0 0.0
  %721 = vmatpush1.msra.mxu0 0.0
  %722 = vmatprep.subr.mxu0 0.0
  %723 = vmatpush1.msra.mxu0 0.0
  %724 = vmatprep.subr.mxu0 0.0
  %725 = vmatpush1.msra.mxu0 0.0
  %726 = vmatprep.subr.mxu0 0.0
  %727 = vmatpush1.msra.mxu0 0.0
  %728 = vmatprep.subr.mxu0 0.0
  %729 = vmatpush1.msra.mxu0 0.0
  %730 = vmatprep.subr.mxu0 0.0
  %731 = vmatpush1.msra.mxu0 0.0
  %732 = vmatprep.subr.mxu0 0.0
  %733 = vmatpush1.msra.mxu0 0.0
  %734 = vmatprep.subr.mxu0 0.0
  %735 = vmatpush1.msra.mxu0 0.0
  %736 = vmatprep.subr.mxu0 0.0
  %737 = vmatpush1.msra.mxu0 0.0
  %738 = vmatprep.subr.mxu0 0.0
  %739 = vmatpush1.msra.mxu0 0.0
  %740 = vmatprep.subr.mxu0 0.0
  %741 = vmatpush1.msra.mxu0 0.0
  %742 = vmatprep.subr.mxu0 0.0
  %743 = vmatpush1.msra.mxu0 0.0
  %744 = vmatprep.subr.mxu0 0.0
  %745 = vmatpush1.msra.mxu0 0.0
  %746 = vmatprep.subr.mxu0 0.0
  %747 = vmatpush1.msra.mxu0 0.0
  %748 = vmatprep.subr.mxu0 0.0
  %749 = vmatpush1.msra.mxu0 0.0
  %750 = vmatprep.subr.mxu0 0.0
  %751 = vmatpush1.msra.mxu0 0.0
  %752 = vmatprep.mubr.f32.mxu0 0.0
  %753 = vmatmul.mubr.f32.gmra.mrb[0].mxu0 %v608
  %v754 = vpop.f32.mrb[0].mxu0
  %v755 = vadd.f32 0.0, %v754
  %v756 = vpop.f32.mrb[0].mxu0
  %v757 = vadd.f32 0.0, %v756
  %758 = vdwg.mxu0
  %v759 = vadd.f32 %v613, %v684
  %v760 = vadd.f32 %v614, %v686
  %v761 = vadd.f32 %v615, %v755
  %v762 = vadd.f32 %v616, %v757
  %v763 = vxor.u32 %v759, 2147483648
  %v764 = vmul.f32 %v763, 1.442695
  %v765 = vpow.pop %v764
  %v766 = vadd.f32 %v765, 1.0
  %v767 = vrcp.pop %v766
  %v768 = vmul.f32 1.0, %v767
  %v769 = vxor.u32 %v760, 2147483648
  %v770 = vmul.f32 %v769, 1.442695
  %v771 = vpow.pop %v770
  %v772 = vadd.f32 %v771, 1.0
  %v773 = vrcp.pop %v772
  %v774 = vmul.f32 1.0, %v773
  %v775 = vtanh.pop %v761
  %v776 = vxor.u32 %v762, 2147483648
  %v777 = vmul.f32 %v776, 1.442695
  %v778 = vpow.pop %v777
  %v779 = vadd.f32 %v778, 1.0
  %v780 = vrcp.pop %v779
  %v781 = vmul.f32 1.0, %v780
  %v782 = vmul.f32 %v774, %v606
  %v783 = vmul.f32 %v768, %v775
  %v784 = vadd.f32 %v782, %v783
  %v785 = vtanh.pop %v784
  %v786 = vmul.f32 %v781, %v785
  %s787 = scalar_lea.vmem [#allocation3], 8
  %788 = vst [vmem:[%s787] sm:$0xff] %v786
  %s789 = smul.u32 2, 4
  %s790 = smul.addr %s789, 8
  %s791 = scalar_lea.vmem [#allocation2], %s790
  %v792 = vld [vmem:[%s791] sm:$0xff]
  %v793 = vld [vmem:[%s791 + $0x8] sm:$0xff]
  %v794 = vld [vmem:[%s791 + $0x10] sm:$0xff]
  %v795 = vld [vmem:[%s791 + $0x18] sm:$0xff]
  %796 = vmatprep.subr.mxu0 %v367
  %797 = vmatpush1.msra.mxu0 %v366
  %798 = vmatprep.subr.mxu0 %v371
  %799 = vmatpush1.msra.mxu0 %v370
  %800 = vmatprep.subr.mxu0 %v375
  %801 = vmatpush1.msra.mxu0 %v374
  %802 = vmatprep.subr.mxu0 %v379
  %803 = vmatpush1.msra.mxu0 %v378
  %804 = vmatprep.subr.mxu0 %v383
  %805 = vmatpush1.msra.mxu0 %v382
  %806 = vmatprep.subr.mxu0 %v387
  %807 = vmatpush1.msra.mxu0 %v386
  %808 = vmatprep.subr.mxu0 %v391
  %809 = vmatpush1.msra.mxu0 %v390
  %810 = vmatprep.subr.mxu0 %v395
  %811 = vmatpush1.msra.mxu0 %v394
  %812 = vmatprep.subr.mxu0 %v399
  %813 = vmatpush1.msra.mxu0 %v398
  %814 = vmatprep.subr.mxu0 %v403
  %815 = vmatpush1.msra.mxu0 %v402
  %816 = vmatprep.subr.mxu0 %v407
  %817 = vmatpush1.msra.mxu0 %v406
  %818 = vmatprep.subr.mxu0 %v411
  %819 = vmatpush1.msra.mxu0 %v410
  %820 = vmatprep.subr.mxu0 %v415
  %821 = vmatpush1.msra.mxu0 %v414
  %822 = vmatprep.subr.mxu0 %v419
  %823 = vmatpush1.msra.mxu0 %v418
  %824 = vmatprep.subr.mxu0 %v423
  %825 = vmatpush1.msra.mxu0 %v422
  %826 = vmatprep.subr.mxu0 %v427
  %827 = vmatpush1.msra.mxu0 %v426
  %828 = vmatprep.subr.mxu0 0.0
  %829 = vmatpush1.msra.mxu0 0.0
  %830 = vmatprep.subr.mxu0 0.0
  %831 = vmatpush1.msra.mxu0 0.0
  %832 = vmatprep.subr.mxu0 0.0
  %833 = vmatpush1.msra.mxu0 0.0
  %834 = vmatprep.subr.mxu0 0.0
  %835 = vmatpush1.msra.mxu0 0.0
  %836 = vmatprep.subr.mxu0 0.0
  %837 = vmatpush1.msra.mxu0 0.0
  %838 = vmatprep.subr.mxu0 0.0
  %839 = vmatpush1.msra.mxu0 0.0
  %840 = vmatprep.subr.mxu0 0.0
  %841 = vmatpush1.msra.mxu0 0.0
  %842 = vmatprep.subr.mxu0 0.0
  %843 = vmatpush1.msra.mxu0 0.0
  %844 = vmatprep.subr.mxu0 0.0
  %845 = vmatpush1.msra.mxu0 0.0
  %846 = vmatprep.subr.mxu0 0.0
  %847 = vmatpush1.msra.mxu0 0.0
  %848 = vmatprep.subr.mxu0 0.0
  %849 = vmatpush1.msra.mxu0 0.0
  %850 = vmatprep.subr.mxu0 0.0
  %851 = vmatpush1.msra.mxu0 0.0
  %852 = vmatprep.subr.mxu0 0.0
  %853 = vmatpush1.msra.mxu0 0.0
  %854 = vmatprep.subr.mxu0 0.0
  %855 = vmatpush1.msra.mxu0 0.0
  %856 = vmatprep.subr.mxu0 0.0
  %857 = vmatpush1.msra.mxu0 0.0
  %858 = vmatprep.subr.mxu0 0.0
  %859 = vmatpush1.msra.mxu0 0.0
  %860 = vmatprep.mubr.f32.mxu0 0.0
  %861 = vmatmul.mubr.f32.gmra.mrb[0].mxu0 %v786
  %v862 = vpop.f32.mrb[0].mxu0
  %v863 = vadd.f32 0.0, %v862
  %v864 = vpop.f32.mrb[0].mxu0
  %v865 = vadd.f32 0.0, %v864
  %866 = vdwg.mxu0
  %867 = vmatprep.subr.mxu0 %v369
  %868 = vmatpush1.msra.mxu0 %v368
  %869 = vmatprep.subr.mxu0 %v373
  %870 = vmatpush1.msra.mxu0 %v372
  %871 = vmatprep.subr.mxu0 %v377
  %872 = vmatpush1.msra.mxu0 %v376
  %873 = vmatprep.subr.mxu0 %v381
  %874 = vmatpush1.msra.mxu0 %v380
  %875 = vmatprep.subr.mxu0 %v385
  %876 = vmatpush1.msra.mxu0 %v384
  %877 = vmatprep.subr.mxu0 %v389
  %878 = vmatpush1.msra.mxu0 %v388
  %879 = vmatprep.subr.mxu0 %v393
  %880 = vmatpush1.msra.mxu0 %v392
  %881 = vmatprep.subr.mxu0 %v397
  %882 = vmatpush1.msra.mxu0 %v396
  %883 = vmatprep.subr.mxu0 %v401
  %884 = vmatpush1.msra.mxu0 %v400
  %885 = vmatprep.subr.mxu0 %v405
  %886 = vmatpush1.msra.mxu0 %v404
  %887 = vmatprep.subr.mxu0 %v409
  %888 = vmatpush1.msra.mxu0 %v408
  %889 = vmatprep.subr.mxu0 %v413
  %890 = vmatpush1.msra.mxu0 %v412
  %891 = vmatprep.subr.mxu0 %v417
  %892 = vmatpush1.msra.mxu0 %v416
  %893 = vmatprep.subr.mxu0 %v421
  %894 = vmatpush1.msra.mxu0 %v420
  %895 = vmatprep.subr.mxu0 %v425
  %896 = vmatpush1.msra.mxu0 %v424
  %897 = vmatprep.subr.mxu0 %v429
  %898 = vmatpush1.msra.mxu0 %v428
  %899 = vmatprep.subr.mxu0 0.0
  %900 = vmatpush1.msra.mxu0 0.0
  %901 = vmatprep.subr.mxu0 0.0
  %902 = vmatpush1.msra.mxu0 0.0
  %903 = vmatprep.subr.mxu0 0.0
  %904 = vmatpush1.msra.mxu0 0.0
  %905 = vmatprep.subr.mxu0 0.0
  %906 = vmatpush1.msra.mxu0 0.0
  %907 = vmatprep.subr.mxu0 0.0
  %908 = vmatpush1.msra.mxu0 0.0
  %909 = vmatprep.subr.mxu0 0.0
  %910 = vmatpush1.msra.mxu0 0.0
  %911 = vmatprep.subr.mxu0 0.0
  %912 = vmatpush1.msra.mxu0 0.0
  %913 = vmatprep.subr.mxu0 0.0
  %914 = vmatpush1.msra.mxu0 0.0
  %915 = vmatprep.subr.mxu0 0.0
  %916 = vmatpush1.msra.mxu0 0.0
  %917 = vmatprep.subr.mxu0 0.0
  %918 = vmatpush1.msra.mxu0 0.0
  %919 = vmatprep.subr.mxu0 0.0
  %920 = vmatpush1.msra.mxu0 0.0
  %921 = vmatprep.subr.mxu0 0.0
  %922 = vmatpush1.msra.mxu0 0.0
  %923 = vmatprep.subr.mxu0 0.0
  %924 = vmatpush1.msra.mxu0 0.0
  %925 = vmatprep.subr.mxu0 0.0
  %926 = vmatpush1.msra.mxu0 0.0
  %927 = vmatprep.subr.mxu0 0.0
  %928 = vmatpush1.msra.mxu0 0.0
  %929 = vmatprep.subr.mxu0 0.0
  %930 = vmatpush1.msra.mxu0 0.0
  %931 = vmatprep.mubr.f32.mxu0 0.0
  %932 = vmatmul.mubr.f32.gmra.mrb[0].mxu0 %v786
  %v933 = vpop.f32.mrb[0].mxu0
  %v934 = vadd.f32 0.0, %v933
  %v935 = vpop.f32.mrb[0].mxu0
  %v936 = vadd.f32 0.0, %v935
  %937 = vdwg.mxu0
  %v938 = vadd.f32 %v792, %v863
  %v939 = vadd.f32 %v793, %v865
  %v940 = vadd.f32 %v794, %v934
  %v941 = vadd.f32 %v795, %v936
  %v942 = vxor.u32 %v938, 2147483648
  %v943 = vmul.f32 %v942, 1.442695
  %v944 = vpow.pop %v943
  %v945 = vadd.f32 %v944, 1.0
  %v946 = vrcp.pop %v945
  %v947 = vmul.f32 1.0, %v946
  %v948 = vxor.u32 %v939, 2147483648
  %v949 = vmul.f32 %v948, 1.442695
  %v950 = vpow.pop %v949
  %v951 = vadd.f32 %v950, 1.0
  %v952 = vrcp.pop %v951
  %v953 = vmul.f32 1.0, %v952
  %v954 = vtanh.pop %v940
  %v955 = vxor.u32 %v941, 2147483648
  %v956 = vmul.f32 %v955, 1.442695
  %v957 = vpow.pop %v956
  %v958 = vadd.f32 %v957, 1.0
  %v959 = vrcp.pop %v958
  %v960 = vmul.f32 1.0, %v959
  %v961 = vmul.f32 %v953, %v784
  %v962 = vmul.f32 %v947, %v954
  %v963 = vadd.f32 %v961, %v962
  %v964 = vtanh.pop %v963
  %v965 = vmul.f32 %v960, %v964
  %s966 = scalar_lea.vmem [#allocation3], 16
  %967 = vst [vmem:[%s966] sm:$0xff] %v965
  %s968 = smul.u32 3, 4
  %s969 = smul.addr %s968, 8
  %s970 = scalar_lea.vmem [#allocation2], %s969
  %v971 = vld [vmem:[%s970] sm:$0xff]
  %v972 = vld [vmem:[%s970 + $0x8] sm:$0xff]
  %v973 = vld [vmem:[%s970 + $0x10] sm:$0xff]
  %v974 = vld [vmem:[%s970 + $0x18] sm:$0xff]
  %975 = vmatprep.subr.mxu0 %v367
  %976 = vmatpush1.msra.mxu0 %v366
  %977 = vmatprep.subr.mxu0 %v371
  %978 = vmatpush1.msra.mxu0 %v370
  %979 = vmatprep.subr.mxu0 %v375
  %980 = vmatpush1.msra.mxu0 %v374
  %981 = vmatprep.subr.mxu0 %v379
  %982 = vmatpush1.msra.mxu0 %v378
  %983 = vmatprep.subr.mxu0 %v383
  %984 = vmatpush1.msra.mxu0 %v382
  %985 = vmatprep.subr.mxu0 %v387
  %986 = vmatpush1.msra.mxu0 %v386
  %987 = vmatprep.subr.mxu0 %v391
  %988 = vmatpush1.msra.mxu0 %v390
  %989 = vmatprep.subr.mxu0 %v395
  %990 = vmatpush1.msra.mxu0 %v394
  %991 = vmatprep.subr.mxu0 %v399
  %992 = vmatpush1.msra.mxu0 %v398
  %993 = vmatprep.subr.mxu0 %v403
  %994 = vmatpush1.msra.mxu0 %v402
  %995 = vmatprep.subr.mxu0 %v407
  %996 = vmatpush1.msra.mxu0 %v406
  %997 = vmatprep.subr.mxu0 %v411
  %998 = vmatpush1.msra.mxu0 %v410
  %999 = vmatprep.subr.mxu0 %v415
  %1000 = vmatpush1.msra.mxu0 %v414
  %1001 = vmatprep.subr.mxu0 %v419
  %1002 = vmatpush1.msra.mxu0 %v418
  %1003 = vmatprep.subr.mxu0 %v423
  %1004 = vmatpush1.msra.mxu0 %v422
  %1005 = vmatprep.subr.mxu0 %v427
  %1006 = vmatpush1.msra.mxu0 %v426
  %1007 = vmatprep.subr.mxu0 0.0
  %1008 = vmatpush1.msra.mxu0 0.0
  %1009 = vmatprep.subr.mxu0 0.0
  %1010 = vmatpush1.msra.mxu0 0.0
  %1011 = vmatprep.subr.mxu0 0.0
  %1012 = vmatpush1.msra.mxu0 0.0
  %1013 = vmatprep.subr.mxu0 0.0
  %1014 = vmatpush1.msra.mxu0 0.0
  %1015 = vmatprep.subr.mxu0 0.0
  %1016 = vmatpush1.msra.mxu0 0.0
  %1017 = vmatprep.subr.mxu0 0.0
  %1018 = vmatpush1.msra.mxu0 0.0
  %1019 = vmatprep.subr.mxu0 0.0
  %1020 = vmatpush1.msra.mxu0 0.0
  %1021 = vmatprep.subr.mxu0 0.0
  %1022 = vmatpush1.msra.mxu0 0.0
  %1023 = vmatprep.subr.mxu0 0.0
  %1024 = vmatpush1.msra.mxu0 0.0
  %1025 = vmatprep.subr.mxu0 0.0
  %1026 = vmatpush1.msra.mxu0 0.0
  %1027 = vmatprep.subr.mxu0 0.0
  %1028 = vmatpush1.msra.mxu0 0.0
  %1029 = vmatprep.subr.mxu0 0.0
  %1030 = vmatpush1.msra.mxu0 0.0
  %1031 = vmatprep.subr.mxu0 0.0
  %1032 = vmatpush1.msra.mxu0 0.0
  %1033 = vmatprep.subr.mxu0 0.0
  %1034 = vmatpush1.msra.mxu0 0.0
  %1035 = vmatprep.subr.mxu0 0.0
  %1036 = vmatpush1.msra.mxu0 0.0
  %1037 = vmatprep.subr.mxu0 0.0
  %1038 = vmatpush1.msra.mxu0 0.0
  %1039 = vmatprep.mubr.f32.mxu0 0.0
  %1040 = vmatmul.mubr.f32.gmra.mrb[0].mxu0 %v965
  %v1041 = vpop.f32.mrb[0].mxu0
  %v1042 = vadd.f32 0.0, %v1041
  %v1043 = vpop.f32.mrb[0].mxu0
  %v1044 = vadd.f32 0.0, %v1043
  %1045 = vdwg.mxu0
  %1046 = vmatprep.subr.mxu0 %v369
  %1047 = vmatpush1.msra.mxu0 %v368
  %1048 = vmatprep.subr.mxu0 %v373
  %1049 = vmatpush1.msra.mxu0 %v372
  %1050 = vmatprep.subr.mxu0 %v377
  %1051 = vmatpush1.msra.mxu0 %v376
  %1052 = vmatprep.subr.mxu0 %v381
  %1053 = vmatpush1.msra.mxu0 %v380
  %1054 = vmatprep.subr.mxu0 %v385
  %1055 = vmatpush1.msra.mxu0 %v384
  %1056 = vmatprep.subr.mxu0 %v389
  %1057 = vmatpush1.msra.mxu0 %v388
  %1058 = vmatprep.subr.mxu0 %v393
  %1059 = vmatpush1.msra.mxu0 %v392
  %1060 = vmatprep.subr.mxu0 %v397
  %1061 = vmatpush1.msra.mxu0 %v396
  %1062 = vmatprep.subr.mxu0 %v401
  %1063 = vmatpush1.msra.mxu0 %v400
  %1064 = vmatprep.subr.mxu0 %v405
  %1065 = vmatpush1.msra.mxu0 %v404
  %1066 = vmatprep.subr.mxu0 %v409
  %1067 = vmatpush1.msra.mxu0 %v408
  %1068 = vmatprep.subr.mxu0 %v413
  %1069 = vmatpush1.msra.mxu0 %v412
  %1070 = vmatprep.subr.mxu0 %v417
  %1071 = vmatpush1.msra.mxu0 %v416
  %1072 = vmatprep.subr.mxu0 %v421
  %1073 = vmatpush1.msra.mxu0 %v420
  %1074 = vmatprep.subr.mxu0 %v425
  %1075 = vmatpush1.msra.mxu0 %v424
  %1076 = vmatprep.subr.mxu0 %v429
  %1077 = vmatpush1.msra.mxu0 %v428
  %1078 = vmatprep.subr.mxu0 0.0
  %1079 = vmatpush1.msra.mxu0 0.0
  %1080 = vmatprep.subr.mxu0 0.0
  %1081 = vmatpush1.msra.mxu0 0.0
  %1082 = vmatprep.subr.mxu0 0.0
  %1083 = vmatpush1.msra.mxu0 0.0
  %1084 = vmatprep.subr.mxu0 0.0
  %1085 = vmatpush1.msra.mxu0 0.0
  %1086 = vmatprep.subr.mxu0 0.0
  %1087 = vmatpush1.msra.mxu0 0.0
  %1088 = vmatprep.subr.mxu0 0.0
  %1089 = vmatpush1.msra.mxu0 0.0
  %1090 = vmatprep.subr.mxu0 0.0
  %1091 = vmatpush1.msra.mxu0 0.0
  %1092 = vmatprep.subr.mxu0 0.0
  %1093 = vmatpush1.msra.mxu0 0.0
  %1094 = vmatprep.subr.mxu0 0.0
  %1095 = vmatpush1.msra.mxu0 0.0
  %1096 = vmatprep.subr.mxu0 0.0
  %1097 = vmatpush1.msra.mxu0 0.0
  %1098 = vmatprep.subr.mxu0 0.0
  %1099 = vmatpush1.msra.mxu0 0.0
  %1100 = vmatprep.subr.mxu0 0.0
  %1101 = vmatpush1.msra.mxu0 0.0
  %1102 = vmatprep.subr.mxu0 0.0
  %1103 = vmatpush1.msra.mxu0 0.0
  %1104 = vmatprep.subr.mxu0 0.0
  %1105 = vmatpush1.msra.mxu0 0.0
  %1106 = vmatprep.subr.mxu0 0.0
  %1107 = vmatpush1.msra.mxu0 0.0
  %1108 = vmatprep.subr.mxu0 0.0
  %1109 = vmatpush1.msra.mxu0 0.0
  %1110 = vmatprep.mubr.f32.mxu0 0.0
  %1111 = vmatmul.mubr.f32.gmra.mrb[0].mxu0 %v965
  %v1112 = vpop.f32.mrb[0].mxu0
  %v1113 = vadd.f32 0.0, %v1112
  %v1114 = vpop.f32.mrb[0].mxu0
  %v1115 = vadd.f32 0.0, %v1114
  %1116 = vdwg.mxu0
  %v1117 = vadd.f32 %v971, %v1042
  %v1118 = vadd.f32 %v972, %v1044
  %v1119 = vadd.f32 %v973, %v1113
  %v1120 = vadd.f32 %v974, %v1115
  %v1121 = vxor.u32 %v1117, 2147483648
  %v1122 = vmul.f32 %v1121, 1.442695
  %v1123 = vpow.pop %v1122
  %v1124 = vadd.f32 %v1123, 1.0
  %v1125 = vrcp.pop %v1124
  %v1126 = vmul.f32 1.0, %v1125
  %v1127 = vxor.u32 %v1118, 2147483648
  %v1128 = vmul.f32 %v1127, 1.442695
  %v1129 = vpow.pop %v1128
  %v1130 = vadd.f32 %v1129, 1.0
  %v1131 = vrcp.pop %v1130
  %v1132 = vmul.f32 1.0, %v1131
  %v1133 = vtanh.pop %v1119
  %v1134 = vxor.u32 %v1120, 2147483648
  %v1135 = vmul.f32 %v1134, 1.442695
  %v1136 = vpow.pop %v1135
  %v1137 = vadd.f32 %v1136, 1.0
  %v1138 = vrcp.pop %v1137
  %v1139 = vmul.f32 1.0, %v1138
  %v1140 = vmul.f32 %v1132, %v963
  %v1141 = vmul.f32 %v1126, %v1133
  %v1142 = vadd.f32 %v1140, %v1141
  %v1143 = vtanh.pop %v1142
  %v1144 = vmul.f32 %v1139, %v1143
  %s1145 = scalar_lea.vmem [#allocation3], 24
  %1146 = vst [vmem:[%s1145] sm:$0xff] %v1144
  %s1147 = smul.u32 4, 4
  %s1148 = smul.addr %s1147, 8
  %s1149 = scalar_lea.vmem [#allocation2], %s1148
  %v1150 = vld [vmem:[%s1149] sm:$0xff]
  %v1151 = vld [vmem:[%s1149 + $0x8] sm:$0xff]
  %v1152 = vld [vmem:[%s1149 + $0x10] sm:$0xff]
  %v1153 = vld [vmem:[%s1149 + $0x18] sm:$0xff]
  %1154 = vmatprep.subr.mxu0 %v367
  %1155 = vmatpush1.msra.mxu0 %v366
  %1156 = vmatprep.subr.mxu0 %v371
  %1157 = vmatpush1.msra.mxu0 %v370
  %1158 = vmatprep.subr.mxu0 %v375
  %1159 = vmatpush1.msra.mxu0 %v374
  %1160 = vmatprep.subr.mxu0 %v379
  %1161 = vmatpush1.msra.mxu0 %v378
  %1162 = vmatprep.subr.mxu0 %v383
  %1163 = vmatpush1.msra.mxu0 %v382
  %1164 = vmatprep.subr.mxu0 %v387
  %1165 = vmatpush1.msra.mxu0 %v386
  %1166 = vmatprep.subr.mxu0 %v391
  %1167 = vmatpush1.msra.mxu0 %v390
  %1168 = vmatprep.subr.mxu0 %v395
  %1169 = vmatpush1.msra.mxu0 %v394
  %1170 = vmatprep.subr.mxu0 %v399
  %1171 = vmatpush1.msra.mxu0 %v398
  %1172 = vmatprep.subr.mxu0 %v403
  %1173 = vmatpush1.msra.mxu0 %v402
  %1174 = vmatprep.subr.mxu0 %v407
  %1175 = vmatpush1.msra.mxu0 %v406
  %1176 = vmatprep.subr.mxu0 %v411
  %1177 = vmatpush1.msra.mxu0 %v410
  %1178 = vmatprep.subr.mxu0 %v415
  %1179 = vmatpush1.msra.mxu0 %v414
  %1180 = vmatprep.subr.mxu0 %v419
  %1181 = vmatpush1.msra.mxu0 %v418
  %1182 = vmatprep.subr.mxu0 %v423
  %1183 = vmatpush1.msra.mxu0 %v422
  %1184 = vmatprep.subr.mxu0 %v427
  %1185 = vmatpush1.msra.mxu0 %v426
  %1186 = vmatprep.subr.mxu0 0.0
  %1187 = vmatpush1.msra.mxu0 0.0
  %1188 = vmatprep.subr.mxu0 0.0
  %1189 = vmatpush1.msra.mxu0 0.0
  %1190 = vmatprep.subr.mxu0 0.0
  %1191 = vmatpush1.msra.mxu0 0.0
  %1192 = vmatprep.subr.mxu0 0.0
  %1193 = vmatpush1.msra.mxu0 0.0
  %1194 = vmatprep.subr.mxu0 0.0
  %1195 = vmatpush1.msra.mxu0 0.0
  %1196 = vmatprep.subr.mxu0 0.0
  %1197 = vmatpush1.msra.mxu0 0.0
  %1198 = vmatprep.subr.mxu0 0.0
  %1199 = vmatpush1.msra.mxu0 0.0
  %1200 = vmatprep.subr.mxu0 0.0
  %1201 = vmatpush1.msra.mxu0 0.0
  %1202 = vmatprep.subr.mxu0 0.0
  %1203 = vmatpush1.msra.mxu0 0.0
  %1204 = vmatprep.subr.mxu0 0.0
  %1205 = vmatpush1.msra.mxu0 0.0
  %1206 = vmatprep.subr.mxu0 0.0
  %1207 = vmatpush1.msra.mxu0 0.0
  %1208 = vmatprep.subr.mxu0 0.0
  %1209 = vmatpush1.msra.mxu0 0.0
  %1210 = vmatprep.subr.mxu0 0.0
  %1211 = vmatpush1.msra.mxu0 0.0
  %1212 = vmatprep.subr.mxu0 0.0
  %1213 = vmatpush1.msra.mxu0 0.0
  %1214 = vmatprep.subr.mxu0 0.0
  %1215 = vmatpush1.msra.mxu0 0.0
  %1216 = vmatprep.subr.mxu0 0.0
  %1217 = vmatpush1.msra.mxu0 0.0
  %1218 = vmatprep.mubr.f32.mxu0 0.0
  %1219 = vmatmul.mubr.f32.gmra.mrb[0].mxu0 %v1144
  %v1220 = vpop.f32.mrb[0].mxu0
  %v1221 = vadd.f32 0.0, %v1220
  %v1222 = vpop.f32.mrb[0].mxu0
  %v1223 = vadd.f32 0.0, %v1222
  %1224 = vdwg.mxu0
  %1225 = vmatprep.subr.mxu0 %v369
  %1226 = vmatpush1.msra.mxu0 %v368
  %1227 = vmatprep.subr.mxu0 %v373
  %1228 = vmatpush1.msra.mxu0 %v372
  %1229 = vmatprep.subr.mxu0 %v377
  %1230 = vmatpush1.msra.mxu0 %v376
  %1231 = vmatprep.subr.mxu0 %v381
  %1232 = vmatpush1.msra.mxu0 %v380
  %1233 = vmatprep.subr.mxu0 %v385
  %1234 = vmatpush1.msra.mxu0 %v384
  %1235 = vmatprep.subr.mxu0 %v389
  %1236 = vmatpush1.msra.mxu0 %v388
  %1237 = vmatprep.subr.mxu0 %v393
  %1238 = vmatpush1.msra.mxu0 %v392
  %1239 = vmatprep.subr.mxu0 %v397
  %1240 = vmatpush1.msra.mxu0 %v396
  %1241 = vmatprep.subr.mxu0 %v401
  %1242 = vmatpush1.msra.mxu0 %v400
  %1243 = vmatprep.subr.mxu0 %v405
  %1244 = vmatpush1.msra.mxu0 %v404
  %1245 = vmatprep.subr.mxu0 %v409
  %1246 = vmatpush1.msra.mxu0 %v408
  %1247 = vmatprep.subr.mxu0 %v413
  %1248 = vmatpush1.msra.mxu0 %v412
  %1249 = vmatprep.subr.mxu0 %v417
  %1250 = vmatpush1.msra.mxu0 %v416
  %1251 = vmatprep.subr.mxu0 %v421
  %1252 = vmatpush1.msra.mxu0 %v420
  %1253 = vmatprep.subr.mxu0 %v425
  %1254 = vmatpush1.msra.mxu0 %v424
  %1255 = vmatprep.subr.mxu0 %v429
  %1256 = vmatpush1.msra.mxu0 %v428
  %1257 = vmatprep.subr.mxu0 0.0
  %1258 = vmatpush1.msra.mxu0 0.0
  %1259 = vmatprep.subr.mxu0 0.0
  %1260 = vmatpush1.msra.mxu0 0.0
  %1261 = vmatprep.subr.mxu0 0.0
  %1262 = vmatpush1.msra.mxu0 0.0
  %1263 = vmatprep.subr.mxu0 0.0
  %1264 = vmatpush1.msra.mxu0 0.0
  %1265 = vmatprep.subr.mxu0 0.0
  %1266 = vmatpush1.msra.mxu0 0.0
  %1267 = vmatprep.subr.mxu0 0.0
  %1268 = vmatpush1.msra.mxu0 0.0
  %1269 = vmatprep.subr.mxu0 0.0
  %1270 = vmatpush1.msra.mxu0 0.0
  %1271 = vmatprep.subr.mxu0 0.0
  %1272 = vmatpush1.msra.mxu0 0.0
  %1273 = vmatprep.subr.mxu0 0.0
  %1274 = vmatpush1.msra.mxu0 0.0
  %1275 = vmatprep.subr.mxu0 0.0
  %1276 = vmatpush1.msra.mxu0 0.0
  %1277 = vmatprep.subr.mxu0 0.0
  %1278 = vmatpush1.msra.mxu0 0.0
  %1279 = vmatprep.subr.mxu0 0.0
  %1280 = vmatpush1.msra.mxu0 0.0
  %1281 = vmatprep.subr.mxu0 0.0
  %1282 = vmatpush1.msra.mxu0 0.0
  %1283 = vmatprep.subr.mxu0 0.0
  %1284 = vmatpush1.msra.mxu0 0.0
  %1285 = vmatprep.subr.mxu0 0.0
  %1286 = vmatpush1.msra.mxu0 0.0
  %1287 = vmatprep.subr.mxu0 0.0
  %1288 = vmatpush1.msra.mxu0 0.0
  %1289 = vmatprep.mubr.f32.mxu0 0.0
  %1290 = vmatmul.mubr.f32.gmra.mrb[0].mxu0 %v1144
  %v1291 = vpop.f32.mrb[0].mxu0
  %v1292 = vadd.f32 0.0, %v1291
  %v1293 = vpop.f32.mrb[0].mxu0
  %v1294 = vadd.f32 0.0, %v1293
  %1295 = vdwg.mxu0
  %v1296 = vadd.f32 %v1150, %v1221
  %v1297 = vadd.f32 %v1151, %v1223
  %v1298 = vadd.f32 %v1152, %v1292
  %v1299 = vadd.f32 %v1153, %v1294
  %v1300 = vxor.u32 %v1296, 2147483648
  %v1301 = vmul.f32 %v1300, 1.442695
  %v1302 = vpow.pop %v1301
  %v1303 = vadd.f32 %v1302, 1.0
  %v1304 = vrcp.pop %v1303
  %v1305 = vmul.f32 1.0, %v1304
  %v1306 = vxor.u32 %v1297, 2147483648
  %v1307 = vmul.f32 %v1306, 1.442695
  %v1308 = vpow.pop %v1307
  %v1309 = vadd.f32 %v1308, 1.0
  %v1310 = vrcp.pop %v1309
  %v1311 = vmul.f32 1.0, %v1310
  %v1312 = vtanh.pop %v1298
  %v1313 = vxor.u32 %v1299, 2147483648
  %v1314 = vmul.f32 %v1313, 1.442695
  %v1315 = vpow.pop %v1314
  %v1316 = vadd.f32 %v1315, 1.0
  %v1317 = vrcp.pop %v1316
  %v1318 = vmul.f32 1.0, %v1317
  %v1319 = vmul.f32 %v1311, %v1142
  %v1320 = vmul.f32 %v1305, %v1312
  %v1321 = vadd.f32 %v1319, %v1320
  %v1322 = vtanh.pop %v1321
  %v1323 = vmul.f32 %v1318, %v1322
  %s1324 = scalar_lea.vmem [#allocation3], 32
  %1325 = vst [vmem:[%s1324] sm:$0xff] %v1323
  %s1326 = smul.u32 5, 4
  %s1327 = smul.addr %s1326, 8
  %s1328 = scalar_lea.vmem [#allocation2], %s1327
  %v1329 = vld [vmem:[%s1328] sm:$0xff]
  %v1330 = vld [vmem:[%s1328 + $0x8] sm:$0xff]
  %v1331 = vld [vmem:[%s1328 + $0x10] sm:$0xff]
  %v1332 = vld [vmem:[%s1328 + $0x18] sm:$0xff]
  %1333 = vmatprep.subr.mxu0 %v367
  %1334 = vmatpush1.msra.mxu0 %v366
  %1335 = vmatprep.subr.mxu0 %v371
  %1336 = vmatpush1.msra.mxu0 %v370
  %1337 = vmatprep.subr.mxu0 %v375
  %1338 = vmatpush1.msra.mxu0 %v374
  %1339 = vmatprep.subr.mxu0 %v379
  %1340 = vmatpush1.msra.mxu0 %v378
  %1341 = vmatprep.subr.mxu0 %v383
  %1342 = vmatpush1.msra.mxu0 %v382
  %1343 = vmatprep.subr.mxu0 %v387
  %1344 = vmatpush1.msra.mxu0 %v386
  %1345 = vmatprep.subr.mxu0 %v391
  %1346 = vmatpush1.msra.mxu0 %v390
  %1347 = vmatprep.subr.mxu0 %v395
  %1348 = vmatpush1.msra.mxu0 %v394
  %1349 = vmatprep.subr.mxu0 %v399
  %1350 = vmatpush1.msra.mxu0 %v398
  %1351 = vmatprep.subr.mxu0 %v403
  %1352 = vmatpush1.msra.mxu0 %v402
  %1353 = vmatprep.subr.mxu0 %v407
  %1354 = vmatpush1.msra.mxu0 %v406
  %1355 = vmatprep.subr.mxu0 %v411
  %1356 = vmatpush1.msra.mxu0 %v410
  %1357 = vmatprep.subr.mxu0 %v415
  %1358 = vmatpush1.msra.mxu0 %v414
  %1359 = vmatprep.subr.mxu0 %v419
  %1360 = vmatpush1.msra.mxu0 %v418
  %1361 = vmatprep.subr.mxu0 %v423
  %1362 = vmatpush1.msra.mxu0 %v422
  %1363 = vmatprep.subr.mxu0 %v427
  %1364 = vmatpush1.msra.mxu0 %v426
  %1365 = vmatprep.subr.mxu0 0.0
  %1366 = vmatpush1.msra.mxu0 0.0
  %1367 = vmatprep.subr.mxu0 0.0
  %1368 = vmatpush1.msra.mxu0 0.0
  %1369 = vmatprep.subr.mxu0 0.0
  %1370 = vmatpush1.msra.mxu0 0.0
  %1371 = vmatprep.subr.mxu0 0.0
  %1372 = vmatpush1.msra.mxu0 0.0
  %1373 = vmatprep.subr.mxu0 0.0
  %1374 = vmatpush1.msra.mxu0 0.0
  %1375 = vmatprep.subr.mxu0 0.0
  %1376 = vmatpush1.msra.mxu0 0.0
  %1377 = vmatprep.subr.mxu0 0.0
  %1378 = vmatpush1.msra.mxu0 0.0
  %1379 = vmatprep.subr.mxu0 0.0
  %1380 = vmatpush1.msra.mxu0 0.0
  %1381 = vmatprep.subr.mxu0 0.0
  %1382 = vmatpush1.msra.mxu0 0.0
  %1383 = vmatprep.subr.mxu0 0.0
  %1384 = vmatpush1.msra.mxu0 0.0
  %1385 = vmatprep.subr.mxu0 0.0
  %1386 = vmatpush1.msra.mxu0 0.0
  %1387 = vmatprep.subr.mxu0 0.0
  %1388 = vmatpush1.msra.mxu0 0.0
  %1389 = vmatprep.subr.mxu0 0.0
  %1390 = vmatpush1.msra.mxu0 0.0
  %1391 = vmatprep.subr.mxu0 0.0
  %1392 = vmatpush1.msra.mxu0 0.0
  %1393 = vmatprep.subr.mxu0 0.0
  %1394 = vmatpush1.msra.mxu0 0.0
  %1395 = vmatprep.subr.mxu0 0.0
  %1396 = vmatpush1.msra.mxu0 0.0
  %1397 = vmatprep.mubr.f32.mxu0 0.0
  %1398 = vmatmul.mubr.f32.gmra.mrb[0].mxu0 %v1323
  %v1399 = vpop.f32.mrb[0].mxu0
  %v1400 = vadd.f32 0.0, %v1399
  %v1401 = vpop.f32.mrb[0].mxu0
  %v1402 = vadd.f32 0.0, %v1401
  %1403 = vdwg.mxu0
  %1404 = vmatprep.subr.mxu0 %v369
  %1405 = vmatpush1.msra.mxu0 %v368
  %1406 = vmatprep.subr.mxu0 %v373
  %1407 = vmatpush1.msra.mxu0 %v372
  %1408 = vmatprep.subr.mxu0 %v377
  %1409 = vmatpush1.msra.mxu0 %v376
  %1410 = vmatprep.subr.mxu0 %v381
  %1411 = vmatpush1.msra.mxu0 %v380
  %1412 = vmatprep.subr.mxu0 %v385
  %1413 = vmatpush1.msra.mxu0 %v384
  %1414 = vmatprep.subr.mxu0 %v389
  %1415 = vmatpush1.msra.mxu0 %v388
  %1416 = vmatprep.subr.mxu0 %v393
  %1417 = vmatpush1.msra.mxu0 %v392
  %1418 = vmatprep.subr.mxu0 %v397
  %1419 = vmatpush1.msra.mxu0 %v396
  %1420 = vmatprep.subr.mxu0 %v401
  %1421 = vmatpush1.msra.mxu0 %v400
  %1422 = vmatprep.subr.mxu0 %v405
  %1423 = vmatpush1.msra.mxu0 %v404
  %1424 = vmatprep.subr.mxu0 %v409
  %1425 = vmatpush1.msra.mxu0 %v408
  %1426 = vmatprep.subr.mxu0 %v413
  %1427 = vmatpush1.msra.mxu0 %v412
  %1428 = vmatprep.subr.mxu0 %v417
  %1429 = vmatpush1.msra.mxu0 %v416
  %1430 = vmatprep.subr.mxu0 %v421
  %1431 = vmatpush1.msra.mxu0 %v420
  %1432 = vmatprep.subr.mxu0 %v425
  %1433 = vmatpush1.msra.mxu0 %v424
  %1434 = vmatprep.subr.mxu0 %v429
  %1435 = vmatpush1.msra.mxu0 %v428
  %1436 = vmatprep.subr.mxu0 0.0
  %1437 = vmatpush1.msra.mxu0 0.0
  %1438 = vmatprep.subr.mxu0 0.0
  %1439 = vmatpush1.msra.mxu0 0.0
  %1440 = vmatprep.subr.mxu0 0.0
  %1441 = vmatpush1.msra.mxu0 0.0
  %1442 = vmatprep.subr.mxu0 0.0
  %1443 = vmatpush1.msra.mxu0 0.0
  %1444 = vmatprep.subr.mxu0 0.0
  %1445 = vmatpush1.msra.mxu0 0.0
  %1446 = vmatprep.subr.mxu0 0.0
  %1447 = vmatpush1.msra.mxu0 0.0
  %1448 = vmatprep.subr.mxu0 0.0
  %1449 = vmatpush1.msra.mxu0 0.0
  %1450 = vmatprep.subr.mxu0 0.0
  %1451 = vmatpush1.msra.mxu0 0.0
  %1452 = vmatprep.subr.mxu0 0.0
  %1453 = vmatpush1.msra.mxu0 0.0
  %1454 = vmatprep.subr.mxu0 0.0
  %1455 = vmatpush1.msra.mxu0 0.0
  %1456 = vmatprep.subr.mxu0 0.0
  %1457 = vmatpush1.msra.mxu0 0.0
  %1458 = vmatprep.subr.mxu0 0.0
  %1459 = vmatpush1.msra.mxu0 0.0
  %1460 = vmatprep.subr.mxu0 0.0
  %1461 = vmatpush1.msra.mxu0 0.0
  %1462 = vmatprep.subr.mxu0 0.0
  %1463 = vmatpush1.msra.mxu0 0.0
  %1464 = vmatprep.subr.mxu0 0.0
  %1465 = vmatpush1.msra.mxu0 0.0
  %1466 = vmatprep.subr.mxu0 0.0
  %1467 = vmatpush1.msra.mxu0 0.0
  %1468 = vmatprep.mubr.f32.mxu0 0.0
  %1469 = vmatmul.mubr.f32.gmra.mrb[0].mxu0 %v1323
  %v1470 = vpop.f32.mrb[0].mxu0
  %v1471 = vadd.f32 0.0, %v1470
  %v1472 = vpop.f32.mrb[0].mxu0
  %v1473 = vadd.f32 0.0, %v1472
  %1474 = vdwg.mxu0
  %v1475 = vadd.f32 %v1329, %v1400
  %v1476 = vadd.f32 %v1330, %v1402
  %v1477 = vadd.f32 %v1331, %v1471
  %v1478 = vadd.f32 %v1332, %v1473
  %v1479 = vxor.u32 %v1475, 2147483648
  %v1480 = vmul.f32 %v1479, 1.442695
  %v1481 = vpow.pop %v1480
  %v1482 = vadd.f32 %v1481, 1.0
  %v1483 = vrcp.pop %v1482
  %v1484 = vmul.f32 1.0, %v1483
  %v1485 = vxor.u32 %v1476, 2147483648
  %v1486 = vmul.f32 %v1485, 1.442695
  %v1487 = vpow.pop %v1486
  %v1488 = vadd.f32 %v1487, 1.0
  %v1489 = vrcp.pop %v1488
  %v1490 = vmul.f32 1.0, %v1489
  %v1491 = vtanh.pop %v1477
  %v1492 = vxor.u32 %v1478, 2147483648
  %v1493 = vmul.f32 %v1492, 1.442695
  %v1494 = vpow.pop %v1493
  %v1495 = vadd.f32 %v1494, 1.0
  %v1496 = vrcp.pop %v1495
  %v1497 = vmul.f32 1.0, %v1496
  %v1498 = vmul.f32 %v1490, %v1321
  %v1499 = vmul.f32 %v1484, %v1491
  %v1500 = vadd.f32 %v1498, %v1499
  %v1501 = vtanh.pop %v1500
  %v1502 = vmul.f32 %v1497, %v1501
  %s1503 = scalar_lea.vmem [#allocation3], 40
  %1504 = vst [vmem:[%s1503] sm:$0xff] %v1502
  %s1505 = smul.u32 6, 4
  %s1506 = smul.addr %s1505, 8
  %s1507 = scalar_lea.vmem [#allocation2], %s1506
  %v1508 = vld [vmem:[%s1507] sm:$0xff]
  %v1509 = vld [vmem:[%s1507 + $0x8] sm:$0xff]
  %v1510 = vld [vmem:[%s1507 + $0x10] sm:$0xff]
  %v1511 = vld [vmem:[%s1507 + $0x18] sm:$0xff]
  %1512 = vmatprep.subr.mxu0 %v367
  %1513 = vmatpush1.msra.mxu0 %v366
  %1514 = vmatprep.subr.mxu0 %v371
  %1515 = vmatpush1.msra.mxu0 %v370
  %1516 = vmatprep.subr.mxu0 %v375
  %1517 = vmatpush1.msra.mxu0 %v374
  %1518 = vmatprep.subr.mxu0 %v379
  %1519 = vmatpush1.msra.mxu0 %v378
  %1520 = vmatprep.subr.mxu0 %v383
  %1521 = vmatpush1.msra.mxu0 %v382
  %1522 = vmatprep.subr.mxu0 %v387
  %1523 = vmatpush1.msra.mxu0 %v386
  %1524 = vmatprep.subr.mxu0 %v391
  %1525 = vmatpush1.msra.mxu0 %v390
  %1526 = vmatprep.subr.mxu0 %v395
  %1527 = vmatpush1.msra.mxu0 %v394
  %1528 = vmatprep.subr.mxu0 %v399
  %1529 = vmatpush1.msra.mxu0 %v398
  %1530 = vmatprep.subr.mxu0 %v403
  %1531 = vmatpush1.msra.mxu0 %v402
  %1532 = vmatprep.subr.mxu0 %v407
  %1533 = vmatpush1.msra.mxu0 %v406
  %1534 = vmatprep.subr.mxu0 %v411
  %1535 = vmatpush1.msra.mxu0 %v410
  %1536 = vmatprep.subr.mxu0 %v415
  %1537 = vmatpush1.msra.mxu0 %v414
  %1538 = vmatprep.subr.mxu0 %v419
  %1539 = vmatpush1.msra.mxu0 %v418
  %1540 = vmatprep.subr.mxu0 %v423
  %1541 = vmatpush1.msra.mxu0 %v422
  %1542 = vmatprep.subr.mxu0 %v427
  %1543 = vmatpush1.msra.mxu0 %v426
  %1544 = vmatprep.subr.mxu0 0.0
  %1545 = vmatpush1.msra.mxu0 0.0
  %1546 = vmatprep.subr.mxu0 0.0
  %1547 = vmatpush1.msra.mxu0 0.0
  %1548 = vmatprep.subr.mxu0 0.0
  %1549 = vmatpush1.msra.mxu0 0.0
  %1550 = vmatprep.subr.mxu0 0.0
  %1551 = vmatpush1.msra.mxu0 0.0
  %1552 = vmatprep.subr.mxu0 0.0
  %1553 = vmatpush1.msra.mxu0 0.0
  %1554 = vmatprep.subr.mxu0 0.0
  %1555 = vmatpush1.msra.mxu0 0.0
  %1556 = vmatprep.subr.mxu0 0.0
  %1557 = vmatpush1.msra.mxu0 0.0
  %1558 = vmatprep.subr.mxu0 0.0
  %1559 = vmatpush1.msra.mxu0 0.0
  %1560 = vmatprep.subr.mxu0 0.0
  %1561 = vmatpush1.msra.mxu0 0.0
  %1562 = vmatprep.subr.mxu0 0.0
  %1563 = vmatpush1.msra.mxu0 0.0
  %1564 = vmatprep.subr.mxu0 0.0
  %1565 = vmatpush1.msra.mxu0 0.0
  %1566 = vmatprep.subr.mxu0 0.0
  %1567 = vmatpush1.msra.mxu0 0.0
  %1568 = vmatprep.subr.mxu0 0.0
  %1569 = vmatpush1.msra.mxu0 0.0
  %1570 = vmatprep.subr.mxu0 0.0
  %1571 = vmatpush1.msra.mxu0 0.0
  %1572 = vmatprep.subr.mxu0 0.0
  %1573 = vmatpush1.msra.mxu0 0.0
  %1574 = vmatprep.subr.mxu0 0.0
  %1575 = vmatpush1.msra.mxu0 0.0
  %1576 = vmatprep.mubr.f32.mxu0 0.0
  %1577 = vmatmul.mubr.f32.gmra.mrb[0].mxu0 %v1502
  %v1578 = vpop.f32.mrb[0].mxu0
  %v1579 = vadd.f32 0.0, %v1578
  %v1580 = vpop.f32.mrb[0].mxu0
  %v1581 = vadd.f32 0.0, %v1580
  %1582 = vdwg.mxu0
  %1583 = vmatprep.subr.mxu0 %v369
  %1584 = vmatpush1.msra.mxu0 %v368
  %1585 = vmatprep.subr.mxu0 %v373
  %1586 = vmatpush1.msra.mxu0 %v372
  %1587 = vmatprep.subr.mxu0 %v377
  %1588 = vmatpush1.msra.mxu0 %v376
  %1589 = vmatprep.subr.mxu0 %v381
  %1590 = vmatpush1.msra.mxu0 %v380
  %1591 = vmatprep.subr.mxu0 %v385
  %1592 = vmatpush1.msra.mxu0 %v384
  %1593 = vmatprep.subr.mxu0 %v389
  %1594 = vmatpush1.msra.mxu0 %v388
  %1595 = vmatprep.subr.mxu0 %v393
  %1596 = vmatpush1.msra.mxu0 %v392
  %1597 = vmatprep.subr.mxu0 %v397
  %1598 = vmatpush1.msra.mxu0 %v396
  %1599 = vmatprep.subr.mxu0 %v401
  %1600 = vmatpush1.msra.mxu0 %v400
  %1601 = vmatprep.subr.mxu0 %v405
  %1602 = vmatpush1.msra.mxu0 %v404
  %1603 = vmatprep.subr.mxu0 %v409
  %1604 = vmatpush1.msra.mxu0 %v408
  %1605 = vmatprep.subr.mxu0 %v413
  %1606 = vmatpush1.msra.mxu0 %v412
  %1607 = vmatprep.subr.mxu0 %v417
  %1608 = vmatpush1.msra.mxu0 %v416
  %1609 = vmatprep.subr.mxu0 %v421
  %1610 = vmatpush1.msra.mxu0 %v420
  %1611 = vmatprep.subr.mxu0 %v425
  %1612 = vmatpush1.msra.mxu0 %v424
  %1613 = vmatprep.subr.mxu0 %v429
  %1614 = vmatpush1.msra.mxu0 %v428
  %1615 = vmatprep.subr.mxu0 0.0
  %1616 = vmatpush1.msra.mxu0 0.0
  %1617 = vmatprep.subr.mxu0 0.0
  %1618 = vmatpush1.msra.mxu0 0.0
  %1619 = vmatprep.subr.mxu0 0.0
  %1620 = vmatpush1.msra.mxu0 0.0
  %1621 = vmatprep.subr.mxu0 0.0
  %1622 = vmatpush1.msra.mxu0 0.0
  %1623 = vmatprep.subr.mxu0 0.0
  %1624 = vmatpush1.msra.mxu0 0.0
  %1625 = vmatprep.subr.mxu0 0.0
  %1626 = vmatpush1.msra.mxu0 0.0
  %1627 = vmatprep.subr.mxu0 0.0
  %1628 = vmatpush1.msra.mxu0 0.0
  %1629 = vmatprep.subr.mxu0 0.0
  %1630 = vmatpush1.msra.mxu0 0.0
  %1631 = vmatprep.subr.mxu0 0.0
  %1632 = vmatpush1.msra.mxu0 0.0
  %1633 = vmatprep.subr.mxu0 0.0
  %1634 = vmatpush1.msra.mxu0 0.0
  %1635 = vmatprep.subr.mxu0 0.0
  %1636 = vmatpush1.msra.mxu0 0.0
  %1637 = vmatprep.subr.mxu0 0.0
  %1638 = vmatpush1.msra.mxu0 0.0
  %1639 = vmatprep.subr.mxu0 0.0
  %1640 = vmatpush1.msra.mxu0 0.0
  %1641 = vmatprep.subr.mxu0 0.0
  %1642 = vmatpush1.msra.mxu0 0.0
  %1643 = vmatprep.subr.mxu0 0.0
  %1644 = vmatpush1.msra.mxu0 0.0
  %1645 = vmatprep.subr.mxu0 0.0
  %1646 = vmatpush1.msra.mxu0 0.0
  %1647 = vmatprep.mubr.f32.mxu0 0.0
  %1648 = vmatmul.mubr.f32.gmra.mrb[0].mxu0 %v1502
  %v1649 = vpop.f32.mrb[0].mxu0
  %v1650 = vadd.f32 0.0, %v1649
  %v1651 = vpop.f32.mrb[0].mxu0
  %v1652 = vadd.f32 0.0, %v1651
  %1653 = vdwg.mxu0
  %v1654 = vadd.f32 %v1508, %v1579
  %v1655 = vadd.f32 %v1509, %v1581
  %v1656 = vadd.f32 %v1510, %v1650
  %v1657 = vadd.f32 %v1511, %v1652
  %v1658 = vxor.u32 %v1654, 2147483648
  %v1659 = vmul.f32 %v1658, 1.442695
  %v1660 = vpow.pop %v1659
  %v1661 = vadd.f32 %v1660, 1.0
  %v1662 = vrcp.pop %v1661
  %v1663 = vmul.f32 1.0, %v1662
  %v1664 = vxor.u32 %v1655, 2147483648
  %v1665 = vmul.f32 %v1664, 1.442695
  %v1666 = vpow.pop %v1665
  %v1667 = vadd.f32 %v1666, 1.0
  %v1668 = vrcp.pop %v1667
  %v1669 = vmul.f32 1.0, %v1668
  %v1670 = vtanh.pop %v1656
  %v1671 = vxor.u32 %v1657, 2147483648
  %v1672 = vmul.f32 %v1671, 1.442695
  %v1673 = vpow.pop %v1672
  %v1674 = vadd.f32 %v1673, 1.0
  %v1675 = vrcp.pop %v1674
  %v1676 = vmul.f32 1.0, %v1675
  %v1677 = vmul.f32 %v1669, %v1500
  %v1678 = vmul.f32 %v1663, %v1670
  %v1679 = vadd.f32 %v1677, %v1678
  %v1680 = vtanh.pop %v1679
  %v1681 = vmul.f32 %v1676, %v1680
  %s1682 = scalar_lea.vmem [#allocation3], 48
  %1683 = vst [vmem:[%s1682] sm:$0xff] %v1681
  %s1684 = smul.u32 7, 4
  %s1685 = smul.addr %s1684, 8
  %s1686 = scalar_lea.vmem [#allocation2], %s1685
  %v1687 = vld [vmem:[%s1686] sm:$0xff]
  %v1688 = vld [vmem:[%s1686 + $0x8] sm:$0xff]
  %v1689 = vld [vmem:[%s1686 + $0x10] sm:$0xff]
  %v1690 = vld [vmem:[%s1686 + $0x18] sm:$0xff]
  %1691 = vmatprep.subr.mxu0 %v367
  %1692 = vmatpush1.msra.mxu0 %v366
  %1693 = vmatprep.subr.mxu0 %v371
  %1694 = vmatpush1.msra.mxu0 %v370
  %1695 = vmatprep.subr.mxu0 %v375
  %1696 = vmatpush1.msra.mxu0 %v374
  %1697 = vmatprep.subr.mxu0 %v379
  %1698 = vmatpush1.msra.mxu0 %v378
  %1699 = vmatprep.subr.mxu0 %v383
  %1700 = vmatpush1.msra.mxu0 %v382
  %1701 = vmatprep.subr.mxu0 %v387
  %1702 = vmatpush1.msra.mxu0 %v386
  %1703 = vmatprep.subr.mxu0 %v391
  %1704 = vmatpush1.msra.mxu0 %v390
  %1705 = vmatprep.subr.mxu0 %v395
  %1706 = vmatpush1.msra.mxu0 %v394
  %1707 = vmatprep.subr.mxu0 %v399
  %1708 = vmatpush1.msra.mxu0 %v398
  %1709 = vmatprep.subr.mxu0 %v403
  %1710 = vmatpush1.msra.mxu0 %v402
  %1711 = vmatprep.subr.mxu0 %v407
  %1712 = vmatpush1.msra.mxu0 %v406
  %1713 = vmatprep.subr.mxu0 %v411
  %1714 = vmatpush1.msra.mxu0 %v410
  %1715 = vmatprep.subr.mxu0 %v415
  %1716 = vmatpush1.msra.mxu0 %v414
  %1717 = vmatprep.subr.mxu0 %v419
  %1718 = vmatpush1.msra.mxu0 %v418
  %1719 = vmatprep.subr.mxu0 %v423
  %1720 = vmatpush1.msra.mxu0 %v422
  %1721 = vmatprep.subr.mxu0 %v427
  %1722 = vmatpush1.msra.mxu0 %v426
  %1723 = vmatprep.subr.mxu0 0.0
  %1724 = vmatpush1.msra.mxu0 0.0
  %1725 = vmatprep.subr.mxu0 0.0
  %1726 = vmatpush1.msra.mxu0 0.0
  %1727 = vmatprep.subr.mxu0 0.0
  %1728 = vmatpush1.msra.mxu0 0.0
  %1729 = vmatprep.subr.mxu0 0.0
  %1730 = vmatpush1.msra.mxu0 0.0
  %1731 = vmatprep.subr.mxu0 0.0
  %1732 = vmatpush1.msra.mxu0 0.0
  %1733 = vmatprep.subr.mxu0 0.0
  %1734 = vmatpush1.msra.mxu0 0.0
  %1735 = vmatprep.subr.mxu0 0.0
  %1736 = vmatpush1.msra.mxu0 0.0
  %1737 = vmatprep.subr.mxu0 0.0
  %1738 = vmatpush1.msra.mxu0 0.0
  %1739 = vmatprep.subr.mxu0 0.0
  %1740 = vmatpush1.msra.mxu0 0.0
  %1741 = vmatprep.subr.mxu0 0.0
  %1742 = vmatpush1.msra.mxu0 0.0
  %1743 = vmatprep.subr.mxu0 0.0
  %1744 = vmatpush1.msra.mxu0 0.0
  %1745 = vmatprep.subr.mxu0 0.0
  %1746 = vmatpush1.msra.mxu0 0.0
  %1747 = vmatprep.subr.mxu0 0.0
  %1748 = vmatpush1.msra.mxu0 0.0
  %1749 = vmatprep.subr.mxu0 0.0
  %1750 = vmatpush1.msra.mxu0 0.0
  %1751 = vmatprep.subr.mxu0 0.0
  %1752 = vmatpush1.msra.mxu0 0.0
  %1753 = vmatprep.subr.mxu0 0.0
  %1754 = vmatpush1.msra.mxu0 0.0
  %1755 = vmatprep.mubr.f32.mxu0 0.0
  %1756 = vmatmul.mubr.f32.gmra.mrb[0].mxu0 %v1681
  %v1757 = vpop.f32.mrb[0].mxu0
  %v1758 = vadd.f32 0.0, %v1757
  %v1759 = vpop.f32.mrb[0].mxu0
  %v1760 = vadd.f32 0.0, %v1759
  %1761 = vdwg.mxu0
  %1762 = vmatprep.subr.mxu0 %v369
  %1763 = vmatpush1.msra.mxu0 %v368
  %1764 = vmatprep.subr.mxu0 %v373
  %1765 = vmatpush1.msra.mxu0 %v372
  %1766 = vmatprep.subr.mxu0 %v377
  %1767 = vmatpush1.msra.mxu0 %v376
  %1768 = vmatprep.subr.mxu0 %v381
  %1769 = vmatpush1.msra.mxu0 %v380
  %1770 = vmatprep.subr.mxu0 %v385
  %1771 = vmatpush1.msra.mxu0 %v384
  %1772 = vmatprep.subr.mxu0 %v389
  %1773 = vmatpush1.msra.mxu0 %v388
  %1774 = vmatprep.subr.mxu0 %v393
  %1775 = vmatpush1.msra.mxu0 %v392
  %1776 = vmatprep.subr.mxu0 %v397
  %1777 = vmatpush1.msra.mxu0 %v396
  %1778 = vmatprep.subr.mxu0 %v401
  %1779 = vmatpush1.msra.mxu0 %v400
  %1780 = vmatprep.subr.mxu0 %v405
  %1781 = vmatpush1.msra.mxu0 %v404
  %1782 = vmatprep.subr.mxu0 %v409
  %1783 = vmatpush1.msra.mxu0 %v408
  %1784 = vmatprep.subr.mxu0 %v413
  %1785 = vmatpush1.msra.mxu0 %v412
  %1786 = vmatprep.subr.mxu0 %v417
  %1787 = vmatpush1.msra.mxu0 %v416
  %1788 = vmatprep.subr.mxu0 %v421
  %1789 = vmatpush1.msra.mxu0 %v420
  %1790 = vmatprep.subr.mxu0 %v425
  %1791 = vmatpush1.msra.mxu0 %v424
  %1792 = vmatprep.subr.mxu0 %v429
  %1793 = vmatpush1.msra.mxu0 %v428
  %1794 = vmatprep.subr.mxu0 0.0
  %1795 = vmatpush1.msra.mxu0 0.0
  %1796 = vmatprep.subr.mxu0 0.0
  %1797 = vmatpush1.msra.mxu0 0.0
  %1798 = vmatprep.subr.mxu0 0.0
  %1799 = vmatpush1.msra.mxu0 0.0
  %1800 = vmatprep.subr.mxu0 0.0
  %1801 = vmatpush1.msra.mxu0 0.0
  %1802 = vmatprep.subr.mxu0 0.0
  %1803 = vmatpush1.msra.mxu0 0.0
  %1804 = vmatprep.subr.mxu0 0.0
  %1805 = vmatpush1.msra.mxu0 0.0
  %1806 = vmatprep.subr.mxu0 0.0
  %1807 = vmatpush1.msra.mxu0 0.0
  %1808 = vmatprep.subr.mxu0 0.0
  %1809 = vmatpush1.msra.mxu0 0.0
  %1810 = vmatprep.subr.mxu0 0.0
  %1811 = vmatpush1.msra.mxu0 0.0
  %1812 = vmatprep.subr.mxu0 0.0
  %1813 = vmatpush1.msra.mxu0 0.0
  %1814 = vmatprep.subr.mxu0 0.0
  %1815 = vmatpush1.msra.mxu0 0.0
  %1816 = vmatprep.subr.mxu0 0.0
  %1817 = vmatpush1.msra.mxu0 0.0
  %1818 = vmatprep.subr.mxu0 0.0
  %1819 = vmatpush1.msra.mxu0 0.0
  %1820 = vmatprep.subr.mxu0 0.0
  %1821 = vmatpush1.msra.mxu0 0.0
  %1822 = vmatprep.subr.mxu0 0.0
  %1823 = vmatpush1.msra.mxu0 0.0
  %1824 = vmatprep.subr.mxu0 0.0
  %1825 = vmatpush1.msra.mxu0 0.0
  %1826 = vmatprep.mubr.f32.mxu0 0.0
  %1827 = vmatmul.mubr.f32.gmra.mrb[0].mxu0 %v1681
  %v1828 = vpop.f32.mrb[0].mxu0
  %v1829 = vadd.f32 0.0, %v1828
  %v1830 = vpop.f32.mrb[0].mxu0
  %v1831 = vadd.f32 0.0, %v1830
  %1832 = vdwg.mxu0
  %v1833 = vadd.f32 %v1687, %v1758
  %v1834 = vadd.f32 %v1688, %v1760
  %v1835 = vadd.f32 %v1689, %v1829
  %v1836 = vadd.f32 %v1690, %v1831
  %v1837 = vxor.u32 %v1833, 2147483648
  %v1838 = vmul.f32 %v1837, 1.442695
  %v1839 = vpow.pop %v1838
  %v1840 = vadd.f32 %v1839, 1.0
  %v1841 = vrcp.pop %v1840
  %v1842 = vmul.f32 1.0, %v1841
  %v1843 = vxor.u32 %v1834, 2147483648
  %v1844 = vmul.f32 %v1843, 1.442695
  %v1845 = vpow.pop %v1844
  %v1846 = vadd.f32 %v1845, 1.0
  %v1847 = vrcp.pop %v1846
  %v1848 = vmul.f32 1.0, %v1847
  %v1849 = vtanh.pop %v1835
  %v1850 = vxor.u32 %v1836, 2147483648
  %v1851 = vmul.f32 %v1850, 1.442695
  %v1852 = vpow.pop %v1851
  %v1853 = vadd.f32 %v1852, 1.0
  %v1854 = vrcp.pop %v1853
  %v1855 = vmul.f32 1.0, %v1854
  %v1856 = vmul.f32 %v1848, %v1679
  %v1857 = vmul.f32 %v1842, %v1849
  %v1858 = vadd.f32 %v1856, %v1857
  %v1859 = vtanh.pop %v1858
  %v1860 = vmul.f32 %v1855, %v1859
  %s1861 = scalar_lea.vmem [#allocation3], 56
  %1862 = vst [vmem:[%s1861] sm:$0xff] %v1860
  %1863 = vst [vmem:[%s11] sm:$0xff] %v1860
  %1864 = vst [vmem:[%s12] sm:$0xff] %v1858
  %v1865 = vld [vmem:[%s4] sm:$0xff]
  %v1866 = vld [vmem:[%s4 + $0x8] sm:$0xff]
  %v1867 = vld [vmem:[%s4 + $0x10] sm:$0xff]
  %v1868 = vld [vmem:[%s4 + $0x18] sm:$0xff]
  %v1869 = vld [vmem:[%s4 + $0x20] sm:$0xff]
  %v1870 = vld [vmem:[%s4 + $0x28] sm:$0xff]
  %v1871 = vld [vmem:[%s4 + $0x30] sm:$0xff]
  %v1872 = vld [vmem:[%s4 + $0x38] sm:$0xff]
  %v1873 = vld [vmem:[%s4 + $0x40] sm:$0xff]
  %v1874 = vld [vmem:[%s4 + $0x48] sm:$0xff]
  %v1875 = vld [vmem:[%s4 + $0x50] sm:$0xff]
  %v1876 = vld [vmem:[%s4 + $0x58] sm:$0xff]
  %v1877 = vld [vmem:[%s4 + $0x60] sm:$0xff]
  %v1878 = vld [vmem:[%s4 + $0x68] sm:$0xff]
  %v1879 = vld [vmem:[%s4 + $0x70] sm:$0xff]
  %v1880 = vld [vmem:[%s4 + $0x78] sm:$0xff]
  %v1881 = vld [vmem:[%s5] sm:$0x1]
  %v1882 = vld [vmem:[%s6] sm:$0xff]
  %v1883 = vld [vmem:[%s6 + $0x8] sm:$0xff]
  %v1884 = vld [vmem:[%s6 + $0x10] sm:$0xff]
  %v1885 = vld [vmem:[%s6 + $0x18] sm:$0xff]
  %v1886 = vld [vmem:[%s6 + $0x20] sm:$0xff]
  %v1887 = vld [vmem:[%s6 + $0x28] sm:$0xff]
  %v1888 = vld [vmem:[%s6 + $0x30] sm:$0xff]
  %v1889 = vld [vmem:[%s6 + $0x38] sm:$0xff]
  %v1890 = vld [vmem:[%s6 + $0x40] sm:$0xff]
  %v1891 = vld [vmem:[%s6 + $0x48] sm:$0xff]
  %v1892 = vld [vmem:[%s6 + $0x50] sm:$0xff]
  %v1893 = vld [vmem:[%s6 + $0x58] sm:$0xff]
  %v1894 = vld [vmem:[%s6 + $0x60] sm:$0xff]
  %v1895 = vld [vmem:[%s6 + $0x68] sm:$0xff]
  %v1896 = vld [vmem:[%s6 + $0x70] sm:$0xff]
  %v1897 = vld [vmem:[%s6 + $0x78] sm:$0xff]
  %v1898 = vld [vmem:[%s7] sm:$0x1]
  %v1899 = vld [vmem:[#allocation3] sm:$0xff]
  %v1900 = vld [vmem:[#allocation3 + $0x8] sm:$0xff]
  %v1901 = vld [vmem:[#allocation3 + $0x10] sm:$0xff]
  %v1902 = vld [vmem:[#allocation3 + $0x18] sm:$0xff]
  %v1903 = vld [vmem:[#allocation3 + $0x20] sm:$0xff]
  %v1904 = vld [vmem:[#allocation3 + $0x28] sm:$0xff]
  %v1905 = vld [vmem:[#allocation3 + $0x30] sm:$0xff]
  %v1906 = vld [vmem:[#allocation3 + $0x38] sm:$0xff]
  %v1908 = vlaneseq
  %v1909 = vshrl.u32 %v1908, 7
  %v1910 = vsub.s32 0, %v1909
  %v1911 = vrot.slane %v1881, %v1910
  %1913 = vmatprep.subr.mxu0 0.0
  %1914 = vmatpush1.msra.mxu0 %v1865
  %1915 = vmatprep.subr.mxu0 0.0
  %1916 = vmatpush1.msra.mxu0 %v1866
  %1917 = vmatprep.subr.mxu0 0.0
  %1918 = vmatpush1.msra.mxu0 %v1867
  %1919 = vmatprep.subr.mxu0 0.0
  %1920 = vmatpush1.msra.mxu0 %v1868
  %1921 = vmatprep.subr.mxu0 0.0
  %1922 = vmatpush1.msra.mxu0 %v1869
  %1923 = vmatprep.subr.mxu0 0.0
  %1924 = vmatpush1.msra.mxu0 %v1870
  %1925 = vmatprep.subr.mxu0 0.0
  %1926 = vmatpush1.msra.mxu0 %v1871
  %1927 = vmatprep.subr.mxu0 0.0
  %1928 = vmatpush1.msra.mxu0 %v1872
  %1929 = vmatprep.subr.mxu0 0.0
  %1930 = vmatpush1.msra.mxu0 %v1873
  %1931 = vmatprep.subr.mxu0 0.0
  %1932 = vmatpush1.msra.mxu0 %v1874
  %1933 = vmatprep.subr.mxu0 0.0
  %1934 = vmatpush1.msra.mxu0 %v1875
  %1935 = vmatprep.subr.mxu0 0.0
  %1936 = vmatpush1.msra.mxu0 %v1876
  %1937 = vmatprep.subr.mxu0 0.0
  %1938 = vmatpush1.msra.mxu0 %v1877
  %1939 = vmatprep.subr.mxu0 0.0
  %1940 = vmatpush1.msra.mxu0 %v1878
  %1941 = vmatprep.subr.mxu0 0.0
  %1942 = vmatpush1.msra.mxu0 %v1879
  %1943 = vmatprep.subr.mxu0 0.0
  %1944 = vmatpush1.msra.mxu0 %v1880
  %1945 = vmatprep.subr.mxu0 0.0
  %1946 = vmatpush1.msra.mxu0 0.0
  %1947 = vmatprep.subr.mxu0 0.0
  %1948 = vmatpush1.msra.mxu0 0.0
  %1949 = vmatprep.subr.mxu0 0.0
  %1950 = vmatpush1.msra.mxu0 0.0
  %1951 = vmatprep.subr.mxu0 0.0
  %1952 = vmatpush1.msra.mxu0 0.0
  %1953 = vmatprep.subr.mxu0 0.0
  %1954 = vmatpush1.msra.mxu0 0.0
  %1955 = vmatprep.subr.mxu0 0.0
  %1956 = vmatpush1.msra.mxu0 0.0
  %1957 = vmatprep.subr.mxu0 0.0
  %1958 = vmatpush1.msra.mxu0 0.0
  %1959 = vmatprep.subr.mxu0 0.0
  %1960 = vmatpush1.msra.mxu0 0.0
  %1961 = vmatprep.subr.mxu0 0.0
  %1962 = vmatpush1.msra.mxu0 0.0
  %1963 = vmatprep.subr.mxu0 0.0
  %1964 = vmatpush1.msra.mxu0 0.0
  %1965 = vmatprep.subr.mxu0 0.0
  %1966 = vmatpush1.msra.mxu0 0.0
  %1967 = vmatprep.subr.mxu0 0.0
  %1968 = vmatpush1.msra.mxu0 0.0
  %1969 = vmatprep.subr.mxu0 0.0
  %1970 = vmatpush1.msra.mxu0 0.0
  %1971 = vmatprep.subr.mxu0 0.0
  %1972 = vmatpush1.msra.mxu0 0.0
  %1973 = vmatprep.subr.mxu0 0.0
  %1974 = vmatpush1.msra.mxu0 0.0
  %1975 = vmatprep.subr.mxu0 0.0
  %1976 = vmatpush1.msra.mxu0 0.0
  %1977 = vmatprep.mubr.f32.mxu0 0.0
  %1978 = vmatmul.mubr.f32.gmra.mrb[0].mxu0 %v1899
  %v1979 = vpop.f32.mrb[0].mxu0
  %v1980 = vadd.f32 %v1911, %v1979
  %v1981 = vpop.f32.mrb[0].mxu0
  %1982 = vmatprep.mubr.f32.mxu0 0.0
  %1983 = vmatmul.mubr.f32.gmra.mrb[0].mxu0 %v1900
  %v1984 = vpop.f32.mrb[0].mxu0
  %v1985 = vadd.f32 %v1911, %v1984
  %v1986 = vpop.f32.mrb[0].mxu0
  %1987 = vmatprep.mubr.f32.mxu0 0.0
  %1988 = vmatmul.mubr.f32.gmra.mrb[0].mxu0 %v1901
  %v1989 = vpop.f32.mrb[0].mxu0
  %v1990 = vadd.f32 %v1911, %v1989
  %v1991 = vpop.f32.mrb[0].mxu0
  %1992 = vmatprep.mubr.f32.mxu0 0.0
  %1993 = vmatmul.mubr.f32.gmra.mrb[0].mxu0 %v1902
  %v1994 = vpop.f32.mrb[0].mxu0
  %v1995 = vadd.f32 %v1911, %v1994
  %v1996 = vpop.f32.mrb[0].mxu0
  %1997 = vmatprep.mubr.f32.mxu0 0.0
  %1998 = vmatmul.mubr.f32.gmra.mrb[0].mxu0 %v1903
  %v1999 = vpop.f32.mrb[0].mxu0
  %v2000 = vadd.f32 %v1911, %v1999
  %v2001 = vpop.f32.mrb[0].mxu0
  %2002 = vmatprep.mubr.f32.mxu0 0.0
  %2003 = vmatmul.mubr.f32.gmra.mrb[0].mxu0 %v1904
  %v2004 = vpop.f32.mrb[0].mxu0
  %v2005 = vadd.f32 %v1911, %v2004
  %v2006 = vpop.f32.mrb[0].mxu0
  %2007 = vmatprep.mubr.f32.mxu0 0.0
  %2008 = vmatmul.mubr.f32.gmra.mrb[0].mxu0 %v1905
  %v2009 = vpop.f32.mrb[0].mxu0
  %v2010 = vadd.f32 %v1911, %v2009
  %v2011 = vpop.f32.mrb[0].mxu0
  %2012 = vmatprep.mubr.f32.mxu0 0.0
  %2013 = vmatmul.mubr.f32.gmra.mrb[0].mxu0 %v1906
  %v2014 = vpop.f32.mrb[0].mxu0
  %v2015 = vadd.f32 %v1911, %v2014
  %v2016 = vpop.f32.mrb[0].mxu0
  %2017 = vdwg.mxu0
  %v2018 = vmax.f32 %v1980, 0.0
  %v2019 = vmax.f32 %v1985, 0.0
  %v2020 = vmax.f32 %v1990, 0.0
  %v2021 = vmax.f32 %v1995, 0.0
  %v2022 = vmax.f32 %v2000, 0.0
  %v2023 = vmax.f32 %v2005, 0.0
  %v2024 = vmax.f32 %v2010, 0.0
  %v2025 = vmax.f32 %v2015, 0.0
  %v2027 = vlaneseq
  %v2028 = vshrl.u32 %v2027, 7
  %v2029 = vsub.s32 0, %v2028
  %v2030 = vrot.slane %v1898, %v2029
  %2032 = vmatprep.subr.mxu0 0.0
  %2033 = vmatpush1.msra.mxu0 %v1882
  %2034 = vmatprep.subr.mxu0 0.0
  %2035 = vmatpush1.msra.mxu0 %v1883
  %2036 = vmatprep.subr.mxu0 0.0
  %2037 = vmatpush1.msra.mxu0 %v1884
  %2038 = vmatprep.subr.mxu0 0.0
  %2039 = vmatpush1.msra.mxu0 %v1885
  %2040 = vmatprep.subr.mxu0 0.0
  %2041 = vmatpush1.msra.mxu0 %v1886
  %2042 = vmatprep.subr.mxu0 0.0
  %2043 = vmatpush1.msra.mxu0 %v1887
  %2044 = vmatprep.subr.mxu0 0.0
  %2045 = vmatpush1.msra.mxu0 %v1888
  %2046 = vmatprep.subr.mxu0 0.0
  %2047 = vmatpush1.msra.mxu0 %v1889
  %2048 = vmatprep.subr.mxu0 0.0
  %2049 = vmatpush1.msra.mxu0 %v1890
  %2050 = vmatprep.subr.mxu0 0.0
  %2051 = vmatpush1.msra.mxu0 %v1891
  %2052 = vmatprep.subr.mxu0 0.0
  %2053 = vmatpush1.msra.mxu0 %v1892
  %2054 = vmatprep.subr.mxu0 0.0
  %2055 = vmatpush1.msra.mxu0 %v1893
  %2056 = vmatprep.subr.mxu0 0.0
  %2057 = vmatpush1.msra.mxu0 %v1894
  %2058 = vmatprep.subr.mxu0 0.0
  %2059 = vmatpush1.msra.mxu0 %v1895
  %2060 = vmatprep.subr.mxu0 0.0
  %2061 = vmatpush1.msra.mxu0 %v1896
  %2062 = vmatprep.subr.mxu0 0.0
  %2063 = vmatpush1.msra.mxu0 %v1897
  %2064 = vmatprep.subr.mxu0 0.0
  %2065 = vmatpush1.msra.mxu0 0.0
  %2066 = vmatprep.subr.mxu0 0.0
  %2067 = vmatpush1.msra.mxu0 0.0
  %2068 = vmatprep.subr.mxu0 0.0
  %2069 = vmatpush1.msra.mxu0 0.0
  %2070 = vmatprep.subr.mxu0 0.0
  %2071 = vmatpush1.msra.mxu0 0.0
  %2072 = vmatprep.subr.mxu0 0.0
  %2073 = vmatpush1.msra.mxu0 0.0
  %2074 = vmatprep.subr.mxu0 0.0
  %2075 = vmatpush1.msra.mxu0 0.0
  %2076 = vmatprep.subr.mxu0 0.0
  %2077 = vmatpush1.msra.mxu0 0.0
  %2078 = vmatprep.subr.mxu0 0.0
  %2079 = vmatpush1.msra.mxu0 0.0
  %2080 = vmatprep.subr.mxu0 0.0
  %2081 = vmatpush1.msra.mxu0 0.0
  %2082 = vmatprep.subr.mxu0 0.0
  %2083 = vmatpush1.msra.mxu0 0.0
  %2084 = vmatprep.subr.mxu0 0.0
  %2085 = vmatpush1.msra.mxu0 0.0
  %2086 = vmatprep.subr.mxu0 0.0
  %2087 = vmatpush1.msra.mxu0 0.0
  %2088 = vmatprep.subr.mxu0 0.0
  %2089 = vmatpush1.msra.mxu0 0.0
  %2090 = vmatprep.subr.mxu0 0.0
  %2091 = vmatpush1.msra.mxu0 0.0
  %2092 = vmatprep.subr.mxu0 0.0
  %2093 = vmatpush1.msra.mxu0 0.0
  %2094 = vmatprep.subr.mxu0 0.0
  %2095 = vmatpush1.msra.mxu0 0.0
  %2096 = vmatprep.mubr.f32.mxu0 0.0
  %2097 = vmatmul.mubr.f32.gmra.mrb[0].mxu0 %v2018
  %v2098 = vpop.f32.mrb[0].mxu0
  %v2099 = vadd.f32 %v2030, %v2098
  %v2100 = vpop.f32.mrb[0].mxu0
  %2101 = vmatprep.mubr.f32.mxu0 0.0
  %2102 = vmatmul.mubr.f32.gmra.mrb[0].mxu0 %v2019
  %v2103 = vpop.f32.mrb[0].mxu0
  %v2104 = vadd.f32 %v2030, %v2103
  %v2105 = vpop.f32.mrb[0].mxu0
  %2106 = vmatprep.mubr.f32.mxu0 0.0
  %2107 = vmatmul.mubr.f32.gmra.mrb[0].mxu0 %v2020
  %v2108 = vpop.f32.mrb[0].mxu0
  %v2109 = vadd.f32 %v2030, %v2108
  %v2110 = vpop.f32.mrb[0].mxu0
  %2111 = vmatprep.mubr.f32.mxu0 0.0
  %2112 = vmatmul.mubr.f32.gmra.mrb[0].mxu0 %v2021
  %v2113 = vpop.f32.mrb[0].mxu0
  %v2114 = vadd.f32 %v2030, %v2113
  %v2115 = vpop.f32.mrb[0].mxu0
  %2116 = vmatprep.mubr.f32.mxu0 0.0
  %2117 = vmatmul.mubr.f32.gmra.mrb[0].mxu0 %v2022
  %v2118 = vpop.f32.mrb[0].mxu0
  %v2119 = vadd.f32 %v2030, %v2118
  %v2120 = vpop.f32.mrb[0].mxu0
  %2121 = vmatprep.mubr.f32.mxu0 0.0
  %2122 = vmatmul.mubr.f32.gmra.mrb[0].mxu0 %v2023
  %v2123 = vpop.f32.mrb[0].mxu0
  %v2124 = vadd.f32 %v2030, %v2123
  %v2125 = vpop.f32.mrb[0].mxu0
  %2126 = vmatprep.mubr.f32.mxu0 0.0
  %2127 = vmatmul.mubr.f32.gmra.mrb[0].mxu0 %v2024
  %v2128 = vpop.f32.mrb[0].mxu0
  %v2129 = vadd.f32 %v2030, %v2128
  %v2130 = vpop.f32.mrb[0].mxu0
  %2131 = vmatprep.mubr.f32.mxu0 0.0
  %2132 = vmatmul.mubr.f32.gmra.mrb[0].mxu0 %v2025
  %v2133 = vpop.f32.mrb[0].mxu0
  %v2134 = vadd.f32 %v2030, %v2133
  %v2135 = vpop.f32.mrb[0].mxu0
  %2136 = vdwg.mxu0
  %2137 = vst [vmem:[%s10] sm:$0xff] %v2099
  %2138 = vst [vmem:[%s10 + $0x8] sm:$0xff] %v2104
  %2139 = vst [vmem:[%s10 + $0x10] sm:$0xff] %v2109
  %2140 = vst [vmem:[%s10 + $0x18] sm:$0xff] %v2114
  %2141 = vst [vmem:[%s10 + $0x20] sm:$0xff] %v2119
  %2142 = vst [vmem:[%s10 + $0x28] sm:$0xff] %v2124
  %2143 = vst [vmem:[%s10 + $0x30] sm:$0xff] %v2129
  %2144 = vst [vmem:[%s10 + $0x38] sm:$0xff] %v2134
  // Predicated region
  $region42: #{_r2d2_impl.1} parent=0 // pred_check
    _
  $region43: #{_r2d2_impl.1} parent=0 // pred_check_branch
    %2146 = sbr.rel (0) target = $region45
  $region44: #{_r2d2_impl.1} parent=0 // pred_region
    _
  $region45: #{_r2d2_impl.1} parent=0 // pred_fallthru
    _
  // Predicated region
  $region46: #{_r2d2_impl.1} parent=0 // pred_check
    _
  $region47: #{_r2d2_impl.1} parent=0 // pred_check_branch
    %2148 = sbr.rel (0) target = $region49
  $region48: #{_r2d2_impl.1} parent=0 // pred_region
    _
  $region49: #{_r2d2_impl.1} parent=0 // pred_fallthru
    _
  // Predicated region
  $region50: #{_r2d2_impl.1} parent=0 // pred_check
    _
  $region51: #{_r2d2_impl.1} parent=0 // pred_check_branch
    %2150 = sbr.rel (0) target = $region53
  $region52: #{_r2d2_impl.1} parent=0 // pred_region
    _
  $region53: #{_r2d2_impl.1} parent=0 // pred_fallthru
    _
  // Predicated region
  $region54: #{_r2d2_impl.1} parent=0 // pred_check
    _
  $region55: #{_r2d2_impl.1} parent=0 // pred_check_branch
    %2152 = sbr.rel (0) target = $region57
  $region56: #{_r2d2_impl.1} parent=0 // pred_region
    _
  $region57: #{_r2d2_impl.1} parent=0 // pred_fallthru
    _
  // Predicated region
  $region58: #{_r2d2_impl.1} parent=0 // pred_check
    _
  $region59: #{_r2d2_impl.1} parent=0 // pred_check_branch
    %2154 = sbr.rel (0) target = $region61
  $region60: #{_r2d2_impl.1} parent=0 // pred_region
    _
  $region61: #{_r2d2_impl.1} parent=0 // pred_fallthru
    _
  // Predicated region
  $region62: #{_r2d2_impl.1} parent=0 // pred_check
    _
  $region63: #{_r2d2_impl.1} parent=0 // pred_check_branch
    %2156 = sbr.rel (0) target = $region65
  $region64: #{_r2d2_impl.1} parent=0 // pred_region
    _
  $region65: #{_r2d2_impl.1} parent=0 // pred_fallthru
    _

</llo_original>
